<compile_context>
chip_gen: v5e
topology: v5e:2x2
jax: 0.10.0
libtpu: 0.0.40
codegen_flags: <defaults>
</compile_context>

<pallas_src>
import jax
import jax.numpy as jnp
from jax.experimental import pallas as pl
from jax.experimental.pallas import tpu as pltpu


def _prn_kernel(x_ref, w1_ref, b1_ref, w2_ref, b2_ref, w3_ref, b3_ref, o_ref):
    res = x_ref[...]  # (TB, D) float32 — flattened input, also the residual

    # dens1 -> ReLU   (dropout == identity in eval mode)
    h = jnp.dot(res, w1_ref[...], preferred_element_type=jnp.float32) + b1_ref[...]
    h = jnp.maximum(h, 0.0)

    # bneck -> ReLU   (dropout == identity in eval mode)
    h = jnp.dot(h, w2_ref[...], preferred_element_type=jnp.float32) + b2_ref[...]
    h = jnp.maximum(h, 0.0)

    # dens2 -> ReLU
    h = jnp.dot(h, w3_ref[...], preferred_element_type=jnp.float32) + b3_ref[...]
    h = jnp.maximum(h, 0.0)

    # residual add + softmax over the feature axis (PyTorch dim=1 of (B, D)).
    out = h + res
    m = jnp.max(out, axis=-1, keepdims=True)
    e = jnp.exp(out - m)
    s = jnp.sum(e, axis=-1, keepdims=True)
    inv = pl.reciprocal(s, approx=False)  # one reciprocal per row, then a VPU multiply
    o_ref[...] = (e * inv).astype(o_ref.dtype)


def _pick_batch_tile(B: int) -> int:
    """Batch tile: always tiled (cdiv grid), >=2 grid steps when B permits,
    capped at 128 rows so stream buffers stay well inside v7x's 64 MiB VMEM."""
    if B <= 8:
        return B  # block == full dim is always legal
    tb = (B // 2) // 8 * 8        # guarantee at least 2 grid steps (megacore)
    return max(8, min(128, tb))


def prn_forward(x, w1, b1, w2, b2, w3, b3, *, height, width):
    """Pallas implementation of PRN.forward(x).

    Weights are stored (in_features, out_features), i.e. already transposed
    relative to PyTorch's nn.Linear.weight.
    """
    B = x.shape[0]
    D = height * width * 17
    N = w1.shape[1]
    assert w1.shape == (D, N) and w2.shape == (N, N) and w3.shape == (N, D)

    res = x.reshape(B, D)  # lane-dense 2D view; last dim is the big feature axis

    TB = _pick_batch_tile(B)
    grid = (pl.cdiv(B, TB),)  # always tiled; ragged last block handled by Pallas
    # (softmax is row-local, so any padded OOB rows in the last block never
    #  contaminate valid rows and their writes are masked)

    b1_2d = b1.reshape(1, N)
    b2_2d = b2.reshape(1, N)
    b3_2d = b3.reshape(1, D)

    out_flat = pl.pallas_call(
        _prn_kernel,
        out_shape=jax.ShapeDtypeStruct((B, D), x.dtype),
        grid_spec=pltpu.PrefetchScalarGridSpec(
            num_scalar_prefetch=0,
            grid=grid,
            in_specs=[
                pl.BlockSpec((TB, D), lambda i: (i, 0)),  # activations / residual
                pl.BlockSpec((D, N), lambda i: (0, 0)),   # W1  (in, out) — resident
                pl.BlockSpec((1, N), lambda i: (0, 0)),   # b1
                pl.BlockSpec((N, N), lambda i: (0, 0)),   # W2
                pl.BlockSpec((1, N), lambda i: (0, 0)),   # b2
                pl.BlockSpec((N, D), lambda i: (0, 0)),   # W3
                pl.BlockSpec((1, D), lambda i: (0, 0)),   # b3
            ],
            out_specs=pl.BlockSpec((TB, D), lambda i: (i, 0)),
        ),
        compiler_params=pltpu.CompilerParams(
            dimension_semantics=("parallel",),
            vmem_limit_bytes=64 * 1024 * 1024,
        ),
    )(res, w1, b1_2d, w2, b2_2d, w3, b3_2d)

    return out_flat.reshape(B, height, width, 17)


def _reference(x, w1, b1, w2, b2, w3, b3, *, height, width):
    B = x.shape[0]
    res = x.reshape(B, -1)
    h = jax.nn.relu(res @ w1 + b1)
    h = jax.nn.relu(h @ w2 + b2)
    h = jax.nn.relu(h @ w3 + b3)
    out = jax.nn.softmax(h + res, axis=1)
    return out.reshape(B, height, width, 17)


if __name__ == "__main__":
    key = jax.random.PRNGKey(0)
    ks = jax.random.split(key, 7)

    # PRN(node_count=32, coeff=1): height=28, width=18, D = 28*18*17 = 8568
    coeff = 1
    node_count = 32
    height, width = coeff * 28, coeff * 18
    D = height * width * 17
    B = 2

    x  = jax.random.normal(ks[0], (B, height, width, 17), dtype=jnp.float32)
    w1 = jax.random.normal(ks[1], (D, node_count), dtype=jnp.float32) * 0.02
    b1 = jax.random.normal(ks[2], (node_count,), dtype=jnp.float32) * 0.02
    w2 = jax.random.normal(ks[3], (node_count, node_count), dtype=jnp.float32) * 0.1
    b2 = jax.random.normal(ks[4], (node_count,), dtype=jnp.float32) * 0.02
    w3 = jax.random.normal(ks[5], (node_count, D), dtype=jnp.float32) * 0.02
    b3 = jax.random.normal(ks[6], (D,), dtype=jnp.float32) * 0.02

    out = prn_forward(x, w1, b1, w2, b2, w3, b3, height=height, width=width)
    out = jax.block_until_ready(out)

    ref = _reference(x, w1, b1, w2, b2, w3, b3, height=height, width=width)
    assert out.shape == (B, height, width, 17) and out.dtype == x.dtype
    assert jnp.allclose(out, ref, atol=1e-6, rtol=1e-3), \
        f"max abs diff {float(jnp.max(jnp.abs(out - ref)))}"
    # softmax rows must sum to 1
    assert jnp.allclose(out.reshape(B, -1).sum(axis=1), 1.0, atol=1e-4)

    print("KERNEL_OK")
</pallas_src>

<mosaic_0001>
module attributes {stable_mosaic.version = 11 : i64} {
  func.func @_prn_kernel(%arg0: i32, %arg1: memref<2x8568xf32, #tpu.memory_space<vmem>>, %arg2: memref<8568x32xf32, #tpu.memory_space<vmem>>, %arg3: memref<1x32xf32, #tpu.memory_space<vmem>>, %arg4: memref<32x32xf32, #tpu.memory_space<vmem>>, %arg5: memref<1x32xf32, #tpu.memory_space<vmem>>, %arg6: memref<32x8568xf32, #tpu.memory_space<vmem>>, %arg7: memref<1x8568xf32, #tpu.memory_space<vmem>>, %arg8: memref<2x8568xf32, #tpu.memory_space<vmem>>) attributes {dimension_semantics = [#tpu.dimension_semantics<parallel>], iteration_bounds = array<i64: 1>, scalar_prefetch = 0 : i64, scratch_operands = 0 : i64, tpu.core_type = #tpu.core_type<tc>, window_params = [{transform_indices = @transform_0, window_bounds = array<i64: 2, 8568>}, {pipeline_mode = #tpu.pipeline_mode<synchronous>, transform_indices = @transform_1, window_bounds = array<i64: 8568, 32>}, {pipeline_mode = #tpu.pipeline_mode<synchronous>, transform_indices = @transform_2, window_bounds = array<i64: 1, 32>}, {pipeline_mode = #tpu.pipeline_mode<synchronous>, transform_indices = @transform_3, window_bounds = array<i64: 32, 32>}, {pipeline_mode = #tpu.pipeline_mode<synchronous>, transform_indices = @transform_4, window_bounds = array<i64: 1, 32>}, {pipeline_mode = #tpu.pipeline_mode<synchronous>, transform_indices = @transform_5, window_bounds = array<i64: 32, 8568>}, {pipeline_mode = #tpu.pipeline_mode<synchronous>, transform_indices = @transform_6, window_bounds = array<i64: 1, 8568>}, {transform_indices = @transform_7, window_bounds = array<i64: 2, 8568>}]} {
    %c0 = arith.constant 0 : index
    %c0_0 = arith.constant 0 : index
    %0 = vector.load %arg1[%c0, %c0_0] : memref<2x8568xf32, #tpu.memory_space<vmem>>, vector<2x8568xf32>
    %c0_1 = arith.constant 0 : index
    %c0_2 = arith.constant 0 : index
    %1 = vector.load %arg2[%c0_1, %c0_2] : memref<8568x32xf32, #tpu.memory_space<vmem>>, vector<8568x32xf32>
    %cst = arith.constant dense<0.000000e+00> : vector<2x32xf32>
    %2 = tpu.matmul %0, %1, %cst {dimension_numbers = #tpu.dot_dimension_numbers<[1], [0], [0], [1], [0, 0, 1, 1], [], []>} : vector<2x8568xf32>, vector<8568x32xf32>, vector<2x32xf32> -> vector<2x32xf32>
    %c0_3 = arith.constant 0 : index
    %c0_4 = arith.constant 0 : index
    %3 = vector.load %arg3[%c0_3, %c0_4] : memref<1x32xf32, #tpu.memory_space<vmem>>, vector<1x32xf32>
    %4 = vector.broadcast %3 : vector<1x32xf32> to vector<2x32xf32>
    %5 = arith.addf %2, %4 : vector<2x32xf32>
    %cst_5 = arith.constant 0.000000e+00 : f32
    %6 = vector.broadcast %cst_5 : f32 to vector<2x32xf32>
    %7 = arith.maximumf %5, %6 : vector<2x32xf32>
    %c0_6 = arith.constant 0 : index
    %c0_7 = arith.constant 0 : index
    %8 = vector.load %arg4[%c0_6, %c0_7] : memref<32x32xf32, #tpu.memory_space<vmem>>, vector<32x32xf32>
    %cst_8 = arith.constant dense<0.000000e+00> : vector<2x32xf32>
    %9 = tpu.matmul %7, %8, %cst_8 {dimension_numbers = #tpu.dot_dimension_numbers<[1], [0], [0], [1], [0, 0, 1, 1], [], []>} : vector<2x32xf32>, vector<32x32xf32>, vector<2x32xf32> -> vector<2x32xf32>
    %c0_9 = arith.constant 0 : index
    %c0_10 = arith.constant 0 : index
    %10 = vector.load %arg5[%c0_9, %c0_10] : memref<1x32xf32, #tpu.memory_space<vmem>>, vector<1x32xf32>
    %11 = vector.broadcast %10 : vector<1x32xf32> to vector<2x32xf32>
    %12 = arith.addf %9, %11 : vector<2x32xf32>
    %cst_11 = arith.constant 0.000000e+00 : f32
    %13 = vector.broadcast %cst_11 : f32 to vector<2x32xf32>
    %14 = arith.maximumf %12, %13 : vector<2x32xf32>
    %c0_12 = arith.constant 0 : index
    %c0_13 = arith.constant 0 : index
    %15 = vector.load %arg6[%c0_12, %c0_13] : memref<32x8568xf32, #tpu.memory_space<vmem>>, vector<32x8568xf32>
    %cst_14 = arith.constant dense<0.000000e+00> : vector<2x8568xf32>
    %16 = tpu.matmul %14, %15, %cst_14 {dimension_numbers = #tpu.dot_dimension_numbers<[1], [0], [0], [1], [0, 0, 1, 1], [], []>} : vector<2x32xf32>, vector<32x8568xf32>, vector<2x8568xf32> -> vector<2x8568xf32>
    %c0_15 = arith.constant 0 : index
    %c0_16 = arith.constant 0 : index
    %17 = vector.load %arg7[%c0_15, %c0_16] : memref<1x8568xf32, #tpu.memory_space<vmem>>, vector<1x8568xf32>
    %18 = vector.broadcast %17 : vector<1x8568xf32> to vector<2x8568xf32>
    %19 = arith.addf %16, %18 : vector<2x8568xf32>
    %cst_17 = arith.constant 0.000000e+00 : f32
    %20 = vector.broadcast %cst_17 : f32 to vector<2x8568xf32>
    %21 = arith.maximumf %19, %20 : vector<2x8568xf32>
    %22 = arith.addf %21, %0 : vector<2x8568xf32>
    %cst_18 = arith.constant dense<0xFF800000> : vector<2xf32>
    %23 = vector.multi_reduction <maximumf>, %22, %cst_18 [1] : vector<2x8568xf32> to vector<2xf32>
    %24 = vector.shape_cast %23 : vector<2xf32> to vector<2x1xf32>
    %25 = vector.broadcast %24 : vector<2x1xf32> to vector<2x8568xf32>
    %26 = arith.subf %22, %25 : vector<2x8568xf32>
    %27 = math.exp %26 : vector<2x8568xf32>
    %cst_19 = arith.constant dense<0.000000e+00> : vector<2xf32>
    %28 = vector.multi_reduction <add>, %27, %cst_19 [1] : vector<2x8568xf32> to vector<2xf32>
    %29 = vector.shape_cast %28 : vector<2xf32> to vector<2x1xf32>
    %30 = tpu.reciprocal %29 : vector<2x1xf32> -> vector<2x1xf32>
    %31 = vector.broadcast %30 : vector<2x1xf32> to vector<2x8568xf32>
    %32 = arith.mulf %27, %31 : vector<2x8568xf32>
    %c0_20 = arith.constant 0 : index
    %c0_21 = arith.constant 0 : index
    %33 = vector.load %arg8[%c0_20, %c0_21] : memref<2x8568xf32, #tpu.memory_space<vmem>>, vector<2x8568xf32>
    tpu.vector_store %arg8[%c0_20, %c0_21], %32 {strides = array<i32>} : memref<2x8568xf32, #tpu.memory_space<vmem>>, vector<2x8568xf32>,
    return
  }
  func.func @transform_0(%arg0: i32) -> (i32, i32) {
    %c0_i32 = arith.constant 0 : i32
    %c0_i32_0 = arith.constant 0 : i32
    return %arg0, %c0_i32 : i32, i32
  }
  func.func @transform_1(%arg0: i32) -> (i32, i32) {
    %c0_i32 = arith.constant 0 : i32
    %c0_i32_0 = arith.constant 0 : i32
    %c0_i32_1 = arith.constant 0 : i32
    return %c0_i32, %c0_i32_0 : i32, i32
  }
  func.func @transform_2(%arg0: i32) -> (i32, i32) {
    %c0_i32 = arith.constant 0 : i32
    %c0_i32_0 = arith.constant 0 : i32
    %c0_i32_1 = arith.constant 0 : i32
    return %c0_i32, %c0_i32_0 : i32, i32
  }
  func.func @transform_3(%arg0: i32) -> (i32, i32) {
    %c0_i32 = arith.constant 0 : i32
    %c0_i32_0 = arith.constant 0 : i32
    %c0_i32_1 = arith.constant 0 : i32
    return %c0_i32, %c0_i32_0 : i32, i32
  }
  func.func @transform_4(%arg0: i32) -> (i32, i32) {
    %c0_i32 = arith.constant 0 : i32
    %c0_i32_0 = arith.constant 0 : i32
    %c0_i32_1 = arith.constant 0 : i32
    return %c0_i32, %c0_i32_0 : i32, i32
  }
  func.func @transform_5(%arg0: i32) -> (i32, i32) {
    %c0_i32 = arith.constant 0 : i32
    %c0_i32_0 = arith.constant 0 : i32
    %c0_i32_1 = arith.constant 0 : i32
    return %c0_i32, %c0_i32_0 : i32, i32
  }
  func.func @transform_6(%arg0: i32) -> (i32, i32) {
    %c0_i32 = arith.constant 0 : i32
    %c0_i32_0 = arith.constant 0 : i32
    %c0_i32_1 = arith.constant 0 : i32
    return %c0_i32, %c0_i32_0 : i32, i32
  }
  func.func @transform_7(%arg0: i32) -> (i32, i32) {
    %c0_i32 = arith.constant 0 : i32
    %c0_i32_0 = arith.constant 0 : i32
    return %arg0, %c0_i32 : i32, i32
  }
}

</mosaic_0001>

<llo_original>
// kernel: tpu_custom_call.1
$region0: #{tpu_custom_call.1}
  #allocation0 [shape = 'u32[]', space=smem, size = 0x4, offset = 0x4, fixed_abs, tag = 'smem constant byte address 0x4 - core index']
  #allocation1 [shape = 'u32[72,128]{1,0:T(1,128)}', space=vmem, size = 0x9000, scoped, tag = 'internal scratch']
  %s0 = inlined_call_operand.vmem [shape: f32[2,8568], index: 0, kind: input, shape index: {}]
  %s1 = inlined_call_operand.vmem [shape: f32[8568,32], index: 1, kind: input, shape index: {}]
  %s2 = inlined_call_operand.vmem [shape: f32[1,32], index: 2, kind: input, shape index: {}]
  %s3 = inlined_call_operand.vmem [shape: f32[32,32], index: 3, kind: input, shape index: {}]
  %s4 = inlined_call_operand.vmem [shape: f32[1,32], index: 4, kind: input, shape index: {}]
  %s5 = inlined_call_operand.vmem [shape: f32[32,8568], index: 5, kind: input, shape index: {}]
  %s6 = inlined_call_operand.vmem [shape: f32[1,8568], index: 6, kind: input, shape index: {}]
  %s7 = inlined_call_operand.hbm [shape: f32[2,8568], index: 7, kind: output, shape index: {}]
  %s8 = sld [smem:[#allocation0]]
  $region38: #{tpu_custom_call.1} parent=0
    _
  %s10 = ssub.s32 1, %s8
  %s11 = scalar_select 0, %s10, %s8
  $region1: #{tpu_custom_call.1} parent=0
    #allocation2 [shape = 'u8[68608]{0}', space=vmem, size = 0x10c00, scoped, tag = 'output window, operand 0, single buffered']
    #allocation3 [shape = 's32[1]{0}', space=sflag, size = 0x4, scoped, tag = 'scoped memory for tpu_custom_call.1']
    %12 = vsyncpa [#allocation3], 0
    // Predicated region
    $region2: #{tpu_custom_call.1} parent=1 // pred_check
      _
    $region3: #{tpu_custom_call.1} parent=1 // pred_check_branch
      %14 = sbr.rel (0) target = $region5
    $region4: #{tpu_custom_call.1} parent=1 // pred_region
      _
    $region5: #{tpu_custom_call.1} parent=1 // pred_fallthru
      _
    // Predicated region
    $region6: #{tpu_custom_call.1} parent=1 // pred_check
      _
    $region7: #{tpu_custom_call.1} parent=1 // pred_check_branch
      %16 = sbr.rel (0) target = $region9
    $region8: #{tpu_custom_call.1} parent=1 // pred_region
      _
    $region9: #{tpu_custom_call.1} parent=1 // pred_fallthru
      _
    // Predicated region
    $region10: #{tpu_custom_call.1} parent=1 // pred_check
      _
    $region11: #{tpu_custom_call.1} parent=1 // pred_check_branch
      %18 = sbr.rel (0) target = $region13
    $region12: #{tpu_custom_call.1} parent=1 // pred_region
      _
    $region13: #{tpu_custom_call.1} parent=1 // pred_fallthru
      _
    // Predicated region
    $region14: #{tpu_custom_call.1} parent=1 // pred_check
      _
    $region15: #{tpu_custom_call.1} parent=1 // pred_check_branch
      %20 = sbr.rel (0) target = $region17
    $region16: #{tpu_custom_call.1} parent=1 // pred_region
      _
    $region17: #{tpu_custom_call.1} parent=1 // pred_fallthru
      _
    // Predicated region
    $region18: #{tpu_custom_call.1} parent=1 // pred_check
      _
    $region19: #{tpu_custom_call.1} parent=1 // pred_check_branch
      %22 = sbr.rel (0) target = $region21
    $region20: #{tpu_custom_call.1} parent=1 // pred_region
      _
    $region21: #{tpu_custom_call.1} parent=1 // pred_fallthru
      _
    // Predicated region
    $region22: #{tpu_custom_call.1} parent=1 // pred_check
      _
    $region23: #{tpu_custom_call.1} parent=1 // pred_check_branch
      %24 = sbr.rel (0) target = $region25
    $region24: #{tpu_custom_call.1} parent=1 // pred_region
      _
    $region25: #{tpu_custom_call.1} parent=1 // pred_fallthru
      _
    // Predicated region
    $region26: #{tpu_custom_call.1} parent=1 // pred_check
      _
    $region27: #{tpu_custom_call.1} parent=1 // pred_check_branch
      %26 = sbr.rel (0) target = $region29
    $region28: #{tpu_custom_call.1} parent=1 // pred_region
      _
    $region29: #{tpu_custom_call.1} parent=1 // pred_fallthru
      _
    %v27 = vld [vmem:[%s0] sm:$0xff]
    %v28 = vld [vmem:[%s0 + $0x8] sm:$0xff]
    %v29 = vld [vmem:[%s0 + $0x10] sm:$0xff]
    %v30 = vld [vmem:[%s0 + $0x18] sm:$0xff]
    %v31 = vld [vmem:[%s0 + $0x20] sm:$0xff]
    %v32 = vld [vmem:[%s0 + $0x28] sm:$0xff]
    %v33 = vld [vmem:[%s0 + $0x30] sm:$0xff]
    %v34 = vld [vmem:[%s0 + $0x38] sm:$0xff]
    %v35 = vld [vmem:[%s0 + $0x40] sm:$0xff]
    %v36 = vld [vmem:[%s0 + $0x48] sm:$0xff]
    %v37 = vld [vmem:[%s0 + $0x50] sm:$0xff]
    %v38 = vld [vmem:[%s0 + $0x58] sm:$0xff]
    %v39 = vld [vmem:[%s0 + $0x60] sm:$0xff]
    %v40 = vld [vmem:[%s0 + $0x68] sm:$0xff]
    %v41 = vld [vmem:[%s0 + $0x70] sm:$0xff]
    %v42 = vld [vmem:[%s0 + $0x78] sm:$0xff]
    %v43 = vld [vmem:[%s0 + $0x80] sm:$0x3f]
    %v44 = vld [vmem:[%s1] sm:$0xff]
    %v45 = vld [vmem:[%s1 + $0x8] sm:$0xff]
    %v46 = vld [vmem:[%s1 + $0x10] sm:$0xff]
    %v47 = vld [vmem:[%s1 + $0x18] sm:$0xff]
    %v48 = vld [vmem:[%s1 + $0x20] sm:$0xff]
    %v49 = vld [vmem:[%s1 + $0x28] sm:$0xff]
    %v50 = vld [vmem:[%s1 + $0x30] sm:$0xff]
    %v51 = vld [vmem:[%s1 + $0x38] sm:$0xff]
    %v52 = vld [vmem:[%s1 + $0x40] sm:$0xff]
    %v53 = vld [vmem:[%s1 + $0x48] sm:$0xff]
    %v54 = vld [vmem:[%s1 + $0x50] sm:$0xff]
    %v55 = vld [vmem:[%s1 + $0x58] sm:$0xff]
    %v56 = vld [vmem:[%s1 + $0x60] sm:$0xff]
    %v57 = vld [vmem:[%s1 + $0x68] sm:$0xff]
    %v58 = vld [vmem:[%s1 + $0x70] sm:$0xff]
    %v59 = vld [vmem:[%s1 + $0x78] sm:$0xff]
    %v60 = vld [vmem:[%s1 + $0x80] sm:$0xff]
    %v61 = vld [vmem:[%s1 + $0x88] sm:$0xff]
    %v62 = vld [vmem:[%s1 + $0x90] sm:$0xff]
    %v63 = vld [vmem:[%s1 + $0x98] sm:$0xff]
    %v64 = vld [vmem:[%s1 + $0xa0] sm:$0xff]
    %v65 = vld [vmem:[%s1 + $0xa8] sm:$0xff]
    %v66 = vld [vmem:[%s1 + $0xb0] sm:$0xff]
    %v67 = vld [vmem:[%s1 + $0xb8] sm:$0xff]
    %v68 = vld [vmem:[%s1 + $0xc0] sm:$0xff]
    %v69 = vld [vmem:[%s1 + $0xc8] sm:$0xff]
    %v70 = vld [vmem:[%s1 + $0xd0] sm:$0xff]
    %v71 = vld [vmem:[%s1 + $0xd8] sm:$0xff]
    %v72 = vld [vmem:[%s1 + $0xe0] sm:$0xff]
    %v73 = vld [vmem:[%s1 + $0xe8] sm:$0xff]
    %v74 = vld [vmem:[%s1 + $0xf0] sm:$0xff]
    %v75 = vld [vmem:[%s1 + $0xf8] sm:$0xff]
    %v76 = vld [vmem:[%s1 + $0x100] sm:$0xff]
    %v77 = vld [vmem:[%s1 + $0x108] sm:$0xff]
    %v78 = vld [vmem:[%s1 + $0x110] sm:$0xff]
    %v79 = vld [vmem:[%s1 + $0x118] sm:$0xff]
    %v80 = vld [vmem:[%s1 + $0x120] sm:$0xff]
    %v81 = vld [vmem:[%s1 + $0x128] sm:$0xff]
    %v82 = vld [vmem:[%s1 + $0x130] sm:$0xff]
    %v83 = vld [vmem:[%s1 + $0x138] sm:$0xff]
    %v84 = vld [vmem:[%s1 + $0x140] sm:$0xff]
    %v85 = vld [vmem:[%s1 + $0x148] sm:$0xff]
    %v86 = vld [vmem:[%s1 + $0x150] sm:$0xff]
    %v87 = vld [vmem:[%s1 + $0x158] sm:$0xff]
    %v88 = vld [vmem:[%s1 + $0x160] sm:$0xff]
    %v89 = vld [vmem:[%s1 + $0x168] sm:$0xff]
    %v90 = vld [vmem:[%s1 + $0x170] sm:$0xff]
    %v91 = vld [vmem:[%s1 + $0x178] sm:$0xff]
    %v92 = vld [vmem:[%s1 + $0x180] sm:$0xff]
    %v93 = vld [vmem:[%s1 + $0x188] sm:$0xff]
    %v94 = vld [vmem:[%s1 + $0x190] sm:$0xff]
    %v95 = vld [vmem:[%s1 + $0x198] sm:$0xff]
    %v96 = vld [vmem:[%s1 + $0x1a0] sm:$0xff]
    %v97 = vld [vmem:[%s1 + $0x1a8] sm:$0xff]
    %v98 = vld [vmem:[%s1 + $0x1b0] sm:$0xff]
    %v99 = vld [vmem:[%s1 + $0x1b8] sm:$0xff]
    %v100 = vld [vmem:[%s1 + $0x1c0] sm:$0xff]
    %v101 = vld [vmem:[%s1 + $0x1c8] sm:$0xff]
    %v102 = vld [vmem:[%s1 + $0x1d0] sm:$0xff]
    %v103 = vld [vmem:[%s1 + $0x1d8] sm:$0xff]
    %v104 = vld [vmem:[%s1 + $0x1e0] sm:$0xff]
    %v105 = vld [vmem:[%s1 + $0x1e8] sm:$0xff]
    %v106 = vld [vmem:[%s1 + $0x1f0] sm:$0xff]
    %v107 = vld [vmem:[%s1 + $0x1f8] sm:$0xff]
    %v108 = vld [vmem:[%s1 + $0x200] sm:$0xff]
    %v109 = vld [vmem:[%s1 + $0x208] sm:$0xff]
    %v110 = vld [vmem:[%s1 + $0x210] sm:$0xff]
    %v111 = vld [vmem:[%s1 + $0x218] sm:$0xff]
    %v112 = vld [vmem:[%s1 + $0x220] sm:$0xff]
    %v113 = vld [vmem:[%s1 + $0x228] sm:$0xff]
    %v114 = vld [vmem:[%s1 + $0x230] sm:$0xff]
    %v115 = vld [vmem:[%s1 + $0x238] sm:$0xff]
    %v116 = vld [vmem:[%s1 + $0x240] sm:$0xff]
    %v117 = vld [vmem:[%s1 + $0x248] sm:$0xff]
    %v118 = vld [vmem:[%s1 + $0x250] sm:$0xff]
    %v119 = vld [vmem:[%s1 + $0x258] sm:$0xff]
    %v120 = vld [vmem:[%s1 + $0x260] sm:$0xff]
    %v121 = vld [vmem:[%s1 + $0x268] sm:$0xff]
    %v122 = vld [vmem:[%s1 + $0x270] sm:$0xff]
    %v123 = vld [vmem:[%s1 + $0x278] sm:$0xff]
    %v124 = vld [vmem:[%s1 + $0x280] sm:$0xff]
    %v125 = vld [vmem:[%s1 + $0x288] sm:$0xff]
    %v126 = vld [vmem:[%s1 + $0x290] sm:$0xff]
    %v127 = vld [vmem:[%s1 + $0x298] sm:$0xff]
    %v128 = vld [vmem:[%s1 + $0x2a0] sm:$0xff]
    %v129 = vld [vmem:[%s1 + $0x2a8] sm:$0xff]
    %v130 = vld [vmem:[%s1 + $0x2b0] sm:$0xff]
    %v131 = vld [vmem:[%s1 + $0x2b8] sm:$0xff]
    %v132 = vld [vmem:[%s1 + $0x2c0] sm:$0xff]
    %v133 = vld [vmem:[%s1 + $0x2c8] sm:$0xff]
    %v134 = vld [vmem:[%s1 + $0x2d0] sm:$0xff]
    %v135 = vld [vmem:[%s1 + $0x2d8] sm:$0xff]
    %v136 = vld [vmem:[%s1 + $0x2e0] sm:$0xff]
    %v137 = vld [vmem:[%s1 + $0x2e8] sm:$0xff]
    %v138 = vld [vmem:[%s1 + $0x2f0] sm:$0xff]
    %v139 = vld [vmem:[%s1 + $0x2f8] sm:$0xff]
    %v140 = vld [vmem:[%s1 + $0x300] sm:$0xff]
    %v141 = vld [vmem:[%s1 + $0x308] sm:$0xff]
    %v142 = vld [vmem:[%s1 + $0x310] sm:$0xff]
    %v143 = vld [vmem:[%s1 + $0x318] sm:$0xff]
    %v144 = vld [vmem:[%s1 + $0x320] sm:$0xff]
    %v145 = vld [vmem:[%s1 + $0x328] sm:$0xff]
    %v146 = vld [vmem:[%s1 + $0x330] sm:$0xff]
    %v147 = vld [vmem:[%s1 + $0x338] sm:$0xff]
    %v148 = vld [vmem:[%s1 + $0x340] sm:$0xff]
    %v149 = vld [vmem:[%s1 + $0x348] sm:$0xff]
    %v150 = vld [vmem:[%s1 + $0x350] sm:$0xff]
    %v151 = vld [vmem:[%s1 + $0x358] sm:$0xff]
    %v152 = vld [vmem:[%s1 + $0x360] sm:$0xff]
    %v153 = vld [vmem:[%s1 + $0x368] sm:$0xff]
    %v154 = vld [vmem:[%s1 + $0x370] sm:$0xff]
    %v155 = vld [vmem:[%s1 + $0x378] sm:$0xff]
    %v156 = vld [vmem:[%s1 + $0x380] sm:$0xff]
    %v157 = vld [vmem:[%s1 + $0x388] sm:$0xff]
    %v158 = vld [vmem:[%s1 + $0x390] sm:$0xff]
    %v159 = vld [vmem:[%s1 + $0x398] sm:$0xff]
    %v160 = vld [vmem:[%s1 + $0x3a0] sm:$0xff]
    %v161 = vld [vmem:[%s1 + $0x3a8] sm:$0xff]
    %v162 = vld [vmem:[%s1 + $0x3b0] sm:$0xff]
    %v163 = vld [vmem:[%s1 + $0x3b8] sm:$0xff]
    %v164 = vld [vmem:[%s1 + $0x3c0] sm:$0xff]
    %v165 = vld [vmem:[%s1 + $0x3c8] sm:$0xff]
    %v166 = vld [vmem:[%s1 + $0x3d0] sm:$0xff]
    %v167 = vld [vmem:[%s1 + $0x3d8] sm:$0xff]
    %v168 = vld [vmem:[%s1 + $0x3e0] sm:$0xff]
    %v169 = vld [vmem:[%s1 + $0x3e8] sm:$0xff]
    %v170 = vld [vmem:[%s1 + $0x3f0] sm:$0xff]
    %v171 = vld [vmem:[%s1 + $0x3f8] sm:$0xff]
    %v172 = vld [vmem:[%s1 + $0x400] sm:$0xff]
    %v173 = vld [vmem:[%s1 + $0x408] sm:$0xff]
    %v174 = vld [vmem:[%s1 + $0x410] sm:$0xff]
    %v175 = vld [vmem:[%s1 + $0x418] sm:$0xff]
    %v176 = vld [vmem:[%s1 + $0x420] sm:$0xff]
    %v177 = vld [vmem:[%s1 + $0x428] sm:$0xff]
    %v178 = vld [vmem:[%s1 + $0x430] sm:$0xff]
    %v179 = vld [vmem:[%s1 + $0x438] sm:$0xff]
    %v180 = vld [vmem:[%s1 + $0x440] sm:$0xff]
    %v181 = vld [vmem:[%s1 + $0x448] sm:$0xff]
    %v182 = vld [vmem:[%s1 + $0x450] sm:$0xff]
    %v183 = vld [vmem:[%s1 + $0x458] sm:$0xff]
    %v184 = vld [vmem:[%s1 + $0x460] sm:$0xff]
    %v185 = vld [vmem:[%s1 + $0x468] sm:$0xff]
    %v186 = vld [vmem:[%s1 + $0x470] sm:$0xff]
    %v187 = vld [vmem:[%s1 + $0x478] sm:$0xff]
    %v188 = vld [vmem:[%s1 + $0x480] sm:$0xff]
    %v189 = vld [vmem:[%s1 + $0x488] sm:$0xff]
    %v190 = vld [vmem:[%s1 + $0x490] sm:$0xff]
    %v191 = vld [vmem:[%s1 + $0x498] sm:$0xff]
    %v192 = vld [vmem:[%s1 + $0x4a0] sm:$0xff]
    %v193 = vld [vmem:[%s1 + $0x4a8] sm:$0xff]
    %v194 = vld [vmem:[%s1 + $0x4b0] sm:$0xff]
    %v195 = vld [vmem:[%s1 + $0x4b8] sm:$0xff]
    %v196 = vld [vmem:[%s1 + $0x4c0] sm:$0xff]
    %v197 = vld [vmem:[%s1 + $0x4c8] sm:$0xff]
    %v198 = vld [vmem:[%s1 + $0x4d0] sm:$0xff]
    %v199 = vld [vmem:[%s1 + $0x4d8] sm:$0xff]
    %v200 = vld [vmem:[%s1 + $0x4e0] sm:$0xff]
    %v201 = vld [vmem:[%s1 + $0x4e8] sm:$0xff]
    %v202 = vld [vmem:[%s1 + $0x4f0] sm:$0xff]
    %v203 = vld [vmem:[%s1 + $0x4f8] sm:$0xff]
    %v204 = vld [vmem:[%s1 + $0x500] sm:$0xff]
    %v205 = vld [vmem:[%s1 + $0x508] sm:$0xff]
    %v206 = vld [vmem:[%s1 + $0x510] sm:$0xff]
    %v207 = vld [vmem:[%s1 + $0x518] sm:$0xff]
    %v208 = vld [vmem:[%s1 + $0x520] sm:$0xff]
    %v209 = vld [vmem:[%s1 + $0x528] sm:$0xff]
    %v210 = vld [vmem:[%s1 + $0x530] sm:$0xff]
    %v211 = vld [vmem:[%s1 + $0x538] sm:$0xff]
    %v212 = vld [vmem:[%s1 + $0x540] sm:$0xff]
    %v213 = vld [vmem:[%s1 + $0x548] sm:$0xff]
    %v214 = vld [vmem:[%s1 + $0x550] sm:$0xff]
    %v215 = vld [vmem:[%s1 + $0x558] sm:$0xff]
    %v216 = vld [vmem:[%s1 + $0x560] sm:$0xff]
    %v217 = vld [vmem:[%s1 + $0x568] sm:$0xff]
    %v218 = vld [vmem:[%s1 + $0x570] sm:$0xff]
    %v219 = vld [vmem:[%s1 + $0x578] sm:$0xff]
    %v220 = vld [vmem:[%s1 + $0x580] sm:$0xff]
    %v221 = vld [vmem:[%s1 + $0x588] sm:$0xff]
    %v222 = vld [vmem:[%s1 + $0x590] sm:$0xff]
    %v223 = vld [vmem:[%s1 + $0x598] sm:$0xff]
    %v224 = vld [vmem:[%s1 + $0x5a0] sm:$0xff]
    %v225 = vld [vmem:[%s1 + $0x5a8] sm:$0xff]
    %v226 = vld [vmem:[%s1 + $0x5b0] sm:$0xff]
    %v227 = vld [vmem:[%s1 + $0x5b8] sm:$0xff]
    %v228 = vld [vmem:[%s1 + $0x5c0] sm:$0xff]
    %v229 = vld [vmem:[%s1 + $0x5c8] sm:$0xff]
    %v230 = vld [vmem:[%s1 + $0x5d0] sm:$0xff]
    %v231 = vld [vmem:[%s1 + $0x5d8] sm:$0xff]
    %v232 = vld [vmem:[%s1 + $0x5e0] sm:$0xff]
    %v233 = vld [vmem:[%s1 + $0x5e8] sm:$0xff]
    %v234 = vld [vmem:[%s1 + $0x5f0] sm:$0xff]
    %v235 = vld [vmem:[%s1 + $0x5f8] sm:$0xff]
    %v236 = vld [vmem:[%s1 + $0x600] sm:$0xff]
    %v237 = vld [vmem:[%s1 + $0x608] sm:$0xff]
    %v238 = vld [vmem:[%s1 + $0x610] sm:$0xff]
    %v239 = vld [vmem:[%s1 + $0x618] sm:$0xff]
    %v240 = vld [vmem:[%s1 + $0x620] sm:$0xff]
    %v241 = vld [vmem:[%s1 + $0x628] sm:$0xff]
    %v242 = vld [vmem:[%s1 + $0x630] sm:$0xff]
    %v243 = vld [vmem:[%s1 + $0x638] sm:$0xff]
    %v244 = vld [vmem:[%s1 + $0x640] sm:$0xff]
    %v245 = vld [vmem:[%s1 + $0x648] sm:$0xff]
    %v246 = vld [vmem:[%s1 + $0x650] sm:$0xff]
    %v247 = vld [vmem:[%s1 + $0x658] sm:$0xff]
    %v248 = vld [vmem:[%s1 + $0x660] sm:$0xff]
    %v249 = vld [vmem:[%s1 + $0x668] sm:$0xff]
    %v250 = vld [vmem:[%s1 + $0x670] sm:$0xff]
    %v251 = vld [vmem:[%s1 + $0x678] sm:$0xff]
    %v252 = vld [vmem:[%s1 + $0x680] sm:$0xff]
    %v253 = vld [vmem:[%s1 + $0x688] sm:$0xff]
    %v254 = vld [vmem:[%s1 + $0x690] sm:$0xff]
    %v255 = vld [vmem:[%s1 + $0x698] sm:$0xff]
    %v256 = vld [vmem:[%s1 + $0x6a0] sm:$0xff]
    %v257 = vld [vmem:[%s1 + $0x6a8] sm:$0xff]
    %v258 = vld [vmem:[%s1 + $0x6b0] sm:$0xff]
    %v259 = vld [vmem:[%s1 + $0x6b8] sm:$0xff]
    %v260 = vld [vmem:[%s1 + $0x6c0] sm:$0xff]
    %v261 = vld [vmem:[%s1 + $0x6c8] sm:$0xff]
    %v262 = vld [vmem:[%s1 + $0x6d0] sm:$0xff]
    %v263 = vld [vmem:[%s1 + $0x6d8] sm:$0xff]
    %v264 = vld [vmem:[%s1 + $0x6e0] sm:$0xff]
    %v265 = vld [vmem:[%s1 + $0x6e8] sm:$0xff]
    %v266 = vld [vmem:[%s1 + $0x6f0] sm:$0xff]
    %v267 = vld [vmem:[%s1 + $0x6f8] sm:$0xff]
    %v268 = vld [vmem:[%s1 + $0x700] sm:$0xff]
    %v269 = vld [vmem:[%s1 + $0x708] sm:$0xff]
    %v270 = vld [vmem:[%s1 + $0x710] sm:$0xff]
    %v271 = vld [vmem:[%s1 + $0x718] sm:$0xff]
    %v272 = vld [vmem:[%s1 + $0x720] sm:$0xff]
    %v273 = vld [vmem:[%s1 + $0x728] sm:$0xff]
    %v274 = vld [vmem:[%s1 + $0x730] sm:$0xff]
    %v275 = vld [vmem:[%s1 + $0x738] sm:$0xff]
    %v276 = vld [vmem:[%s1 + $0x740] sm:$0xff]
    %v277 = vld [vmem:[%s1 + $0x748] sm:$0xff]
    %v278 = vld [vmem:[%s1 + $0x750] sm:$0xff]
    %v279 = vld [vmem:[%s1 + $0x758] sm:$0xff]
    %v280 = vld [vmem:[%s1 + $0x760] sm:$0xff]
    %v281 = vld [vmem:[%s1 + $0x768] sm:$0xff]
    %v282 = vld [vmem:[%s1 + $0x770] sm:$0xff]
    %v283 = vld [vmem:[%s1 + $0x778] sm:$0xff]
    %v284 = vld [vmem:[%s1 + $0x780] sm:$0xff]
    %v285 = vld [vmem:[%s1 + $0x788] sm:$0xff]
    %v286 = vld [vmem:[%s1 + $0x790] sm:$0xff]
    %v287 = vld [vmem:[%s1 + $0x798] sm:$0xff]
    %v288 = vld [vmem:[%s1 + $0x7a0] sm:$0xff]
    %v289 = vld [vmem:[%s1 + $0x7a8] sm:$0xff]
    %v290 = vld [vmem:[%s1 + $0x7b0] sm:$0xff]
    %v291 = vld [vmem:[%s1 + $0x7b8] sm:$0xff]
    %v292 = vld [vmem:[%s1 + $0x7c0] sm:$0xff]
    %v293 = vld [vmem:[%s1 + $0x7c8] sm:$0xff]
    %v294 = vld [vmem:[%s1 + $0x7d0] sm:$0xff]
    %v295 = vld [vmem:[%s1 + $0x7d8] sm:$0xff]
    %v296 = vld [vmem:[%s1 + $0x7e0] sm:$0xff]
    %v297 = vld [vmem:[%s1 + $0x7e8] sm:$0xff]
    %v298 = vld [vmem:[%s1 + $0x7f0] sm:$0xff]
    %v299 = vld [vmem:[%s1 + $0x7f8] sm:$0xff]
    %v300 = vld [vmem:[%s1 + $0x800] sm:$0xff]
    %v301 = vld [vmem:[%s1 + $0x808] sm:$0xff]
    %v302 = vld [vmem:[%s1 + $0x810] sm:$0xff]
    %v303 = vld [vmem:[%s1 + $0x818] sm:$0xff]
    %v304 = vld [vmem:[%s1 + $0x820] sm:$0xff]
    %v305 = vld [vmem:[%s1 + $0x828] sm:$0xff]
    %v306 = vld [vmem:[%s1 + $0x830] sm:$0xff]
    %v307 = vld [vmem:[%s1 + $0x838] sm:$0xff]
    %v308 = vld [vmem:[%s1 + $0x840] sm:$0xff]
    %v309 = vld [vmem:[%s1 + $0x848] sm:$0xff]
    %v310 = vld [vmem:[%s1 + $0x850] sm:$0xff]
    %v311 = vld [vmem:[%s1 + $0x858] sm:$0xff]
    %v312 = vld [vmem:[%s1 + $0x860] sm:$0xff]
    %v313 = vld [vmem:[%s1 + $0x868] sm:$0xff]
    %v314 = vld [vmem:[%s1 + $0x870] sm:$0xff]
    %v315 = vld [vmem:[%s1 + $0x878] sm:$0xff]
    %v316 = vld [vmem:[%s1 + $0x880] sm:$0xff]
    %v317 = vld [vmem:[%s1 + $0x888] sm:$0xff]
    %v318 = vld [vmem:[%s1 + $0x890] sm:$0xff]
    %v319 = vld [vmem:[%s1 + $0x898] sm:$0xff]
    %v320 = vld [vmem:[%s1 + $0x8a0] sm:$0xff]
    %v321 = vld [vmem:[%s1 + $0x8a8] sm:$0xff]
    %v322 = vld [vmem:[%s1 + $0x8b0] sm:$0xff]
    %v323 = vld [vmem:[%s1 + $0x8b8] sm:$0xff]
    %v324 = vld [vmem:[%s1 + $0x8c0] sm:$0xff]
    %v325 = vld [vmem:[%s1 + $0x8c8] sm:$0xff]
    %v326 = vld [vmem:[%s1 + $0x8d0] sm:$0xff]
    %v327 = vld [vmem:[%s1 + $0x8d8] sm:$0xff]
    %v328 = vld [vmem:[%s1 + $0x8e0] sm:$0xff]
    %v329 = vld [vmem:[%s1 + $0x8e8] sm:$0xff]
    %v330 = vld [vmem:[%s1 + $0x8f0] sm:$0xff]
    %v331 = vld [vmem:[%s1 + $0x8f8] sm:$0xff]
    %v332 = vld [vmem:[%s1 + $0x900] sm:$0xff]
    %v333 = vld [vmem:[%s1 + $0x908] sm:$0xff]
    %v334 = vld [vmem:[%s1 + $0x910] sm:$0xff]
    %v335 = vld [vmem:[%s1 + $0x918] sm:$0xff]
    %v336 = vld [vmem:[%s1 + $0x920] sm:$0xff]
    %v337 = vld [vmem:[%s1 + $0x928] sm:$0xff]
    %v338 = vld [vmem:[%s1 + $0x930] sm:$0xff]
    %v339 = vld [vmem:[%s1 + $0x938] sm:$0xff]
    %v340 = vld [vmem:[%s1 + $0x940] sm:$0xff]
    %v341 = vld [vmem:[%s1 + $0x948] sm:$0xff]
    %v342 = vld [vmem:[%s1 + $0x950] sm:$0xff]
    %v343 = vld [vmem:[%s1 + $0x958] sm:$0xff]
    %v344 = vld [vmem:[%s1 + $0x960] sm:$0xff]
    %v345 = vld [vmem:[%s1 + $0x968] sm:$0xff]
    %v346 = vld [vmem:[%s1 + $0x970] sm:$0xff]
    %v347 = vld [vmem:[%s1 + $0x978] sm:$0xff]
    %v348 = vld [vmem:[%s1 + $0x980] sm:$0xff]
    %v349 = vld [vmem:[%s1 + $0x988] sm:$0xff]
    %v350 = vld [vmem:[%s1 + $0x990] sm:$0xff]
    %v351 = vld [vmem:[%s1 + $0x998] sm:$0xff]
    %v352 = vld [vmem:[%s1 + $0x9a0] sm:$0xff]
    %v353 = vld [vmem:[%s1 + $0x9a8] sm:$0xff]
    %v354 = vld [vmem:[%s1 + $0x9b0] sm:$0xff]
    %v355 = vld [vmem:[%s1 + $0x9b8] sm:$0xff]
    %v356 = vld [vmem:[%s1 + $0x9c0] sm:$0xff]
    %v357 = vld [vmem:[%s1 + $0x9c8] sm:$0xff]
    %v358 = vld [vmem:[%s1 + $0x9d0] sm:$0xff]
    %v359 = vld [vmem:[%s1 + $0x9d8] sm:$0xff]
    %v360 = vld [vmem:[%s1 + $0x9e0] sm:$0xff]
    %v361 = vld [vmem:[%s1 + $0x9e8] sm:$0xff]
    %v362 = vld [vmem:[%s1 + $0x9f0] sm:$0xff]
    %v363 = vld [vmem:[%s1 + $0x9f8] sm:$0xff]
    %v364 = vld [vmem:[%s1 + $0xa00] sm:$0xff]
    %v365 = vld [vmem:[%s1 + $0xa08] sm:$0xff]
    %v366 = vld [vmem:[%s1 + $0xa10] sm:$0xff]
    %v367 = vld [vmem:[%s1 + $0xa18] sm:$0xff]
    %v368 = vld [vmem:[%s1 + $0xa20] sm:$0xff]
    %v369 = vld [vmem:[%s1 + $0xa28] sm:$0xff]
    %v370 = vld [vmem:[%s1 + $0xa30] sm:$0xff]
    %v371 = vld [vmem:[%s1 + $0xa38] sm:$0xff]
    %v372 = vld [vmem:[%s1 + $0xa40] sm:$0xff]
    %v373 = vld [vmem:[%s1 + $0xa48] sm:$0xff]
    %v374 = vld [vmem:[%s1 + $0xa50] sm:$0xff]
    %v375 = vld [vmem:[%s1 + $0xa58] sm:$0xff]
    %v376 = vld [vmem:[%s1 + $0xa60] sm:$0xff]
    %v377 = vld [vmem:[%s1 + $0xa68] sm:$0xff]
    %v378 = vld [vmem:[%s1 + $0xa70] sm:$0xff]
    %v379 = vld [vmem:[%s1 + $0xa78] sm:$0xff]
    %v380 = vld [vmem:[%s1 + $0xa80] sm:$0xff]
    %v381 = vld [vmem:[%s1 + $0xa88] sm:$0xff]
    %v382 = vld [vmem:[%s1 + $0xa90] sm:$0xff]
    %v383 = vld [vmem:[%s1 + $0xa98] sm:$0xff]
    %v384 = vld [vmem:[%s1 + $0xaa0] sm:$0xff]
    %v385 = vld [vmem:[%s1 + $0xaa8] sm:$0xff]
    %v386 = vld [vmem:[%s1 + $0xab0] sm:$0xff]
    %v387 = vld [vmem:[%s1 + $0xab8] sm:$0xff]
    %v388 = vld [vmem:[%s1 + $0xac0] sm:$0xff]
    %v389 = vld [vmem:[%s1 + $0xac8] sm:$0xff]
    %v390 = vld [vmem:[%s1 + $0xad0] sm:$0xff]
    %v391 = vld [vmem:[%s1 + $0xad8] sm:$0xff]
    %v392 = vld [vmem:[%s1 + $0xae0] sm:$0xff]
    %v393 = vld [vmem:[%s1 + $0xae8] sm:$0xff]
    %v394 = vld [vmem:[%s1 + $0xaf0] sm:$0xff]
    %v395 = vld [vmem:[%s1 + $0xaf8] sm:$0xff]
    %v396 = vld [vmem:[%s1 + $0xb00] sm:$0xff]
    %v397 = vld [vmem:[%s1 + $0xb08] sm:$0xff]
    %v398 = vld [vmem:[%s1 + $0xb10] sm:$0xff]
    %v399 = vld [vmem:[%s1 + $0xb18] sm:$0xff]
    %v400 = vld [vmem:[%s1 + $0xb20] sm:$0xff]
    %v401 = vld [vmem:[%s1 + $0xb28] sm:$0xff]
    %v402 = vld [vmem:[%s1 + $0xb30] sm:$0xff]
    %v403 = vld [vmem:[%s1 + $0xb38] sm:$0xff]
    %v404 = vld [vmem:[%s1 + $0xb40] sm:$0xff]
    %v405 = vld [vmem:[%s1 + $0xb48] sm:$0xff]
    %v406 = vld [vmem:[%s1 + $0xb50] sm:$0xff]
    %v407 = vld [vmem:[%s1 + $0xb58] sm:$0xff]
    %v408 = vld [vmem:[%s1 + $0xb60] sm:$0xff]
    %v409 = vld [vmem:[%s1 + $0xb68] sm:$0xff]
    %v410 = vld [vmem:[%s1 + $0xb70] sm:$0xff]
    %v411 = vld [vmem:[%s1 + $0xb78] sm:$0xff]
    %v412 = vld [vmem:[%s1 + $0xb80] sm:$0xff]
    %v413 = vld [vmem:[%s1 + $0xb88] sm:$0xff]
    %v414 = vld [vmem:[%s1 + $0xb90] sm:$0xff]
    %v415 = vld [vmem:[%s1 + $0xb98] sm:$0xff]
    %v416 = vld [vmem:[%s1 + $0xba0] sm:$0xff]
    %v417 = vld [vmem:[%s1 + $0xba8] sm:$0xff]
    %v418 = vld [vmem:[%s1 + $0xbb0] sm:$0xff]
    %v419 = vld [vmem:[%s1 + $0xbb8] sm:$0xff]
    %v420 = vld [vmem:[%s1 + $0xbc0] sm:$0xff]
    %v421 = vld [vmem:[%s1 + $0xbc8] sm:$0xff]
    %v422 = vld [vmem:[%s1 + $0xbd0] sm:$0xff]
    %v423 = vld [vmem:[%s1 + $0xbd8] sm:$0xff]
    %v424 = vld [vmem:[%s1 + $0xbe0] sm:$0xff]
    %v425 = vld [vmem:[%s1 + $0xbe8] sm:$0xff]
    %v426 = vld [vmem:[%s1 + $0xbf0] sm:$0xff]
    %v427 = vld [vmem:[%s1 + $0xbf8] sm:$0xff]
    %v428 = vld [vmem:[%s1 + $0xc00] sm:$0xff]
    %v429 = vld [vmem:[%s1 + $0xc08] sm:$0xff]
    %v430 = vld [vmem:[%s1 + $0xc10] sm:$0xff]
    %v431 = vld [vmem:[%s1 + $0xc18] sm:$0xff]
    %v432 = vld [vmem:[%s1 + $0xc20] sm:$0xff]
    %v433 = vld [vmem:[%s1 + $0xc28] sm:$0xff]
    %v434 = vld [vmem:[%s1 + $0xc30] sm:$0xff]
    %v435 = vld [vmem:[%s1 + $0xc38] sm:$0xff]
    %v436 = vld [vmem:[%s1 + $0xc40] sm:$0xff]
    %v437 = vld [vmem:[%s1 + $0xc48] sm:$0xff]
    %v438 = vld [vmem:[%s1 + $0xc50] sm:$0xff]
    %v439 = vld [vmem:[%s1 + $0xc58] sm:$0xff]
    %v440 = vld [vmem:[%s1 + $0xc60] sm:$0xff]
    %v441 = vld [vmem:[%s1 + $0xc68] sm:$0xff]
    %v442 = vld [vmem:[%s1 + $0xc70] sm:$0xff]
    %v443 = vld [vmem:[%s1 + $0xc78] sm:$0xff]
    %v444 = vld [vmem:[%s1 + $0xc80] sm:$0xff]
    %v445 = vld [vmem:[%s1 + $0xc88] sm:$0xff]
    %v446 = vld [vmem:[%s1 + $0xc90] sm:$0xff]
    %v447 = vld [vmem:[%s1 + $0xc98] sm:$0xff]
    %v448 = vld [vmem:[%s1 + $0xca0] sm:$0xff]
    %v449 = vld [vmem:[%s1 + $0xca8] sm:$0xff]
    %v450 = vld [vmem:[%s1 + $0xcb0] sm:$0xff]
    %v451 = vld [vmem:[%s1 + $0xcb8] sm:$0xff]
    %v452 = vld [vmem:[%s1 + $0xcc0] sm:$0xff]
    %v453 = vld [vmem:[%s1 + $0xcc8] sm:$0xff]
    %v454 = vld [vmem:[%s1 + $0xcd0] sm:$0xff]
    %v455 = vld [vmem:[%s1 + $0xcd8] sm:$0xff]
    %v456 = vld [vmem:[%s1 + $0xce0] sm:$0xff]
    %v457 = vld [vmem:[%s1 + $0xce8] sm:$0xff]
    %v458 = vld [vmem:[%s1 + $0xcf0] sm:$0xff]
    %v459 = vld [vmem:[%s1 + $0xcf8] sm:$0xff]
    %v460 = vld [vmem:[%s1 + $0xd00] sm:$0xff]
    %v461 = vld [vmem:[%s1 + $0xd08] sm:$0xff]
    %v462 = vld [vmem:[%s1 + $0xd10] sm:$0xff]
    %v463 = vld [vmem:[%s1 + $0xd18] sm:$0xff]
    %v464 = vld [vmem:[%s1 + $0xd20] sm:$0xff]
    %v465 = vld [vmem:[%s1 + $0xd28] sm:$0xff]
    %v466 = vld [vmem:[%s1 + $0xd30] sm:$0xff]
    %v467 = vld [vmem:[%s1 + $0xd38] sm:$0xff]
    %v468 = vld [vmem:[%s1 + $0xd40] sm:$0xff]
    %v469 = vld [vmem:[%s1 + $0xd48] sm:$0xff]
    %v470 = vld [vmem:[%s1 + $0xd50] sm:$0xff]
    %v471 = vld [vmem:[%s1 + $0xd58] sm:$0xff]
    %v472 = vld [vmem:[%s1 + $0xd60] sm:$0xff]
    %v473 = vld [vmem:[%s1 + $0xd68] sm:$0xff]
    %v474 = vld [vmem:[%s1 + $0xd70] sm:$0xff]
    %v475 = vld [vmem:[%s1 + $0xd78] sm:$0xff]
    %v476 = vld [vmem:[%s1 + $0xd80] sm:$0xff]
    %v477 = vld [vmem:[%s1 + $0xd88] sm:$0xff]
    %v478 = vld [vmem:[%s1 + $0xd90] sm:$0xff]
    %v479 = vld [vmem:[%s1 + $0xd98] sm:$0xff]
    %v480 = vld [vmem:[%s1 + $0xda0] sm:$0xff]
    %v481 = vld [vmem:[%s1 + $0xda8] sm:$0xff]
    %v482 = vld [vmem:[%s1 + $0xdb0] sm:$0xff]
    %v483 = vld [vmem:[%s1 + $0xdb8] sm:$0xff]
    %v484 = vld [vmem:[%s1 + $0xdc0] sm:$0xff]
    %v485 = vld [vmem:[%s1 + $0xdc8] sm:$0xff]
    %v486 = vld [vmem:[%s1 + $0xdd0] sm:$0xff]
    %v487 = vld [vmem:[%s1 + $0xdd8] sm:$0xff]
    %v488 = vld [vmem:[%s1 + $0xde0] sm:$0xff]
    %v489 = vld [vmem:[%s1 + $0xde8] sm:$0xff]
    %v490 = vld [vmem:[%s1 + $0xdf0] sm:$0xff]
    %v491 = vld [vmem:[%s1 + $0xdf8] sm:$0xff]
    %v492 = vld [vmem:[%s1 + $0xe00] sm:$0xff]
    %v493 = vld [vmem:[%s1 + $0xe08] sm:$0xff]
    %v494 = vld [vmem:[%s1 + $0xe10] sm:$0xff]
    %v495 = vld [vmem:[%s1 + $0xe18] sm:$0xff]
    %v496 = vld [vmem:[%s1 + $0xe20] sm:$0xff]
    %v497 = vld [vmem:[%s1 + $0xe28] sm:$0xff]
    %v498 = vld [vmem:[%s1 + $0xe30] sm:$0xff]
    %v499 = vld [vmem:[%s1 + $0xe38] sm:$0xff]
    %v500 = vld [vmem:[%s1 + $0xe40] sm:$0xff]
    %v501 = vld [vmem:[%s1 + $0xe48] sm:$0xff]
    %v502 = vld [vmem:[%s1 + $0xe50] sm:$0xff]
    %v503 = vld [vmem:[%s1 + $0xe58] sm:$0xff]
    %v504 = vld [vmem:[%s1 + $0xe60] sm:$0xff]
    %v505 = vld [vmem:[%s1 + $0xe68] sm:$0xff]
    %v506 = vld [vmem:[%s1 + $0xe70] sm:$0xff]
    %v507 = vld [vmem:[%s1 + $0xe78] sm:$0xff]
    %v508 = vld [vmem:[%s1 + $0xe80] sm:$0xff]
    %v509 = vld [vmem:[%s1 + $0xe88] sm:$0xff]
    %v510 = vld [vmem:[%s1 + $0xe90] sm:$0xff]
    %v511 = vld [vmem:[%s1 + $0xe98] sm:$0xff]
    %v512 = vld [vmem:[%s1 + $0xea0] sm:$0xff]
    %v513 = vld [vmem:[%s1 + $0xea8] sm:$0xff]
    %v514 = vld [vmem:[%s1 + $0xeb0] sm:$0xff]
    %v515 = vld [vmem:[%s1 + $0xeb8] sm:$0xff]
    %v516 = vld [vmem:[%s1 + $0xec0] sm:$0xff]
    %v517 = vld [vmem:[%s1 + $0xec8] sm:$0xff]
    %v518 = vld [vmem:[%s1 + $0xed0] sm:$0xff]
    %v519 = vld [vmem:[%s1 + $0xed8] sm:$0xff]
    %v520 = vld [vmem:[%s1 + $0xee0] sm:$0xff]
    %v521 = vld [vmem:[%s1 + $0xee8] sm:$0xff]
    %v522 = vld [vmem:[%s1 + $0xef0] sm:$0xff]
    %v523 = vld [vmem:[%s1 + $0xef8] sm:$0xff]
    %v524 = vld [vmem:[%s1 + $0xf00] sm:$0xff]
    %v525 = vld [vmem:[%s1 + $0xf08] sm:$0xff]
    %v526 = vld [vmem:[%s1 + $0xf10] sm:$0xff]
    %v527 = vld [vmem:[%s1 + $0xf18] sm:$0xff]
    %v528 = vld [vmem:[%s1 + $0xf20] sm:$0xff]
    %v529 = vld [vmem:[%s1 + $0xf28] sm:$0xff]
    %v530 = vld [vmem:[%s1 + $0xf30] sm:$0xff]
    %v531 = vld [vmem:[%s1 + $0xf38] sm:$0xff]
    %v532 = vld [vmem:[%s1 + $0xf40] sm:$0xff]
    %v533 = vld [vmem:[%s1 + $0xf48] sm:$0xff]
    %v534 = vld [vmem:[%s1 + $0xf50] sm:$0xff]
    %v535 = vld [vmem:[%s1 + $0xf58] sm:$0xff]
    %v536 = vld [vmem:[%s1 + $0xf60] sm:$0xff]
    %v537 = vld [vmem:[%s1 + $0xf68] sm:$0xff]
    %v538 = vld [vmem:[%s1 + $0xf70] sm:$0xff]
    %v539 = vld [vmem:[%s1 + $0xf78] sm:$0xff]
    %v540 = vld [vmem:[%s1 + $0xf80] sm:$0xff]
    %v541 = vld [vmem:[%s1 + $0xf88] sm:$0xff]
    %v542 = vld [vmem:[%s1 + $0xf90] sm:$0xff]
    %v543 = vld [vmem:[%s1 + $0xf98] sm:$0xff]
    %v544 = vld [vmem:[%s1 + $0xfa0] sm:$0xff]
    %v545 = vld [vmem:[%s1 + $0xfa8] sm:$0xff]
    %v546 = vld [vmem:[%s1 + $0xfb0] sm:$0xff]
    %v547 = vld [vmem:[%s1 + $0xfb8] sm:$0xff]
    %v548 = vld [vmem:[%s1 + $0xfc0] sm:$0xff]
    %v549 = vld [vmem:[%s1 + $0xfc8] sm:$0xff]
    %v550 = vld [vmem:[%s1 + $0xfd0] sm:$0xff]
    %v551 = vld [vmem:[%s1 + $0xfd8] sm:$0xff]
    %v552 = vld [vmem:[%s1 + $0xfe0] sm:$0xff]
    %v553 = vld [vmem:[%s1 + $0xfe8] sm:$0xff]
    %v554 = vld [vmem:[%s1 + $0xff0] sm:$0xff]
    %v555 = vld [vmem:[%s1 + $0xff8] sm:$0xff]
    %v556 = vld [vmem:[%s1 + $0x1000] sm:$0xff]
    %v557 = vld [vmem:[%s1 + $0x1008] sm:$0xff]
    %v558 = vld [vmem:[%s1 + $0x1010] sm:$0xff]
    %v559 = vld [vmem:[%s1 + $0x1018] sm:$0xff]
    %v560 = vld [vmem:[%s1 + $0x1020] sm:$0xff]
    %v561 = vld [vmem:[%s1 + $0x1028] sm:$0xff]
    %v562 = vld [vmem:[%s1 + $0x1030] sm:$0xff]
    %v563 = vld [vmem:[%s1 + $0x1038] sm:$0xff]
    %v564 = vld [vmem:[%s1 + $0x1040] sm:$0xff]
    %v565 = vld [vmem:[%s1 + $0x1048] sm:$0xff]
    %v566 = vld [vmem:[%s1 + $0x1050] sm:$0xff]
    %v567 = vld [vmem:[%s1 + $0x1058] sm:$0xff]
    %v568 = vld [vmem:[%s1 + $0x1060] sm:$0xff]
    %v569 = vld [vmem:[%s1 + $0x1068] sm:$0xff]
    %v570 = vld [vmem:[%s1 + $0x1070] sm:$0xff]
    %v571 = vld [vmem:[%s1 + $0x1078] sm:$0xff]
    %v572 = vld [vmem:[%s1 + $0x1080] sm:$0xff]
    %v573 = vld [vmem:[%s1 + $0x1088] sm:$0xff]
    %v574 = vld [vmem:[%s1 + $0x1090] sm:$0xff]
    %v575 = vld [vmem:[%s1 + $0x1098] sm:$0xff]
    %v576 = vld [vmem:[%s1 + $0x10a0] sm:$0xff]
    %v577 = vld [vmem:[%s1 + $0x10a8] sm:$0xff]
    %v578 = vld [vmem:[%s1 + $0x10b0] sm:$0xff]
    %v579 = vld [vmem:[%s1 + $0x10b8] sm:$0xff]
    %v580 = vld [vmem:[%s1 + $0x10c0] sm:$0xff]
    %v581 = vld [vmem:[%s1 + $0x10c8] sm:$0xff]
    %v582 = vld [vmem:[%s1 + $0x10d0] sm:$0xff]
    %v583 = vld [vmem:[%s1 + $0x10d8] sm:$0xff]
    %v584 = vld [vmem:[%s1 + $0x10e0] sm:$0xff]
    %v585 = vld [vmem:[%s1 + $0x10e8] sm:$0xff]
    %v586 = vld [vmem:[%s1 + $0x10f0] sm:$0xff]
    %v587 = vld [vmem:[%s1 + $0x10f8] sm:$0xff]
    %v588 = vld [vmem:[%s1 + $0x1100] sm:$0xff]
    %v589 = vld [vmem:[%s1 + $0x1108] sm:$0xff]
    %v590 = vld [vmem:[%s1 + $0x1110] sm:$0xff]
    %v591 = vld [vmem:[%s1 + $0x1118] sm:$0xff]
    %v592 = vld [vmem:[%s1 + $0x1120] sm:$0xff]
    %v593 = vld [vmem:[%s1 + $0x1128] sm:$0xff]
    %v594 = vld [vmem:[%s1 + $0x1130] sm:$0xff]
    %v595 = vld [vmem:[%s1 + $0x1138] sm:$0xff]
    %v596 = vld [vmem:[%s1 + $0x1140] sm:$0xff]
    %v597 = vld [vmem:[%s1 + $0x1148] sm:$0xff]
    %v598 = vld [vmem:[%s1 + $0x1150] sm:$0xff]
    %v599 = vld [vmem:[%s1 + $0x1158] sm:$0xff]
    %v600 = vld [vmem:[%s1 + $0x1160] sm:$0xff]
    %v601 = vld [vmem:[%s1 + $0x1168] sm:$0xff]
    %v602 = vld [vmem:[%s1 + $0x1170] sm:$0xff]
    %v603 = vld [vmem:[%s1 + $0x1178] sm:$0xff]
    %v604 = vld [vmem:[%s1 + $0x1180] sm:$0xff]
    %v605 = vld [vmem:[%s1 + $0x1188] sm:$0xff]
    %v606 = vld [vmem:[%s1 + $0x1190] sm:$0xff]
    %v607 = vld [vmem:[%s1 + $0x1198] sm:$0xff]
    %v608 = vld [vmem:[%s1 + $0x11a0] sm:$0xff]
    %v609 = vld [vmem:[%s1 + $0x11a8] sm:$0xff]
    %v610 = vld [vmem:[%s1 + $0x11b0] sm:$0xff]
    %v611 = vld [vmem:[%s1 + $0x11b8] sm:$0xff]
    %v612 = vld [vmem:[%s1 + $0x11c0] sm:$0xff]
    %v613 = vld [vmem:[%s1 + $0x11c8] sm:$0xff]
    %v614 = vld [vmem:[%s1 + $0x11d0] sm:$0xff]
    %v615 = vld [vmem:[%s1 + $0x11d8] sm:$0xff]
    %v616 = vld [vmem:[%s1 + $0x11e0] sm:$0xff]
    %v617 = vld [vmem:[%s1 + $0x11e8] sm:$0xff]
    %v618 = vld [vmem:[%s1 + $0x11f0] sm:$0xff]
    %v619 = vld [vmem:[%s1 + $0x11f8] sm:$0xff]
    %v620 = vld [vmem:[%s1 + $0x1200] sm:$0xff]
    %v621 = vld [vmem:[%s1 + $0x1208] sm:$0xff]
    %v622 = vld [vmem:[%s1 + $0x1210] sm:$0xff]
    %v623 = vld [vmem:[%s1 + $0x1218] sm:$0xff]
    %v624 = vld [vmem:[%s1 + $0x1220] sm:$0xff]
    %v625 = vld [vmem:[%s1 + $0x1228] sm:$0xff]
    %v626 = vld [vmem:[%s1 + $0x1230] sm:$0xff]
    %v627 = vld [vmem:[%s1 + $0x1238] sm:$0xff]
    %v628 = vld [vmem:[%s1 + $0x1240] sm:$0xff]
    %v629 = vld [vmem:[%s1 + $0x1248] sm:$0xff]
    %v630 = vld [vmem:[%s1 + $0x1250] sm:$0xff]
    %v631 = vld [vmem:[%s1 + $0x1258] sm:$0xff]
    %v632 = vld [vmem:[%s1 + $0x1260] sm:$0xff]
    %v633 = vld [vmem:[%s1 + $0x1268] sm:$0xff]
    %v634 = vld [vmem:[%s1 + $0x1270] sm:$0xff]
    %v635 = vld [vmem:[%s1 + $0x1278] sm:$0xff]
    %v636 = vld [vmem:[%s1 + $0x1280] sm:$0xff]
    %v637 = vld [vmem:[%s1 + $0x1288] sm:$0xff]
    %v638 = vld [vmem:[%s1 + $0x1290] sm:$0xff]
    %v639 = vld [vmem:[%s1 + $0x1298] sm:$0xff]
    %v640 = vld [vmem:[%s1 + $0x12a0] sm:$0xff]
    %v641 = vld [vmem:[%s1 + $0x12a8] sm:$0xff]
    %v642 = vld [vmem:[%s1 + $0x12b0] sm:$0xff]
    %v643 = vld [vmem:[%s1 + $0x12b8] sm:$0xff]
    %v644 = vld [vmem:[%s1 + $0x12c0] sm:$0xff]
    %v645 = vld [vmem:[%s1 + $0x12c8] sm:$0xff]
    %v646 = vld [vmem:[%s1 + $0x12d0] sm:$0xff]
    %v647 = vld [vmem:[%s1 + $0x12d8] sm:$0xff]
    %v648 = vld [vmem:[%s1 + $0x12e0] sm:$0xff]
    %v649 = vld [vmem:[%s1 + $0x12e8] sm:$0xff]
    %v650 = vld [vmem:[%s1 + $0x12f0] sm:$0xff]
    %v651 = vld [vmem:[%s1 + $0x12f8] sm:$0xff]
    %v652 = vld [vmem:[%s1 + $0x1300] sm:$0xff]
    %v653 = vld [vmem:[%s1 + $0x1308] sm:$0xff]
    %v654 = vld [vmem:[%s1 + $0x1310] sm:$0xff]
    %v655 = vld [vmem:[%s1 + $0x1318] sm:$0xff]
    %v656 = vld [vmem:[%s1 + $0x1320] sm:$0xff]
    %v657 = vld [vmem:[%s1 + $0x1328] sm:$0xff]
    %v658 = vld [vmem:[%s1 + $0x1330] sm:$0xff]
    %v659 = vld [vmem:[%s1 + $0x1338] sm:$0xff]
    %v660 = vld [vmem:[%s1 + $0x1340] sm:$0xff]
    %v661 = vld [vmem:[%s1 + $0x1348] sm:$0xff]
    %v662 = vld [vmem:[%s1 + $0x1350] sm:$0xff]
    %v663 = vld [vmem:[%s1 + $0x1358] sm:$0xff]
    %v664 = vld [vmem:[%s1 + $0x1360] sm:$0xff]
    %v665 = vld [vmem:[%s1 + $0x1368] sm:$0xff]
    %v666 = vld [vmem:[%s1 + $0x1370] sm:$0xff]
    %v667 = vld [vmem:[%s1 + $0x1378] sm:$0xff]
    %v668 = vld [vmem:[%s1 + $0x1380] sm:$0xff]
    %v669 = vld [vmem:[%s1 + $0x1388] sm:$0xff]
    %v670 = vld [vmem:[%s1 + $0x1390] sm:$0xff]
    %v671 = vld [vmem:[%s1 + $0x1398] sm:$0xff]
    %v672 = vld [vmem:[%s1 + $0x13a0] sm:$0xff]
    %v673 = vld [vmem:[%s1 + $0x13a8] sm:$0xff]
    %v674 = vld [vmem:[%s1 + $0x13b0] sm:$0xff]
    %v675 = vld [vmem:[%s1 + $0x13b8] sm:$0xff]
    %v676 = vld [vmem:[%s1 + $0x13c0] sm:$0xff]
    %v677 = vld [vmem:[%s1 + $0x13c8] sm:$0xff]
    %v678 = vld [vmem:[%s1 + $0x13d0] sm:$0xff]
    %v679 = vld [vmem:[%s1 + $0x13d8] sm:$0xff]
    %v680 = vld [vmem:[%s1 + $0x13e0] sm:$0xff]
    %v681 = vld [vmem:[%s1 + $0x13e8] sm:$0xff]
    %v682 = vld [vmem:[%s1 + $0x13f0] sm:$0xff]
    %v683 = vld [vmem:[%s1 + $0x13f8] sm:$0xff]
    %v684 = vld [vmem:[%s1 + $0x1400] sm:$0xff]
    %v685 = vld [vmem:[%s1 + $0x1408] sm:$0xff]
    %v686 = vld [vmem:[%s1 + $0x1410] sm:$0xff]
    %v687 = vld [vmem:[%s1 + $0x1418] sm:$0xff]
    %v688 = vld [vmem:[%s1 + $0x1420] sm:$0xff]
    %v689 = vld [vmem:[%s1 + $0x1428] sm:$0xff]
    %v690 = vld [vmem:[%s1 + $0x1430] sm:$0xff]
    %v691 = vld [vmem:[%s1 + $0x1438] sm:$0xff]
    %v692 = vld [vmem:[%s1 + $0x1440] sm:$0xff]
    %v693 = vld [vmem:[%s1 + $0x1448] sm:$0xff]
    %v694 = vld [vmem:[%s1 + $0x1450] sm:$0xff]
    %v695 = vld [vmem:[%s1 + $0x1458] sm:$0xff]
    %v696 = vld [vmem:[%s1 + $0x1460] sm:$0xff]
    %v697 = vld [vmem:[%s1 + $0x1468] sm:$0xff]
    %v698 = vld [vmem:[%s1 + $0x1470] sm:$0xff]
    %v699 = vld [vmem:[%s1 + $0x1478] sm:$0xff]
    %v700 = vld [vmem:[%s1 + $0x1480] sm:$0xff]
    %v701 = vld [vmem:[%s1 + $0x1488] sm:$0xff]
    %v702 = vld [vmem:[%s1 + $0x1490] sm:$0xff]
    %v703 = vld [vmem:[%s1 + $0x1498] sm:$0xff]
    %v704 = vld [vmem:[%s1 + $0x14a0] sm:$0xff]
    %v705 = vld [vmem:[%s1 + $0x14a8] sm:$0xff]
    %v706 = vld [vmem:[%s1 + $0x14b0] sm:$0xff]
    %v707 = vld [vmem:[%s1 + $0x14b8] sm:$0xff]
    %v708 = vld [vmem:[%s1 + $0x14c0] sm:$0xff]
    %v709 = vld [vmem:[%s1 + $0x14c8] sm:$0xff]
    %v710 = vld [vmem:[%s1 + $0x14d0] sm:$0xff]
    %v711 = vld [vmem:[%s1 + $0x14d8] sm:$0xff]
    %v712 = vld [vmem:[%s1 + $0x14e0] sm:$0xff]
    %v713 = vld [vmem:[%s1 + $0x14e8] sm:$0xff]
    %v714 = vld [vmem:[%s1 + $0x14f0] sm:$0xff]
    %v715 = vld [vmem:[%s1 + $0x14f8] sm:$0xff]
    %v716 = vld [vmem:[%s1 + $0x1500] sm:$0xff]
    %v717 = vld [vmem:[%s1 + $0x1508] sm:$0xff]
    %v718 = vld [vmem:[%s1 + $0x1510] sm:$0xff]
    %v719 = vld [vmem:[%s1 + $0x1518] sm:$0xff]
    %v720 = vld [vmem:[%s1 + $0x1520] sm:$0xff]
    %v721 = vld [vmem:[%s1 + $0x1528] sm:$0xff]
    %v722 = vld [vmem:[%s1 + $0x1530] sm:$0xff]
    %v723 = vld [vmem:[%s1 + $0x1538] sm:$0xff]
    %v724 = vld [vmem:[%s1 + $0x1540] sm:$0xff]
    %v725 = vld [vmem:[%s1 + $0x1548] sm:$0xff]
    %v726 = vld [vmem:[%s1 + $0x1550] sm:$0xff]
    %v727 = vld [vmem:[%s1 + $0x1558] sm:$0xff]
    %v728 = vld [vmem:[%s1 + $0x1560] sm:$0xff]
    %v729 = vld [vmem:[%s1 + $0x1568] sm:$0xff]
    %v730 = vld [vmem:[%s1 + $0x1570] sm:$0xff]
    %v731 = vld [vmem:[%s1 + $0x1578] sm:$0xff]
    %v732 = vld [vmem:[%s1 + $0x1580] sm:$0xff]
    %v733 = vld [vmem:[%s1 + $0x1588] sm:$0xff]
    %v734 = vld [vmem:[%s1 + $0x1590] sm:$0xff]
    %v735 = vld [vmem:[%s1 + $0x1598] sm:$0xff]
    %v736 = vld [vmem:[%s1 + $0x15a0] sm:$0xff]
    %v737 = vld [vmem:[%s1 + $0x15a8] sm:$0xff]
    %v738 = vld [vmem:[%s1 + $0x15b0] sm:$0xff]
    %v739 = vld [vmem:[%s1 + $0x15b8] sm:$0xff]
    %v740 = vld [vmem:[%s1 + $0x15c0] sm:$0xff]
    %v741 = vld [vmem:[%s1 + $0x15c8] sm:$0xff]
    %v742 = vld [vmem:[%s1 + $0x15d0] sm:$0xff]
    %v743 = vld [vmem:[%s1 + $0x15d8] sm:$0xff]
    %v744 = vld [vmem:[%s1 + $0x15e0] sm:$0xff]
    %v745 = vld [vmem:[%s1 + $0x15e8] sm:$0xff]
    %v746 = vld [vmem:[%s1 + $0x15f0] sm:$0xff]
    %v747 = vld [vmem:[%s1 + $0x15f8] sm:$0xff]
    %v748 = vld [vmem:[%s1 + $0x1600] sm:$0xff]
    %v749 = vld [vmem:[%s1 + $0x1608] sm:$0xff]
    %v750 = vld [vmem:[%s1 + $0x1610] sm:$0xff]
    %v751 = vld [vmem:[%s1 + $0x1618] sm:$0xff]
    %v752 = vld [vmem:[%s1 + $0x1620] sm:$0xff]
    %v753 = vld [vmem:[%s1 + $0x1628] sm:$0xff]
    %v754 = vld [vmem:[%s1 + $0x1630] sm:$0xff]
    %v755 = vld [vmem:[%s1 + $0x1638] sm:$0xff]
    %v756 = vld [vmem:[%s1 + $0x1640] sm:$0xff]
    %v757 = vld [vmem:[%s1 + $0x1648] sm:$0xff]
    %v758 = vld [vmem:[%s1 + $0x1650] sm:$0xff]
    %v759 = vld [vmem:[%s1 + $0x1658] sm:$0xff]
    %v760 = vld [vmem:[%s1 + $0x1660] sm:$0xff]
    %v761 = vld [vmem:[%s1 + $0x1668] sm:$0xff]
    %v762 = vld [vmem:[%s1 + $0x1670] sm:$0xff]
    %v763 = vld [vmem:[%s1 + $0x1678] sm:$0xff]
    %v764 = vld [vmem:[%s1 + $0x1680] sm:$0xff]
    %v765 = vld [vmem:[%s1 + $0x1688] sm:$0xff]
    %v766 = vld [vmem:[%s1 + $0x1690] sm:$0xff]
    %v767 = vld [vmem:[%s1 + $0x1698] sm:$0xff]
    %v768 = vld [vmem:[%s1 + $0x16a0] sm:$0xff]
    %v769 = vld [vmem:[%s1 + $0x16a8] sm:$0xff]
    %v770 = vld [vmem:[%s1 + $0x16b0] sm:$0xff]
    %v771 = vld [vmem:[%s1 + $0x16b8] sm:$0xff]
    %v772 = vld [vmem:[%s1 + $0x16c0] sm:$0xff]
    %v773 = vld [vmem:[%s1 + $0x16c8] sm:$0xff]
    %v774 = vld [vmem:[%s1 + $0x16d0] sm:$0xff]
    %v775 = vld [vmem:[%s1 + $0x16d8] sm:$0xff]
    %v776 = vld [vmem:[%s1 + $0x16e0] sm:$0xff]
    %v777 = vld [vmem:[%s1 + $0x16e8] sm:$0xff]
    %v778 = vld [vmem:[%s1 + $0x16f0] sm:$0xff]
    %v779 = vld [vmem:[%s1 + $0x16f8] sm:$0xff]
    %v780 = vld [vmem:[%s1 + $0x1700] sm:$0xff]
    %v781 = vld [vmem:[%s1 + $0x1708] sm:$0xff]
    %v782 = vld [vmem:[%s1 + $0x1710] sm:$0xff]
    %v783 = vld [vmem:[%s1 + $0x1718] sm:$0xff]
    %v784 = vld [vmem:[%s1 + $0x1720] sm:$0xff]
    %v785 = vld [vmem:[%s1 + $0x1728] sm:$0xff]
    %v786 = vld [vmem:[%s1 + $0x1730] sm:$0xff]
    %v787 = vld [vmem:[%s1 + $0x1738] sm:$0xff]
    %v788 = vld [vmem:[%s1 + $0x1740] sm:$0xff]
    %v789 = vld [vmem:[%s1 + $0x1748] sm:$0xff]
    %v790 = vld [vmem:[%s1 + $0x1750] sm:$0xff]
    %v791 = vld [vmem:[%s1 + $0x1758] sm:$0xff]
    %v792 = vld [vmem:[%s1 + $0x1760] sm:$0xff]
    %v793 = vld [vmem:[%s1 + $0x1768] sm:$0xff]
    %v794 = vld [vmem:[%s1 + $0x1770] sm:$0xff]
    %v795 = vld [vmem:[%s1 + $0x1778] sm:$0xff]
    %v796 = vld [vmem:[%s1 + $0x1780] sm:$0xff]
    %v797 = vld [vmem:[%s1 + $0x1788] sm:$0xff]
    %v798 = vld [vmem:[%s1 + $0x1790] sm:$0xff]
    %v799 = vld [vmem:[%s1 + $0x1798] sm:$0xff]
    %v800 = vld [vmem:[%s1 + $0x17a0] sm:$0xff]
    %v801 = vld [vmem:[%s1 + $0x17a8] sm:$0xff]
    %v802 = vld [vmem:[%s1 + $0x17b0] sm:$0xff]
    %v803 = vld [vmem:[%s1 + $0x17b8] sm:$0xff]
    %v804 = vld [vmem:[%s1 + $0x17c0] sm:$0xff]
    %v805 = vld [vmem:[%s1 + $0x17c8] sm:$0xff]
    %v806 = vld [vmem:[%s1 + $0x17d0] sm:$0xff]
    %v807 = vld [vmem:[%s1 + $0x17d8] sm:$0xff]
    %v808 = vld [vmem:[%s1 + $0x17e0] sm:$0xff]
    %v809 = vld [vmem:[%s1 + $0x17e8] sm:$0xff]
    %v810 = vld [vmem:[%s1 + $0x17f0] sm:$0xff]
    %v811 = vld [vmem:[%s1 + $0x17f8] sm:$0xff]
    %v812 = vld [vmem:[%s1 + $0x1800] sm:$0xff]
    %v813 = vld [vmem:[%s1 + $0x1808] sm:$0xff]
    %v814 = vld [vmem:[%s1 + $0x1810] sm:$0xff]
    %v815 = vld [vmem:[%s1 + $0x1818] sm:$0xff]
    %v816 = vld [vmem:[%s1 + $0x1820] sm:$0xff]
    %v817 = vld [vmem:[%s1 + $0x1828] sm:$0xff]
    %v818 = vld [vmem:[%s1 + $0x1830] sm:$0xff]
    %v819 = vld [vmem:[%s1 + $0x1838] sm:$0xff]
    %v820 = vld [vmem:[%s1 + $0x1840] sm:$0xff]
    %v821 = vld [vmem:[%s1 + $0x1848] sm:$0xff]
    %v822 = vld [vmem:[%s1 + $0x1850] sm:$0xff]
    %v823 = vld [vmem:[%s1 + $0x1858] sm:$0xff]
    %v824 = vld [vmem:[%s1 + $0x1860] sm:$0xff]
    %v825 = vld [vmem:[%s1 + $0x1868] sm:$0xff]
    %v826 = vld [vmem:[%s1 + $0x1870] sm:$0xff]
    %v827 = vld [vmem:[%s1 + $0x1878] sm:$0xff]
    %v828 = vld [vmem:[%s1 + $0x1880] sm:$0xff]
    %v829 = vld [vmem:[%s1 + $0x1888] sm:$0xff]
    %v830 = vld [vmem:[%s1 + $0x1890] sm:$0xff]
    %v831 = vld [vmem:[%s1 + $0x1898] sm:$0xff]
    %v832 = vld [vmem:[%s1 + $0x18a0] sm:$0xff]
    %v833 = vld [vmem:[%s1 + $0x18a8] sm:$0xff]
    %v834 = vld [vmem:[%s1 + $0x18b0] sm:$0xff]
    %v835 = vld [vmem:[%s1 + $0x18b8] sm:$0xff]
    %v836 = vld [vmem:[%s1 + $0x18c0] sm:$0xff]
    %v837 = vld [vmem:[%s1 + $0x18c8] sm:$0xff]
    %v838 = vld [vmem:[%s1 + $0x18d0] sm:$0xff]
    %v839 = vld [vmem:[%s1 + $0x18d8] sm:$0xff]
    %v840 = vld [vmem:[%s1 + $0x18e0] sm:$0xff]
    %v841 = vld [vmem:[%s1 + $0x18e8] sm:$0xff]
    %v842 = vld [vmem:[%s1 + $0x18f0] sm:$0xff]
    %v843 = vld [vmem:[%s1 + $0x18f8] sm:$0xff]
    %v844 = vld [vmem:[%s1 + $0x1900] sm:$0xff]
    %v845 = vld [vmem:[%s1 + $0x1908] sm:$0xff]
    %v846 = vld [vmem:[%s1 + $0x1910] sm:$0xff]
    %v847 = vld [vmem:[%s1 + $0x1918] sm:$0xff]
    %v848 = vld [vmem:[%s1 + $0x1920] sm:$0xff]
    %v849 = vld [vmem:[%s1 + $0x1928] sm:$0xff]
    %v850 = vld [vmem:[%s1 + $0x1930] sm:$0xff]
    %v851 = vld [vmem:[%s1 + $0x1938] sm:$0xff]
    %v852 = vld [vmem:[%s1 + $0x1940] sm:$0xff]
    %v853 = vld [vmem:[%s1 + $0x1948] sm:$0xff]
    %v854 = vld [vmem:[%s1 + $0x1950] sm:$0xff]
    %v855 = vld [vmem:[%s1 + $0x1958] sm:$0xff]
    %v856 = vld [vmem:[%s1 + $0x1960] sm:$0xff]
    %v857 = vld [vmem:[%s1 + $0x1968] sm:$0xff]
    %v858 = vld [vmem:[%s1 + $0x1970] sm:$0xff]
    %v859 = vld [vmem:[%s1 + $0x1978] sm:$0xff]
    %v860 = vld [vmem:[%s1 + $0x1980] sm:$0xff]
    %v861 = vld [vmem:[%s1 + $0x1988] sm:$0xff]
    %v862 = vld [vmem:[%s1 + $0x1990] sm:$0xff]
    %v863 = vld [vmem:[%s1 + $0x1998] sm:$0xff]
    %v864 = vld [vmem:[%s1 + $0x19a0] sm:$0xff]
    %v865 = vld [vmem:[%s1 + $0x19a8] sm:$0xff]
    %v866 = vld [vmem:[%s1 + $0x19b0] sm:$0xff]
    %v867 = vld [vmem:[%s1 + $0x19b8] sm:$0xff]
    %v868 = vld [vmem:[%s1 + $0x19c0] sm:$0xff]
    %v869 = vld [vmem:[%s1 + $0x19c8] sm:$0xff]
    %v870 = vld [vmem:[%s1 + $0x19d0] sm:$0xff]
    %v871 = vld [vmem:[%s1 + $0x19d8] sm:$0xff]
    %v872 = vld [vmem:[%s1 + $0x19e0] sm:$0xff]
    %v873 = vld [vmem:[%s1 + $0x19e8] sm:$0xff]
    %v874 = vld [vmem:[%s1 + $0x19f0] sm:$0xff]
    %v875 = vld [vmem:[%s1 + $0x19f8] sm:$0xff]
    %v876 = vld [vmem:[%s1 + $0x1a00] sm:$0xff]
    %v877 = vld [vmem:[%s1 + $0x1a08] sm:$0xff]
    %v878 = vld [vmem:[%s1 + $0x1a10] sm:$0xff]
    %v879 = vld [vmem:[%s1 + $0x1a18] sm:$0xff]
    %v880 = vld [vmem:[%s1 + $0x1a20] sm:$0xff]
    %v881 = vld [vmem:[%s1 + $0x1a28] sm:$0xff]
    %v882 = vld [vmem:[%s1 + $0x1a30] sm:$0xff]
    %v883 = vld [vmem:[%s1 + $0x1a38] sm:$0xff]
    %v884 = vld [vmem:[%s1 + $0x1a40] sm:$0xff]
    %v885 = vld [vmem:[%s1 + $0x1a48] sm:$0xff]
    %v886 = vld [vmem:[%s1 + $0x1a50] sm:$0xff]
    %v887 = vld [vmem:[%s1 + $0x1a58] sm:$0xff]
    %v888 = vld [vmem:[%s1 + $0x1a60] sm:$0xff]
    %v889 = vld [vmem:[%s1 + $0x1a68] sm:$0xff]
    %v890 = vld [vmem:[%s1 + $0x1a70] sm:$0xff]
    %v891 = vld [vmem:[%s1 + $0x1a78] sm:$0xff]
    %v892 = vld [vmem:[%s1 + $0x1a80] sm:$0xff]
    %v893 = vld [vmem:[%s1 + $0x1a88] sm:$0xff]
    %v894 = vld [vmem:[%s1 + $0x1a90] sm:$0xff]
    %v895 = vld [vmem:[%s1 + $0x1a98] sm:$0xff]
    %v896 = vld [vmem:[%s1 + $0x1aa0] sm:$0xff]
    %v897 = vld [vmem:[%s1 + $0x1aa8] sm:$0xff]
    %v898 = vld [vmem:[%s1 + $0x1ab0] sm:$0xff]
    %v899 = vld [vmem:[%s1 + $0x1ab8] sm:$0xff]
    %v900 = vld [vmem:[%s1 + $0x1ac0] sm:$0xff]
    %v901 = vld [vmem:[%s1 + $0x1ac8] sm:$0xff]
    %v902 = vld [vmem:[%s1 + $0x1ad0] sm:$0xff]
    %v903 = vld [vmem:[%s1 + $0x1ad8] sm:$0xff]
    %v904 = vld [vmem:[%s1 + $0x1ae0] sm:$0xff]
    %v905 = vld [vmem:[%s1 + $0x1ae8] sm:$0xff]
    %v906 = vld [vmem:[%s1 + $0x1af0] sm:$0xff]
    %v907 = vld [vmem:[%s1 + $0x1af8] sm:$0xff]
    %v908 = vld [vmem:[%s1 + $0x1b00] sm:$0xff]
    %v909 = vld [vmem:[%s1 + $0x1b08] sm:$0xff]
    %v910 = vld [vmem:[%s1 + $0x1b10] sm:$0xff]
    %v911 = vld [vmem:[%s1 + $0x1b18] sm:$0xff]
    %v912 = vld [vmem:[%s1 + $0x1b20] sm:$0xff]
    %v913 = vld [vmem:[%s1 + $0x1b28] sm:$0xff]
    %v914 = vld [vmem:[%s1 + $0x1b30] sm:$0xff]
    %v915 = vld [vmem:[%s1 + $0x1b38] sm:$0xff]
    %v916 = vld [vmem:[%s1 + $0x1b40] sm:$0xff]
    %v917 = vld [vmem:[%s1 + $0x1b48] sm:$0xff]
    %v918 = vld [vmem:[%s1 + $0x1b50] sm:$0xff]
    %v919 = vld [vmem:[%s1 + $0x1b58] sm:$0xff]
    %v920 = vld [vmem:[%s1 + $0x1b60] sm:$0xff]
    %v921 = vld [vmem:[%s1 + $0x1b68] sm:$0xff]
    %v922 = vld [vmem:[%s1 + $0x1b70] sm:$0xff]
    %v923 = vld [vmem:[%s1 + $0x1b78] sm:$0xff]
    %v924 = vld [vmem:[%s1 + $0x1b80] sm:$0xff]
    %v925 = vld [vmem:[%s1 + $0x1b88] sm:$0xff]
    %v926 = vld [vmem:[%s1 + $0x1b90] sm:$0xff]
    %v927 = vld [vmem:[%s1 + $0x1b98] sm:$0xff]
    %v928 = vld [vmem:[%s1 + $0x1ba0] sm:$0xff]
    %v929 = vld [vmem:[%s1 + $0x1ba8] sm:$0xff]
    %v930 = vld [vmem:[%s1 + $0x1bb0] sm:$0xff]
    %v931 = vld [vmem:[%s1 + $0x1bb8] sm:$0xff]
    %v932 = vld [vmem:[%s1 + $0x1bc0] sm:$0xff]
    %v933 = vld [vmem:[%s1 + $0x1bc8] sm:$0xff]
    %v934 = vld [vmem:[%s1 + $0x1bd0] sm:$0xff]
    %v935 = vld [vmem:[%s1 + $0x1bd8] sm:$0xff]
    %v936 = vld [vmem:[%s1 + $0x1be0] sm:$0xff]
    %v937 = vld [vmem:[%s1 + $0x1be8] sm:$0xff]
    %v938 = vld [vmem:[%s1 + $0x1bf0] sm:$0xff]
    %v939 = vld [vmem:[%s1 + $0x1bf8] sm:$0xff]
    %v940 = vld [vmem:[%s1 + $0x1c00] sm:$0xff]
    %v941 = vld [vmem:[%s1 + $0x1c08] sm:$0xff]
    %v942 = vld [vmem:[%s1 + $0x1c10] sm:$0xff]
    %v943 = vld [vmem:[%s1 + $0x1c18] sm:$0xff]
    %v944 = vld [vmem:[%s1 + $0x1c20] sm:$0xff]
    %v945 = vld [vmem:[%s1 + $0x1c28] sm:$0xff]
    %v946 = vld [vmem:[%s1 + $0x1c30] sm:$0xff]
    %v947 = vld [vmem:[%s1 + $0x1c38] sm:$0xff]
    %v948 = vld [vmem:[%s1 + $0x1c40] sm:$0xff]
    %v949 = vld [vmem:[%s1 + $0x1c48] sm:$0xff]
    %v950 = vld [vmem:[%s1 + $0x1c50] sm:$0xff]
    %v951 = vld [vmem:[%s1 + $0x1c58] sm:$0xff]
    %v952 = vld [vmem:[%s1 + $0x1c60] sm:$0xff]
    %v953 = vld [vmem:[%s1 + $0x1c68] sm:$0xff]
    %v954 = vld [vmem:[%s1 + $0x1c70] sm:$0xff]
    %v955 = vld [vmem:[%s1 + $0x1c78] sm:$0xff]
    %v956 = vld [vmem:[%s1 + $0x1c80] sm:$0xff]
    %v957 = vld [vmem:[%s1 + $0x1c88] sm:$0xff]
    %v958 = vld [vmem:[%s1 + $0x1c90] sm:$0xff]
    %v959 = vld [vmem:[%s1 + $0x1c98] sm:$0xff]
    %v960 = vld [vmem:[%s1 + $0x1ca0] sm:$0xff]
    %v961 = vld [vmem:[%s1 + $0x1ca8] sm:$0xff]
    %v962 = vld [vmem:[%s1 + $0x1cb0] sm:$0xff]
    %v963 = vld [vmem:[%s1 + $0x1cb8] sm:$0xff]
    %v964 = vld [vmem:[%s1 + $0x1cc0] sm:$0xff]
    %v965 = vld [vmem:[%s1 + $0x1cc8] sm:$0xff]
    %v966 = vld [vmem:[%s1 + $0x1cd0] sm:$0xff]
    %v967 = vld [vmem:[%s1 + $0x1cd8] sm:$0xff]
    %v968 = vld [vmem:[%s1 + $0x1ce0] sm:$0xff]
    %v969 = vld [vmem:[%s1 + $0x1ce8] sm:$0xff]
    %v970 = vld [vmem:[%s1 + $0x1cf0] sm:$0xff]
    %v971 = vld [vmem:[%s1 + $0x1cf8] sm:$0xff]
    %v972 = vld [vmem:[%s1 + $0x1d00] sm:$0xff]
    %v973 = vld [vmem:[%s1 + $0x1d08] sm:$0xff]
    %v974 = vld [vmem:[%s1 + $0x1d10] sm:$0xff]
    %v975 = vld [vmem:[%s1 + $0x1d18] sm:$0xff]
    %v976 = vld [vmem:[%s1 + $0x1d20] sm:$0xff]
    %v977 = vld [vmem:[%s1 + $0x1d28] sm:$0xff]
    %v978 = vld [vmem:[%s1 + $0x1d30] sm:$0xff]
    %v979 = vld [vmem:[%s1 + $0x1d38] sm:$0xff]
    %v980 = vld [vmem:[%s1 + $0x1d40] sm:$0xff]
    %v981 = vld [vmem:[%s1 + $0x1d48] sm:$0xff]
    %v982 = vld [vmem:[%s1 + $0x1d50] sm:$0xff]
    %v983 = vld [vmem:[%s1 + $0x1d58] sm:$0xff]
    %v984 = vld [vmem:[%s1 + $0x1d60] sm:$0xff]
    %v985 = vld [vmem:[%s1 + $0x1d68] sm:$0xff]
    %v986 = vld [vmem:[%s1 + $0x1d70] sm:$0xff]
    %v987 = vld [vmem:[%s1 + $0x1d78] sm:$0xff]
    %v988 = vld [vmem:[%s1 + $0x1d80] sm:$0xff]
    %v989 = vld [vmem:[%s1 + $0x1d88] sm:$0xff]
    %v990 = vld [vmem:[%s1 + $0x1d90] sm:$0xff]
    %v991 = vld [vmem:[%s1 + $0x1d98] sm:$0xff]
    %v992 = vld [vmem:[%s1 + $0x1da0] sm:$0xff]
    %v993 = vld [vmem:[%s1 + $0x1da8] sm:$0xff]
    %v994 = vld [vmem:[%s1 + $0x1db0] sm:$0xff]
    %v995 = vld [vmem:[%s1 + $0x1db8] sm:$0xff]
    %v996 = vld [vmem:[%s1 + $0x1dc0] sm:$0xff]
    %v997 = vld [vmem:[%s1 + $0x1dc8] sm:$0xff]
    %v998 = vld [vmem:[%s1 + $0x1dd0] sm:$0xff]
    %v999 = vld [vmem:[%s1 + $0x1dd8] sm:$0xff]
    %v1000 = vld [vmem:[%s1 + $0x1de0] sm:$0xff]
    %v1001 = vld [vmem:[%s1 + $0x1de8] sm:$0xff]
    %v1002 = vld [vmem:[%s1 + $0x1df0] sm:$0xff]
    %v1003 = vld [vmem:[%s1 + $0x1df8] sm:$0xff]
    %v1004 = vld [vmem:[%s1 + $0x1e00] sm:$0xff]
    %v1005 = vld [vmem:[%s1 + $0x1e08] sm:$0xff]
    %v1006 = vld [vmem:[%s1 + $0x1e10] sm:$0xff]
    %v1007 = vld [vmem:[%s1 + $0x1e18] sm:$0xff]
    %v1008 = vld [vmem:[%s1 + $0x1e20] sm:$0xff]
    %v1009 = vld [vmem:[%s1 + $0x1e28] sm:$0xff]
    %v1010 = vld [vmem:[%s1 + $0x1e30] sm:$0xff]
    %v1011 = vld [vmem:[%s1 + $0x1e38] sm:$0xff]
    %v1012 = vld [vmem:[%s1 + $0x1e40] sm:$0xff]
    %v1013 = vld [vmem:[%s1 + $0x1e48] sm:$0xff]
    %v1014 = vld [vmem:[%s1 + $0x1e50] sm:$0xff]
    %v1015 = vld [vmem:[%s1 + $0x1e58] sm:$0xff]
    %v1016 = vld [vmem:[%s1 + $0x1e60] sm:$0xff]
    %v1017 = vld [vmem:[%s1 + $0x1e68] sm:$0xff]
    %v1018 = vld [vmem:[%s1 + $0x1e70] sm:$0xff]
    %v1019 = vld [vmem:[%s1 + $0x1e78] sm:$0xff]
    %v1020 = vld [vmem:[%s1 + $0x1e80] sm:$0xff]
    %v1021 = vld [vmem:[%s1 + $0x1e88] sm:$0xff]
    %v1022 = vld [vmem:[%s1 + $0x1e90] sm:$0xff]
    %v1023 = vld [vmem:[%s1 + $0x1e98] sm:$0xff]
    %v1024 = vld [vmem:[%s1 + $0x1ea0] sm:$0xff]
    %v1025 = vld [vmem:[%s1 + $0x1ea8] sm:$0xff]
    %v1026 = vld [vmem:[%s1 + $0x1eb0] sm:$0xff]
    %v1027 = vld [vmem:[%s1 + $0x1eb8] sm:$0xff]
    %v1028 = vld [vmem:[%s1 + $0x1ec0] sm:$0xff]
    %v1029 = vld [vmem:[%s1 + $0x1ec8] sm:$0xff]
    %v1030 = vld [vmem:[%s1 + $0x1ed0] sm:$0xff]
    %v1031 = vld [vmem:[%s1 + $0x1ed8] sm:$0xff]
    %v1032 = vld [vmem:[%s1 + $0x1ee0] sm:$0xff]
    %v1033 = vld [vmem:[%s1 + $0x1ee8] sm:$0xff]
    %v1034 = vld [vmem:[%s1 + $0x1ef0] sm:$0xff]
    %v1035 = vld [vmem:[%s1 + $0x1ef8] sm:$0xff]
    %v1036 = vld [vmem:[%s1 + $0x1f00] sm:$0xff]
    %v1037 = vld [vmem:[%s1 + $0x1f08] sm:$0xff]
    %v1038 = vld [vmem:[%s1 + $0x1f10] sm:$0xff]
    %v1039 = vld [vmem:[%s1 + $0x1f18] sm:$0xff]
    %v1040 = vld [vmem:[%s1 + $0x1f20] sm:$0xff]
    %v1041 = vld [vmem:[%s1 + $0x1f28] sm:$0xff]
    %v1042 = vld [vmem:[%s1 + $0x1f30] sm:$0xff]
    %v1043 = vld [vmem:[%s1 + $0x1f38] sm:$0xff]
    %v1044 = vld [vmem:[%s1 + $0x1f40] sm:$0xff]
    %v1045 = vld [vmem:[%s1 + $0x1f48] sm:$0xff]
    %v1046 = vld [vmem:[%s1 + $0x1f50] sm:$0xff]
    %v1047 = vld [vmem:[%s1 + $0x1f58] sm:$0xff]
    %v1048 = vld [vmem:[%s1 + $0x1f60] sm:$0xff]
    %v1049 = vld [vmem:[%s1 + $0x1f68] sm:$0xff]
    %v1050 = vld [vmem:[%s1 + $0x1f70] sm:$0xff]
    %v1051 = vld [vmem:[%s1 + $0x1f78] sm:$0xff]
    %v1052 = vld [vmem:[%s1 + $0x1f80] sm:$0xff]
    %v1053 = vld [vmem:[%s1 + $0x1f88] sm:$0xff]
    %v1054 = vld [vmem:[%s1 + $0x1f90] sm:$0xff]
    %v1055 = vld [vmem:[%s1 + $0x1f98] sm:$0xff]
    %v1056 = vld [vmem:[%s1 + $0x1fa0] sm:$0xff]
    %v1057 = vld [vmem:[%s1 + $0x1fa8] sm:$0xff]
    %v1058 = vld [vmem:[%s1 + $0x1fb0] sm:$0xff]
    %v1059 = vld [vmem:[%s1 + $0x1fb8] sm:$0xff]
    %v1060 = vld [vmem:[%s1 + $0x1fc0] sm:$0xff]
    %v1061 = vld [vmem:[%s1 + $0x1fc8] sm:$0xff]
    %v1062 = vld [vmem:[%s1 + $0x1fd0] sm:$0xff]
    %v1063 = vld [vmem:[%s1 + $0x1fd8] sm:$0xff]
    %v1064 = vld [vmem:[%s1 + $0x1fe0] sm:$0xff]
    %v1065 = vld [vmem:[%s1 + $0x1fe8] sm:$0xff]
    %v1066 = vld [vmem:[%s1 + $0x1ff0] sm:$0xff]
    %v1067 = vld [vmem:[%s1 + $0x1ff8] sm:$0xff]
    %v1068 = vld [vmem:[%s1 + $0x2000] sm:$0xff]
    %v1069 = vld [vmem:[%s1 + $0x2008] sm:$0xff]
    %v1070 = vld [vmem:[%s1 + $0x2010] sm:$0xff]
    %v1071 = vld [vmem:[%s1 + $0x2018] sm:$0xff]
    %v1072 = vld [vmem:[%s1 + $0x2020] sm:$0xff]
    %v1073 = vld [vmem:[%s1 + $0x2028] sm:$0xff]
    %v1074 = vld [vmem:[%s1 + $0x2030] sm:$0xff]
    %v1075 = vld [vmem:[%s1 + $0x2038] sm:$0xff]
    %v1076 = vld [vmem:[%s1 + $0x2040] sm:$0xff]
    %v1077 = vld [vmem:[%s1 + $0x2048] sm:$0xff]
    %v1078 = vld [vmem:[%s1 + $0x2050] sm:$0xff]
    %v1079 = vld [vmem:[%s1 + $0x2058] sm:$0xff]
    %v1080 = vld [vmem:[%s1 + $0x2060] sm:$0xff]
    %v1081 = vld [vmem:[%s1 + $0x2068] sm:$0xff]
    %v1082 = vld [vmem:[%s1 + $0x2070] sm:$0xff]
    %v1083 = vld [vmem:[%s1 + $0x2078] sm:$0xff]
    %v1084 = vld [vmem:[%s1 + $0x2080] sm:$0xff]
    %v1085 = vld [vmem:[%s1 + $0x2088] sm:$0xff]
    %v1086 = vld [vmem:[%s1 + $0x2090] sm:$0xff]
    %v1087 = vld [vmem:[%s1 + $0x2098] sm:$0xff]
    %v1088 = vld [vmem:[%s1 + $0x20a0] sm:$0xff]
    %v1089 = vld [vmem:[%s1 + $0x20a8] sm:$0xff]
    %v1090 = vld [vmem:[%s1 + $0x20b0] sm:$0xff]
    %v1091 = vld [vmem:[%s1 + $0x20b8] sm:$0xff]
    %v1092 = vld [vmem:[%s1 + $0x20c0] sm:$0xff]
    %v1093 = vld [vmem:[%s1 + $0x20c8] sm:$0xff]
    %v1094 = vld [vmem:[%s1 + $0x20d0] sm:$0xff]
    %v1095 = vld [vmem:[%s1 + $0x20d8] sm:$0xff]
    %v1096 = vld [vmem:[%s1 + $0x20e0] sm:$0xff]
    %v1097 = vld [vmem:[%s1 + $0x20e8] sm:$0xff]
    %v1098 = vld [vmem:[%s1 + $0x20f0] sm:$0xff]
    %v1099 = vld [vmem:[%s1 + $0x20f8] sm:$0xff]
    %v1100 = vld [vmem:[%s1 + $0x2100] sm:$0xff]
    %v1101 = vld [vmem:[%s1 + $0x2108] sm:$0xff]
    %v1102 = vld [vmem:[%s1 + $0x2110] sm:$0xff]
    %v1103 = vld [vmem:[%s1 + $0x2118] sm:$0xff]
    %v1104 = vld [vmem:[%s1 + $0x2120] sm:$0xff]
    %v1105 = vld [vmem:[%s1 + $0x2128] sm:$0xff]
    %v1106 = vld [vmem:[%s1 + $0x2130] sm:$0xff]
    %v1107 = vld [vmem:[%s1 + $0x2138] sm:$0xff]
    %v1108 = vld [vmem:[%s1 + $0x2140] sm:$0xff]
    %v1109 = vld [vmem:[%s1 + $0x2148] sm:$0xff]
    %v1110 = vld [vmem:[%s1 + $0x2150] sm:$0xff]
    %v1111 = vld [vmem:[%s1 + $0x2158] sm:$0xff]
    %v1112 = vld [vmem:[%s1 + $0x2160] sm:$0xff]
    %v1113 = vld [vmem:[%s1 + $0x2168] sm:$0xff]
    %v1114 = vld [vmem:[%s1 + $0x2170] sm:$0xff]
    %v1115 = vld [vmem:[%s2] sm:$0x1]
    %v1117 = vperm.slane %v1115, 0
    %1136 = vst [vmem:[#allocation1] ss:$4 sm:$0xff] %v27
    %s1137 = scalar_lea.vmem [#allocation1], 32
    %1138 = vst [vmem:[%s1137] ss:$4 sm:$0xff] %v28
    %v1139 = vld.sshfl [vmem:[#allocation1] sm:$0xff pattern:$0x73625140]
    %v1140 = vld.sshfl [vmem:[#allocation1 + $0x8] sm:$0xff pattern:$0x73625140]
    %v1141 = vld.sshfl [vmem:[#allocation1 + $0x10] sm:$0xff pattern:$0x73625140]
    %v1142 = vld.sshfl [vmem:[#allocation1 + $0x18] sm:$0xff pattern:$0x73625140]
    %v1143 = vld.sshfl [vmem:[#allocation1 + $0x20] sm:$0xff pattern:$0x73625140]
    %v1144 = vld.sshfl [vmem:[#allocation1 + $0x28] sm:$0xff pattern:$0x73625140]
    %v1145 = vld.sshfl [vmem:[#allocation1 + $0x30] sm:$0xff pattern:$0x73625140]
    %v1146 = vld.sshfl [vmem:[#allocation1 + $0x38] sm:$0xff pattern:$0x73625140]
    %1147 = vst [vmem:[#allocation1] ss:$4 sm:$0xff] %v29
    %1148 = vst [vmem:[%s1137] ss:$4 sm:$0xff] %v30
    %v1149 = vld.sshfl [vmem:[#allocation1] sm:$0xff pattern:$0x73625140]
    %v1150 = vld.sshfl [vmem:[#allocation1 + $0x8] sm:$0xff pattern:$0x73625140]
    %v1151 = vld.sshfl [vmem:[#allocation1 + $0x10] sm:$0xff pattern:$0x73625140]
    %v1152 = vld.sshfl [vmem:[#allocation1 + $0x18] sm:$0xff pattern:$0x73625140]
    %v1153 = vld.sshfl [vmem:[#allocation1 + $0x20] sm:$0xff pattern:$0x73625140]
    %v1154 = vld.sshfl [vmem:[#allocation1 + $0x28] sm:$0xff pattern:$0x73625140]
    %v1155 = vld.sshfl [vmem:[#allocation1 + $0x30] sm:$0xff pattern:$0x73625140]
    %v1156 = vld.sshfl [vmem:[#allocation1 + $0x38] sm:$0xff pattern:$0x73625140]
    %1157 = vst [vmem:[#allocation1] ss:$4 sm:$0xff] %v31
    %1158 = vst [vmem:[%s1137] ss:$4 sm:$0xff] %v32
    %v1159 = vld.sshfl [vmem:[#allocation1] sm:$0xff pattern:$0x73625140]
    %v1160 = vld.sshfl [vmem:[#allocation1 + $0x8] sm:$0xff pattern:$0x73625140]
    %v1161 = vld.sshfl [vmem:[#allocation1 + $0x10] sm:$0xff pattern:$0x73625140]
    %v1162 = vld.sshfl [vmem:[#allocation1 + $0x18] sm:$0xff pattern:$0x73625140]
    %v1163 = vld.sshfl [vmem:[#allocation1 + $0x20] sm:$0xff pattern:$0x73625140]
    %v1164 = vld.sshfl [vmem:[#allocation1 + $0x28] sm:$0xff pattern:$0x73625140]
    %v1165 = vld.sshfl [vmem:[#allocation1 + $0x30] sm:$0xff pattern:$0x73625140]
    %v1166 = vld.sshfl [vmem:[#allocation1 + $0x38] sm:$0xff pattern:$0x73625140]
    %1167 = vst [vmem:[#allocation1] ss:$4 sm:$0xff] %v33
    %1168 = vst [vmem:[%s1137] ss:$4 sm:$0xff] %v34
    %v1169 = vld.sshfl [vmem:[#allocation1] sm:$0xff pattern:$0x73625140]
    %v1170 = vld.sshfl [vmem:[#allocation1 + $0x8] sm:$0xff pattern:$0x73625140]
    %v1171 = vld.sshfl [vmem:[#allocation1 + $0x10] sm:$0xff pattern:$0x73625140]
    %v1172 = vld.sshfl [vmem:[#allocation1 + $0x18] sm:$0xff pattern:$0x73625140]
    %v1173 = vld.sshfl [vmem:[#allocation1 + $0x20] sm:$0xff pattern:$0x73625140]
    %v1174 = vld.sshfl [vmem:[#allocation1 + $0x28] sm:$0xff pattern:$0x73625140]
    %v1175 = vld.sshfl [vmem:[#allocation1 + $0x30] sm:$0xff pattern:$0x73625140]
    %v1176 = vld.sshfl [vmem:[#allocation1 + $0x38] sm:$0xff pattern:$0x73625140]
    %1177 = vst [vmem:[#allocation1] ss:$4 sm:$0xff] %v35
    %1178 = vst [vmem:[%s1137] ss:$4 sm:$0xff] %v36
    %v1179 = vld.sshfl [vmem:[#allocation1] sm:$0xff pattern:$0x73625140]
    %v1180 = vld.sshfl [vmem:[#allocation1 + $0x8] sm:$0xff pattern:$0x73625140]
    %v1181 = vld.sshfl [vmem:[#allocation1 + $0x10] sm:$0xff pattern:$0x73625140]
    %v1182 = vld.sshfl [vmem:[#allocation1 + $0x18] sm:$0xff pattern:$0x73625140]
    %v1183 = vld.sshfl [vmem:[#allocation1 + $0x20] sm:$0xff pattern:$0x73625140]
    %v1184 = vld.sshfl [vmem:[#allocation1 + $0x28] sm:$0xff pattern:$0x73625140]
    %v1185 = vld.sshfl [vmem:[#allocation1 + $0x30] sm:$0xff pattern:$0x73625140]
    %v1186 = vld.sshfl [vmem:[#allocation1 + $0x38] sm:$0xff pattern:$0x73625140]
    %1187 = vst [vmem:[#allocation1] ss:$4 sm:$0xff] %v37
    %1188 = vst [vmem:[%s1137] ss:$4 sm:$0xff] %v38
    %v1189 = vld.sshfl [vmem:[#allocation1] sm:$0xff pattern:$0x73625140]
    %v1190 = vld.sshfl [vmem:[#allocation1 + $0x8] sm:$0xff pattern:$0x73625140]
    %v1191 = vld.sshfl [vmem:[#allocation1 + $0x10] sm:$0xff pattern:$0x73625140]
    %v1192 = vld.sshfl [vmem:[#allocation1 + $0x18] sm:$0xff pattern:$0x73625140]
    %v1193 = vld.sshfl [vmem:[#allocation1 + $0x20] sm:$0xff pattern:$0x73625140]
    %v1194 = vld.sshfl [vmem:[#allocation1 + $0x28] sm:$0xff pattern:$0x73625140]
    %v1195 = vld.sshfl [vmem:[#allocation1 + $0x30] sm:$0xff pattern:$0x73625140]
    %v1196 = vld.sshfl [vmem:[#allocation1 + $0x38] sm:$0xff pattern:$0x73625140]
    %1197 = vst [vmem:[#allocation1] ss:$4 sm:$0xff] %v39
    %1198 = vst [vmem:[%s1137] ss:$4 sm:$0xff] %v40
    %v1199 = vld.sshfl [vmem:[#allocation1] sm:$0xff pattern:$0x73625140]
    %v1200 = vld.sshfl [vmem:[#allocation1 + $0x8] sm:$0xff pattern:$0x73625140]
    %v1201 = vld.sshfl [vmem:[#allocation1 + $0x10] sm:$0xff pattern:$0x73625140]
    %v1202 = vld.sshfl [vmem:[#allocation1 + $0x18] sm:$0xff pattern:$0x73625140]
    %v1203 = vld.sshfl [vmem:[#allocation1 + $0x20] sm:$0xff pattern:$0x73625140]
    %v1204 = vld.sshfl [vmem:[#allocation1 + $0x28] sm:$0xff pattern:$0x73625140]
    %v1205 = vld.sshfl [vmem:[#allocation1 + $0x30] sm:$0xff pattern:$0x73625140]
    %v1206 = vld.sshfl [vmem:[#allocation1 + $0x38] sm:$0xff pattern:$0x73625140]
    %1207 = vst [vmem:[#allocation1] ss:$4 sm:$0xff] %v41
    %1208 = vst [vmem:[%s1137] ss:$4 sm:$0xff] %v42
    %v1209 = vld.sshfl [vmem:[#allocation1] sm:$0xff pattern:$0x73625140]
    %v1210 = vld.sshfl [vmem:[#allocation1 + $0x8] sm:$0xff pattern:$0x73625140]
    %v1211 = vld.sshfl [vmem:[#allocation1 + $0x10] sm:$0xff pattern:$0x73625140]
    %v1212 = vld.sshfl [vmem:[#allocation1 + $0x18] sm:$0xff pattern:$0x73625140]
    %v1213 = vld.sshfl [vmem:[#allocation1 + $0x20] sm:$0xff pattern:$0x73625140]
    %v1214 = vld.sshfl [vmem:[#allocation1 + $0x28] sm:$0xff pattern:$0x73625140]
    %v1215 = vld.sshfl [vmem:[#allocation1 + $0x30] sm:$0xff pattern:$0x73625140]
    %v1216 = vld.sshfl [vmem:[#allocation1 + $0x38] sm:$0xff pattern:$0x73625140]
    %1217 = vst [vmem:[#allocation1] ss:$4 sm:$0xff] %v43
    %v1218 = vld.sshfl [vmem:[#allocation1] sm:$0xff pattern:$0x73625140]
    %v1219 = vld.sshfl [vmem:[#allocation1 + $0x8] sm:$0xff pattern:$0x73625140]
    %v1220 = vld.sshfl [vmem:[#allocation1 + $0x10] sm:$0xff pattern:$0x73625140]
    %vm1287 = vcmask 982016
    %v1288 = vsel %vm1287, %v1220, 0
    %1290 = vmatpush.msra.mxu0 %v59
    %1291 = vmatpush.msra.mxu0 %v58
    %1292 = vmatpush.msra.mxu0 %v57
    %1293 = vmatpush.msra.mxu0 %v56
    %1294 = vmatpush.msra.mxu0 %v55
    %1295 = vmatpush.msra.mxu0 %v54
    %1296 = vmatpush.msra.mxu0 %v53
    %1297 = vmatpush.msra.mxu0 %v52
    %1298 = vmatpush.msra.mxu0 %v51
    %1299 = vmatpush.msra.mxu0 %v50
    %1300 = vmatpush.msra.mxu0 %v49
    %1301 = vmatpush.msra.mxu0 %v48
    %1302 = vmatpush.msra.mxu0 %v47
    %1303 = vmatpush.msra.mxu0 %v46
    %1304 = vmatpush.msra.mxu0 %v45
    %1305 = vmatpush.msra.mxu0 %v44
    %1306 = vmatmul.f32.gmra.mxu0 %v1139
    %v1307 = vpop.f32.mrf.mxu0
    %v1308 = vadd.f32 %v1117, %v1307
    %1309 = vdwg.mxu0
    %1310 = vmatpush.msra.mxu0 %v75
    %1311 = vmatpush.msra.mxu0 %v74
    %1312 = vmatpush.msra.mxu0 %v73
    %1313 = vmatpush.msra.mxu0 %v72
    %1314 = vmatpush.msra.mxu0 %v71
    %1315 = vmatpush.msra.mxu0 %v70
    %1316 = vmatpush.msra.mxu0 %v69
    %1317 = vmatpush.msra.mxu0 %v68
    %1318 = vmatpush.msra.mxu0 %v67
    %1319 = vmatpush.msra.mxu0 %v66
    %1320 = vmatpush.msra.mxu0 %v65
    %1321 = vmatpush.msra.mxu0 %v64
    %1322 = vmatpush.msra.mxu0 %v63
    %1323 = vmatpush.msra.mxu0 %v62
    %1324 = vmatpush.msra.mxu0 %v61
    %1325 = vmatpush.msra.mxu0 %v60
    %1326 = vmatmul.f32.gmra.mxu0 %v1140
    %v1327 = vpop.f32.mrf.mxu0
    %v1328 = vadd.f32 %v1308, %v1327
    %1329 = vdwg.mxu0
    %1330 = vmatpush.msra.mxu0 %v91
    %1331 = vmatpush.msra.mxu0 %v90
    %1332 = vmatpush.msra.mxu0 %v89
    %1333 = vmatpush.msra.mxu0 %v88
    %1334 = vmatpush.msra.mxu0 %v87
    %1335 = vmatpush.msra.mxu0 %v86
    %1336 = vmatpush.msra.mxu0 %v85
    %1337 = vmatpush.msra.mxu0 %v84
    %1338 = vmatpush.msra.mxu0 %v83
    %1339 = vmatpush.msra.mxu0 %v82
    %1340 = vmatpush.msra.mxu0 %v81
    %1341 = vmatpush.msra.mxu0 %v80
    %1342 = vmatpush.msra.mxu0 %v79
    %1343 = vmatpush.msra.mxu0 %v78
    %1344 = vmatpush.msra.mxu0 %v77
    %1345 = vmatpush.msra.mxu0 %v76
    %1346 = vmatmul.f32.gmra.mxu0 %v1141
    %v1347 = vpop.f32.mrf.mxu0
    %v1348 = vadd.f32 %v1328, %v1347
    %1349 = vdwg.mxu0
    %1350 = vmatpush.msra.mxu0 %v107
    %1351 = vmatpush.msra.mxu0 %v106
    %1352 = vmatpush.msra.mxu0 %v105
    %1353 = vmatpush.msra.mxu0 %v104
    %1354 = vmatpush.msra.mxu0 %v103
    %1355 = vmatpush.msra.mxu0 %v102
    %1356 = vmatpush.msra.mxu0 %v101
    %1357 = vmatpush.msra.mxu0 %v100
    %1358 = vmatpush.msra.mxu0 %v99
    %1359 = vmatpush.msra.mxu0 %v98
    %1360 = vmatpush.msra.mxu0 %v97
    %1361 = vmatpush.msra.mxu0 %v96
    %1362 = vmatpush.msra.mxu0 %v95
    %1363 = vmatpush.msra.mxu0 %v94
    %1364 = vmatpush.msra.mxu0 %v93
    %1365 = vmatpush.msra.mxu0 %v92
    %1366 = vmatmul.f32.gmra.mxu0 %v1142
    %v1367 = vpop.f32.mrf.mxu0
    %v1368 = vadd.f32 %v1348, %v1367
    %1369 = vdwg.mxu0
    %1370 = vmatpush.msra.mxu0 %v123
    %1371 = vmatpush.msra.mxu0 %v122
    %1372 = vmatpush.msra.mxu0 %v121
    %1373 = vmatpush.msra.mxu0 %v120
    %1374 = vmatpush.msra.mxu0 %v119
    %1375 = vmatpush.msra.mxu0 %v118
    %1376 = vmatpush.msra.mxu0 %v117
    %1377 = vmatpush.msra.mxu0 %v116
    %1378 = vmatpush.msra.mxu0 %v115
    %1379 = vmatpush.msra.mxu0 %v114
    %1380 = vmatpush.msra.mxu0 %v113
    %1381 = vmatpush.msra.mxu0 %v112
    %1382 = vmatpush.msra.mxu0 %v111
    %1383 = vmatpush.msra.mxu0 %v110
    %1384 = vmatpush.msra.mxu0 %v109
    %1385 = vmatpush.msra.mxu0 %v108
    %1386 = vmatmul.f32.gmra.mxu0 %v1143
    %v1387 = vpop.f32.mrf.mxu0
    %v1388 = vadd.f32 %v1368, %v1387
    %1389 = vdwg.mxu0
    %1390 = vmatpush.msra.mxu0 %v139
    %1391 = vmatpush.msra.mxu0 %v138
    %1392 = vmatpush.msra.mxu0 %v137
    %1393 = vmatpush.msra.mxu0 %v136
    %1394 = vmatpush.msra.mxu0 %v135
    %1395 = vmatpush.msra.mxu0 %v134
    %1396 = vmatpush.msra.mxu0 %v133
    %1397 = vmatpush.msra.mxu0 %v132
    %1398 = vmatpush.msra.mxu0 %v131
    %1399 = vmatpush.msra.mxu0 %v130
    %1400 = vmatpush.msra.mxu0 %v129
    %1401 = vmatpush.msra.mxu0 %v128
    %1402 = vmatpush.msra.mxu0 %v127
    %1403 = vmatpush.msra.mxu0 %v126
    %1404 = vmatpush.msra.mxu0 %v125
    %1405 = vmatpush.msra.mxu0 %v124
    %1406 = vmatmul.f32.gmra.mxu0 %v1144
    %v1407 = vpop.f32.mrf.mxu0
    %v1408 = vadd.f32 %v1388, %v1407
    %1409 = vdwg.mxu0
    %1410 = vmatpush.msra.mxu0 %v155
    %1411 = vmatpush.msra.mxu0 %v154
    %1412 = vmatpush.msra.mxu0 %v153
    %1413 = vmatpush.msra.mxu0 %v152
    %1414 = vmatpush.msra.mxu0 %v151
    %1415 = vmatpush.msra.mxu0 %v150
    %1416 = vmatpush.msra.mxu0 %v149
    %1417 = vmatpush.msra.mxu0 %v148
    %1418 = vmatpush.msra.mxu0 %v147
    %1419 = vmatpush.msra.mxu0 %v146
    %1420 = vmatpush.msra.mxu0 %v145
    %1421 = vmatpush.msra.mxu0 %v144
    %1422 = vmatpush.msra.mxu0 %v143
    %1423 = vmatpush.msra.mxu0 %v142
    %1424 = vmatpush.msra.mxu0 %v141
    %1425 = vmatpush.msra.mxu0 %v140
    %1426 = vmatmul.f32.gmra.mxu0 %v1145
    %v1427 = vpop.f32.mrf.mxu0
    %v1428 = vadd.f32 %v1408, %v1427
    %1429 = vdwg.mxu0
    %1430 = vmatpush.msra.mxu0 %v171
    %1431 = vmatpush.msra.mxu0 %v170
    %1432 = vmatpush.msra.mxu0 %v169
    %1433 = vmatpush.msra.mxu0 %v168
    %1434 = vmatpush.msra.mxu0 %v167
    %1435 = vmatpush.msra.mxu0 %v166
    %1436 = vmatpush.msra.mxu0 %v165
    %1437 = vmatpush.msra.mxu0 %v164
    %1438 = vmatpush.msra.mxu0 %v163
    %1439 = vmatpush.msra.mxu0 %v162
    %1440 = vmatpush.msra.mxu0 %v161
    %1441 = vmatpush.msra.mxu0 %v160
    %1442 = vmatpush.msra.mxu0 %v159
    %1443 = vmatpush.msra.mxu0 %v158
    %1444 = vmatpush.msra.mxu0 %v157
    %1445 = vmatpush.msra.mxu0 %v156
    %1446 = vmatmul.f32.gmra.mxu0 %v1146
    %v1447 = vpop.f32.mrf.mxu0
    %v1448 = vadd.f32 %v1428, %v1447
    %1449 = vdwg.mxu0
    %1450 = vmatpush.msra.mxu0 %v187
    %1451 = vmatpush.msra.mxu0 %v186
    %1452 = vmatpush.msra.mxu0 %v185
    %1453 = vmatpush.msra.mxu0 %v184
    %1454 = vmatpush.msra.mxu0 %v183
    %1455 = vmatpush.msra.mxu0 %v182
    %1456 = vmatpush.msra.mxu0 %v181
    %1457 = vmatpush.msra.mxu0 %v180
    %1458 = vmatpush.msra.mxu0 %v179
    %1459 = vmatpush.msra.mxu0 %v178
    %1460 = vmatpush.msra.mxu0 %v177
    %1461 = vmatpush.msra.mxu0 %v176
    %1462 = vmatpush.msra.mxu0 %v175
    %1463 = vmatpush.msra.mxu0 %v174
    %1464 = vmatpush.msra.mxu0 %v173
    %1465 = vmatpush.msra.mxu0 %v172
    %1466 = vmatmul.f32.gmra.mxu0 %v1149
    %v1467 = vpop.f32.mrf.mxu0
    %v1468 = vadd.f32 %v1448, %v1467
    %1469 = vdwg.mxu0
    %1470 = vmatpush.msra.mxu0 %v203
    %1471 = vmatpush.msra.mxu0 %v202
    %1472 = vmatpush.msra.mxu0 %v201
    %1473 = vmatpush.msra.mxu0 %v200
    %1474 = vmatpush.msra.mxu0 %v199
    %1475 = vmatpush.msra.mxu0 %v198
    %1476 = vmatpush.msra.mxu0 %v197
    %1477 = vmatpush.msra.mxu0 %v196
    %1478 = vmatpush.msra.mxu0 %v195
    %1479 = vmatpush.msra.mxu0 %v194
    %1480 = vmatpush.msra.mxu0 %v193
    %1481 = vmatpush.msra.mxu0 %v192
    %1482 = vmatpush.msra.mxu0 %v191
    %1483 = vmatpush.msra.mxu0 %v190
    %1484 = vmatpush.msra.mxu0 %v189
    %1485 = vmatpush.msra.mxu0 %v188
    %1486 = vmatmul.f32.gmra.mxu0 %v1150
    %v1487 = vpop.f32.mrf.mxu0
    %v1488 = vadd.f32 %v1468, %v1487
    %1489 = vdwg.mxu0
    %1490 = vmatpush.msra.mxu0 %v219
    %1491 = vmatpush.msra.mxu0 %v218
    %1492 = vmatpush.msra.mxu0 %v217
    %1493 = vmatpush.msra.mxu0 %v216
    %1494 = vmatpush.msra.mxu0 %v215
    %1495 = vmatpush.msra.mxu0 %v214
    %1496 = vmatpush.msra.mxu0 %v213
    %1497 = vmatpush.msra.mxu0 %v212
    %1498 = vmatpush.msra.mxu0 %v211
    %1499 = vmatpush.msra.mxu0 %v210
    %1500 = vmatpush.msra.mxu0 %v209
    %1501 = vmatpush.msra.mxu0 %v208
    %1502 = vmatpush.msra.mxu0 %v207
    %1503 = vmatpush.msra.mxu0 %v206
    %1504 = vmatpush.msra.mxu0 %v205
    %1505 = vmatpush.msra.mxu0 %v204
    %1506 = vmatmul.f32.gmra.mxu0 %v1151
    %v1507 = vpop.f32.mrf.mxu0
    %v1508 = vadd.f32 %v1488, %v1507
    %1509 = vdwg.mxu0
    %1510 = vmatpush.msra.mxu0 %v235
    %1511 = vmatpush.msra.mxu0 %v234
    %1512 = vmatpush.msra.mxu0 %v233
    %1513 = vmatpush.msra.mxu0 %v232
    %1514 = vmatpush.msra.mxu0 %v231
    %1515 = vmatpush.msra.mxu0 %v230
    %1516 = vmatpush.msra.mxu0 %v229
    %1517 = vmatpush.msra.mxu0 %v228
    %1518 = vmatpush.msra.mxu0 %v227
    %1519 = vmatpush.msra.mxu0 %v226
    %1520 = vmatpush.msra.mxu0 %v225
    %1521 = vmatpush.msra.mxu0 %v224
    %1522 = vmatpush.msra.mxu0 %v223
    %1523 = vmatpush.msra.mxu0 %v222
    %1524 = vmatpush.msra.mxu0 %v221
    %1525 = vmatpush.msra.mxu0 %v220
    %1526 = vmatmul.f32.gmra.mxu0 %v1152
    %v1527 = vpop.f32.mrf.mxu0
    %v1528 = vadd.f32 %v1508, %v1527
    %1529 = vdwg.mxu0
    %1530 = vmatpush.msra.mxu0 %v251
    %1531 = vmatpush.msra.mxu0 %v250
    %1532 = vmatpush.msra.mxu0 %v249
    %1533 = vmatpush.msra.mxu0 %v248
    %1534 = vmatpush.msra.mxu0 %v247
    %1535 = vmatpush.msra.mxu0 %v246
    %1536 = vmatpush.msra.mxu0 %v245
    %1537 = vmatpush.msra.mxu0 %v244
    %1538 = vmatpush.msra.mxu0 %v243
    %1539 = vmatpush.msra.mxu0 %v242
    %1540 = vmatpush.msra.mxu0 %v241
    %1541 = vmatpush.msra.mxu0 %v240
    %1542 = vmatpush.msra.mxu0 %v239
    %1543 = vmatpush.msra.mxu0 %v238
    %1544 = vmatpush.msra.mxu0 %v237
    %1545 = vmatpush.msra.mxu0 %v236
    %1546 = vmatmul.f32.gmra.mxu0 %v1153
    %v1547 = vpop.f32.mrf.mxu0
    %v1548 = vadd.f32 %v1528, %v1547
    %1549 = vdwg.mxu0
    %1550 = vmatpush.msra.mxu0 %v267
    %1551 = vmatpush.msra.mxu0 %v266
    %1552 = vmatpush.msra.mxu0 %v265
    %1553 = vmatpush.msra.mxu0 %v264
    %1554 = vmatpush.msra.mxu0 %v263
    %1555 = vmatpush.msra.mxu0 %v262
    %1556 = vmatpush.msra.mxu0 %v261
    %1557 = vmatpush.msra.mxu0 %v260
    %1558 = vmatpush.msra.mxu0 %v259
    %1559 = vmatpush.msra.mxu0 %v258
    %1560 = vmatpush.msra.mxu0 %v257
    %1561 = vmatpush.msra.mxu0 %v256
    %1562 = vmatpush.msra.mxu0 %v255
    %1563 = vmatpush.msra.mxu0 %v254
    %1564 = vmatpush.msra.mxu0 %v253
    %1565 = vmatpush.msra.mxu0 %v252
    %1566 = vmatmul.f32.gmra.mxu0 %v1154
    %v1567 = vpop.f32.mrf.mxu0
    %v1568 = vadd.f32 %v1548, %v1567
    %1569 = vdwg.mxu0
    %1570 = vmatpush.msra.mxu0 %v283
    %1571 = vmatpush.msra.mxu0 %v282
    %1572 = vmatpush.msra.mxu0 %v281
    %1573 = vmatpush.msra.mxu0 %v280
    %1574 = vmatpush.msra.mxu0 %v279
    %1575 = vmatpush.msra.mxu0 %v278
    %1576 = vmatpush.msra.mxu0 %v277
    %1577 = vmatpush.msra.mxu0 %v276
    %1578 = vmatpush.msra.mxu0 %v275
    %1579 = vmatpush.msra.mxu0 %v274
    %1580 = vmatpush.msra.mxu0 %v273
    %1581 = vmatpush.msra.mxu0 %v272
    %1582 = vmatpush.msra.mxu0 %v271
    %1583 = vmatpush.msra.mxu0 %v270
    %1584 = vmatpush.msra.mxu0 %v269
    %1585 = vmatpush.msra.mxu0 %v268
    %1586 = vmatmul.f32.gmra.mxu0 %v1155
    %v1587 = vpop.f32.mrf.mxu0
    %v1588 = vadd.f32 %v1568, %v1587
    %1589 = vdwg.mxu0
    %1590 = vmatpush.msra.mxu0 %v299
    %1591 = vmatpush.msra.mxu0 %v298
    %1592 = vmatpush.msra.mxu0 %v297
    %1593 = vmatpush.msra.mxu0 %v296
    %1594 = vmatpush.msra.mxu0 %v295
    %1595 = vmatpush.msra.mxu0 %v294
    %1596 = vmatpush.msra.mxu0 %v293
    %1597 = vmatpush.msra.mxu0 %v292
    %1598 = vmatpush.msra.mxu0 %v291
    %1599 = vmatpush.msra.mxu0 %v290
    %1600 = vmatpush.msra.mxu0 %v289
    %1601 = vmatpush.msra.mxu0 %v288
    %1602 = vmatpush.msra.mxu0 %v287
    %1603 = vmatpush.msra.mxu0 %v286
    %1604 = vmatpush.msra.mxu0 %v285
    %1605 = vmatpush.msra.mxu0 %v284
    %1606 = vmatmul.f32.gmra.mxu0 %v1156
    %v1607 = vpop.f32.mrf.mxu0
    %v1608 = vadd.f32 %v1588, %v1607
    %1609 = vdwg.mxu0
    %1610 = vmatpush.msra.mxu0 %v315
    %1611 = vmatpush.msra.mxu0 %v314
    %1612 = vmatpush.msra.mxu0 %v313
    %1613 = vmatpush.msra.mxu0 %v312
    %1614 = vmatpush.msra.mxu0 %v311
    %1615 = vmatpush.msra.mxu0 %v310
    %1616 = vmatpush.msra.mxu0 %v309
    %1617 = vmatpush.msra.mxu0 %v308
    %1618 = vmatpush.msra.mxu0 %v307
    %1619 = vmatpush.msra.mxu0 %v306
    %1620 = vmatpush.msra.mxu0 %v305
    %1621 = vmatpush.msra.mxu0 %v304
    %1622 = vmatpush.msra.mxu0 %v303
    %1623 = vmatpush.msra.mxu0 %v302
    %1624 = vmatpush.msra.mxu0 %v301
    %1625 = vmatpush.msra.mxu0 %v300
    %1626 = vmatmul.f32.gmra.mxu0 %v1159
    %v1627 = vpop.f32.mrf.mxu0
    %v1628 = vadd.f32 %v1608, %v1627
    %1629 = vdwg.mxu0
    %1630 = vmatpush.msra.mxu0 %v331
    %1631 = vmatpush.msra.mxu0 %v330
    %1632 = vmatpush.msra.mxu0 %v329
    %1633 = vmatpush.msra.mxu0 %v328
    %1634 = vmatpush.msra.mxu0 %v327
    %1635 = vmatpush.msra.mxu0 %v326
    %1636 = vmatpush.msra.mxu0 %v325
    %1637 = vmatpush.msra.mxu0 %v324
    %1638 = vmatpush.msra.mxu0 %v323
    %1639 = vmatpush.msra.mxu0 %v322
    %1640 = vmatpush.msra.mxu0 %v321
    %1641 = vmatpush.msra.mxu0 %v320
    %1642 = vmatpush.msra.mxu0 %v319
    %1643 = vmatpush.msra.mxu0 %v318
    %1644 = vmatpush.msra.mxu0 %v317
    %1645 = vmatpush.msra.mxu0 %v316
    %1646 = vmatmul.f32.gmra.mxu0 %v1160
    %v1647 = vpop.f32.mrf.mxu0
    %v1648 = vadd.f32 %v1628, %v1647
    %1649 = vdwg.mxu0
    %1650 = vmatpush.msra.mxu0 %v347
    %1651 = vmatpush.msra.mxu0 %v346
    %1652 = vmatpush.msra.mxu0 %v345
    %1653 = vmatpush.msra.mxu0 %v344
    %1654 = vmatpush.msra.mxu0 %v343
    %1655 = vmatpush.msra.mxu0 %v342
    %1656 = vmatpush.msra.mxu0 %v341
    %1657 = vmatpush.msra.mxu0 %v340
    %1658 = vmatpush.msra.mxu0 %v339
    %1659 = vmatpush.msra.mxu0 %v338
    %1660 = vmatpush.msra.mxu0 %v337
    %1661 = vmatpush.msra.mxu0 %v336
    %1662 = vmatpush.msra.mxu0 %v335
    %1663 = vmatpush.msra.mxu0 %v334
    %1664 = vmatpush.msra.mxu0 %v333
    %1665 = vmatpush.msra.mxu0 %v332
    %1666 = vmatmul.f32.gmra.mxu0 %v1161
    %v1667 = vpop.f32.mrf.mxu0
    %v1668 = vadd.f32 %v1648, %v1667
    %1669 = vdwg.mxu0
    %1670 = vmatpush.msra.mxu0 %v363
    %1671 = vmatpush.msra.mxu0 %v362
    %1672 = vmatpush.msra.mxu0 %v361
    %1673 = vmatpush.msra.mxu0 %v360
    %1674 = vmatpush.msra.mxu0 %v359
    %1675 = vmatpush.msra.mxu0 %v358
    %1676 = vmatpush.msra.mxu0 %v357
    %1677 = vmatpush.msra.mxu0 %v356
    %1678 = vmatpush.msra.mxu0 %v355
    %1679 = vmatpush.msra.mxu0 %v354
    %1680 = vmatpush.msra.mxu0 %v353
    %1681 = vmatpush.msra.mxu0 %v352
    %1682 = vmatpush.msra.mxu0 %v351
    %1683 = vmatpush.msra.mxu0 %v350
    %1684 = vmatpush.msra.mxu0 %v349
    %1685 = vmatpush.msra.mxu0 %v348
    %1686 = vmatmul.f32.gmra.mxu0 %v1162
    %v1687 = vpop.f32.mrf.mxu0
    %v1688 = vadd.f32 %v1668, %v1687
    %1689 = vdwg.mxu0
    %1690 = vmatpush.msra.mxu0 %v379
    %1691 = vmatpush.msra.mxu0 %v378
    %1692 = vmatpush.msra.mxu0 %v377
    %1693 = vmatpush.msra.mxu0 %v376
    %1694 = vmatpush.msra.mxu0 %v375
    %1695 = vmatpush.msra.mxu0 %v374
    %1696 = vmatpush.msra.mxu0 %v373
    %1697 = vmatpush.msra.mxu0 %v372
    %1698 = vmatpush.msra.mxu0 %v371
    %1699 = vmatpush.msra.mxu0 %v370
    %1700 = vmatpush.msra.mxu0 %v369
    %1701 = vmatpush.msra.mxu0 %v368
    %1702 = vmatpush.msra.mxu0 %v367
    %1703 = vmatpush.msra.mxu0 %v366
    %1704 = vmatpush.msra.mxu0 %v365
    %1705 = vmatpush.msra.mxu0 %v364
    %1706 = vmatmul.f32.gmra.mxu0 %v1163
    %v1707 = vpop.f32.mrf.mxu0
    %v1708 = vadd.f32 %v1688, %v1707
    %1709 = vdwg.mxu0
    %1710 = vmatpush.msra.mxu0 %v395
    %1711 = vmatpush.msra.mxu0 %v394
    %1712 = vmatpush.msra.mxu0 %v393
    %1713 = vmatpush.msra.mxu0 %v392
    %1714 = vmatpush.msra.mxu0 %v391
    %1715 = vmatpush.msra.mxu0 %v390
    %1716 = vmatpush.msra.mxu0 %v389
    %1717 = vmatpush.msra.mxu0 %v388
    %1718 = vmatpush.msra.mxu0 %v387
    %1719 = vmatpush.msra.mxu0 %v386
    %1720 = vmatpush.msra.mxu0 %v385
    %1721 = vmatpush.msra.mxu0 %v384
    %1722 = vmatpush.msra.mxu0 %v383
    %1723 = vmatpush.msra.mxu0 %v382
    %1724 = vmatpush.msra.mxu0 %v381
    %1725 = vmatpush.msra.mxu0 %v380
    %1726 = vmatmul.f32.gmra.mxu0 %v1164
    %v1727 = vpop.f32.mrf.mxu0
    %v1728 = vadd.f32 %v1708, %v1727
    %1729 = vdwg.mxu0
    %1730 = vmatpush.msra.mxu0 %v411
    %1731 = vmatpush.msra.mxu0 %v410
    %1732 = vmatpush.msra.mxu0 %v409
    %1733 = vmatpush.msra.mxu0 %v408
    %1734 = vmatpush.msra.mxu0 %v407
    %1735 = vmatpush.msra.mxu0 %v406
    %1736 = vmatpush.msra.mxu0 %v405
    %1737 = vmatpush.msra.mxu0 %v404
    %1738 = vmatpush.msra.mxu0 %v403
    %1739 = vmatpush.msra.mxu0 %v402
    %1740 = vmatpush.msra.mxu0 %v401
    %1741 = vmatpush.msra.mxu0 %v400
    %1742 = vmatpush.msra.mxu0 %v399
    %1743 = vmatpush.msra.mxu0 %v398
    %1744 = vmatpush.msra.mxu0 %v397
    %1745 = vmatpush.msra.mxu0 %v396
    %1746 = vmatmul.f32.gmra.mxu0 %v1165
    %v1747 = vpop.f32.mrf.mxu0
    %v1748 = vadd.f32 %v1728, %v1747
    %1749 = vdwg.mxu0
    %1750 = vmatpush.msra.mxu0 %v427
    %1751 = vmatpush.msra.mxu0 %v426
    %1752 = vmatpush.msra.mxu0 %v425
    %1753 = vmatpush.msra.mxu0 %v424
    %1754 = vmatpush.msra.mxu0 %v423
    %1755 = vmatpush.msra.mxu0 %v422
    %1756 = vmatpush.msra.mxu0 %v421
    %1757 = vmatpush.msra.mxu0 %v420
    %1758 = vmatpush.msra.mxu0 %v419
    %1759 = vmatpush.msra.mxu0 %v418
    %1760 = vmatpush.msra.mxu0 %v417
    %1761 = vmatpush.msra.mxu0 %v416
    %1762 = vmatpush.msra.mxu0 %v415
    %1763 = vmatpush.msra.mxu0 %v414
    %1764 = vmatpush.msra.mxu0 %v413
    %1765 = vmatpush.msra.mxu0 %v412
    %1766 = vmatmul.f32.gmra.mxu0 %v1166
    %v1767 = vpop.f32.mrf.mxu0
    %v1768 = vadd.f32 %v1748, %v1767
    %1769 = vdwg.mxu0
    %1770 = vmatpush.msra.mxu0 %v443
    %1771 = vmatpush.msra.mxu0 %v442
    %1772 = vmatpush.msra.mxu0 %v441
    %1773 = vmatpush.msra.mxu0 %v440
    %1774 = vmatpush.msra.mxu0 %v439
    %1775 = vmatpush.msra.mxu0 %v438
    %1776 = vmatpush.msra.mxu0 %v437
    %1777 = vmatpush.msra.mxu0 %v436
    %1778 = vmatpush.msra.mxu0 %v435
    %1779 = vmatpush.msra.mxu0 %v434
    %1780 = vmatpush.msra.mxu0 %v433
    %1781 = vmatpush.msra.mxu0 %v432
    %1782 = vmatpush.msra.mxu0 %v431
    %1783 = vmatpush.msra.mxu0 %v430
    %1784 = vmatpush.msra.mxu0 %v429
    %1785 = vmatpush.msra.mxu0 %v428
    %1786 = vmatmul.f32.gmra.mxu0 %v1169
    %v1787 = vpop.f32.mrf.mxu0
    %v1788 = vadd.f32 %v1768, %v1787
    %1789 = vdwg.mxu0
    %1790 = vmatpush.msra.mxu0 %v459
    %1791 = vmatpush.msra.mxu0 %v458
    %1792 = vmatpush.msra.mxu0 %v457
    %1793 = vmatpush.msra.mxu0 %v456
    %1794 = vmatpush.msra.mxu0 %v455
    %1795 = vmatpush.msra.mxu0 %v454
    %1796 = vmatpush.msra.mxu0 %v453
    %1797 = vmatpush.msra.mxu0 %v452
    %1798 = vmatpush.msra.mxu0 %v451
    %1799 = vmatpush.msra.mxu0 %v450
    %1800 = vmatpush.msra.mxu0 %v449
    %1801 = vmatpush.msra.mxu0 %v448
    %1802 = vmatpush.msra.mxu0 %v447
    %1803 = vmatpush.msra.mxu0 %v446
    %1804 = vmatpush.msra.mxu0 %v445
    %1805 = vmatpush.msra.mxu0 %v444
    %1806 = vmatmul.f32.gmra.mxu0 %v1170
    %v1807 = vpop.f32.mrf.mxu0
    %v1808 = vadd.f32 %v1788, %v1807
    %1809 = vdwg.mxu0
    %1810 = vmatpush.msra.mxu0 %v475
    %1811 = vmatpush.msra.mxu0 %v474
    %1812 = vmatpush.msra.mxu0 %v473
    %1813 = vmatpush.msra.mxu0 %v472
    %1814 = vmatpush.msra.mxu0 %v471
    %1815 = vmatpush.msra.mxu0 %v470
    %1816 = vmatpush.msra.mxu0 %v469
    %1817 = vmatpush.msra.mxu0 %v468
    %1818 = vmatpush.msra.mxu0 %v467
    %1819 = vmatpush.msra.mxu0 %v466
    %1820 = vmatpush.msra.mxu0 %v465
    %1821 = vmatpush.msra.mxu0 %v464
    %1822 = vmatpush.msra.mxu0 %v463
    %1823 = vmatpush.msra.mxu0 %v462
    %1824 = vmatpush.msra.mxu0 %v461
    %1825 = vmatpush.msra.mxu0 %v460
    %1826 = vmatmul.f32.gmra.mxu0 %v1171
    %v1827 = vpop.f32.mrf.mxu0
    %v1828 = vadd.f32 %v1808, %v1827
    %1829 = vdwg.mxu0
    %1830 = vmatpush.msra.mxu0 %v491
    %1831 = vmatpush.msra.mxu0 %v490
    %1832 = vmatpush.msra.mxu0 %v489
    %1833 = vmatpush.msra.mxu0 %v488
    %1834 = vmatpush.msra.mxu0 %v487
    %1835 = vmatpush.msra.mxu0 %v486
    %1836 = vmatpush.msra.mxu0 %v485
    %1837 = vmatpush.msra.mxu0 %v484
    %1838 = vmatpush.msra.mxu0 %v483
    %1839 = vmatpush.msra.mxu0 %v482
    %1840 = vmatpush.msra.mxu0 %v481
    %1841 = vmatpush.msra.mxu0 %v480
    %1842 = vmatpush.msra.mxu0 %v479
    %1843 = vmatpush.msra.mxu0 %v478
    %1844 = vmatpush.msra.mxu0 %v477
    %1845 = vmatpush.msra.mxu0 %v476
    %1846 = vmatmul.f32.gmra.mxu0 %v1172
    %v1847 = vpop.f32.mrf.mxu0
    %v1848 = vadd.f32 %v1828, %v1847
    %1849 = vdwg.mxu0
    %1850 = vmatpush.msra.mxu0 %v507
    %1851 = vmatpush.msra.mxu0 %v506
    %1852 = vmatpush.msra.mxu0 %v505
    %1853 = vmatpush.msra.mxu0 %v504
    %1854 = vmatpush.msra.mxu0 %v503
    %1855 = vmatpush.msra.mxu0 %v502
    %1856 = vmatpush.msra.mxu0 %v501
    %1857 = vmatpush.msra.mxu0 %v500
    %1858 = vmatpush.msra.mxu0 %v499
    %1859 = vmatpush.msra.mxu0 %v498
    %1860 = vmatpush.msra.mxu0 %v497
    %1861 = vmatpush.msra.mxu0 %v496
    %1862 = vmatpush.msra.mxu0 %v495
    %1863 = vmatpush.msra.mxu0 %v494
    %1864 = vmatpush.msra.mxu0 %v493
    %1865 = vmatpush.msra.mxu0 %v492
    %1866 = vmatmul.f32.gmra.mxu0 %v1173
    %v1867 = vpop.f32.mrf.mxu0
    %v1868 = vadd.f32 %v1848, %v1867
    %1869 = vdwg.mxu0
    %1870 = vmatpush.msra.mxu0 %v523
    %1871 = vmatpush.msra.mxu0 %v522
    %1872 = vmatpush.msra.mxu0 %v521
    %1873 = vmatpush.msra.mxu0 %v520
    %1874 = vmatpush.msra.mxu0 %v519
    %1875 = vmatpush.msra.mxu0 %v518
    %1876 = vmatpush.msra.mxu0 %v517
    %1877 = vmatpush.msra.mxu0 %v516
    %1878 = vmatpush.msra.mxu0 %v515
    %1879 = vmatpush.msra.mxu0 %v514
    %1880 = vmatpush.msra.mxu0 %v513
    %1881 = vmatpush.msra.mxu0 %v512
    %1882 = vmatpush.msra.mxu0 %v511
    %1883 = vmatpush.msra.mxu0 %v510
    %1884 = vmatpush.msra.mxu0 %v509
    %1885 = vmatpush.msra.mxu0 %v508
    %1886 = vmatmul.f32.gmra.mxu0 %v1174
    %v1887 = vpop.f32.mrf.mxu0
    %v1888 = vadd.f32 %v1868, %v1887
    %1889 = vdwg.mxu0
    %1890 = vmatpush.msra.mxu0 %v539
    %1891 = vmatpush.msra.mxu0 %v538
    %1892 = vmatpush.msra.mxu0 %v537
    %1893 = vmatpush.msra.mxu0 %v536
    %1894 = vmatpush.msra.mxu0 %v535
    %1895 = vmatpush.msra.mxu0 %v534
    %1896 = vmatpush.msra.mxu0 %v533
    %1897 = vmatpush.msra.mxu0 %v532
    %1898 = vmatpush.msra.mxu0 %v531
    %1899 = vmatpush.msra.mxu0 %v530
    %1900 = vmatpush.msra.mxu0 %v529
    %1901 = vmatpush.msra.mxu0 %v528
    %1902 = vmatpush.msra.mxu0 %v527
    %1903 = vmatpush.msra.mxu0 %v526
    %1904 = vmatpush.msra.mxu0 %v525
    %1905 = vmatpush.msra.mxu0 %v524
    %1906 = vmatmul.f32.gmra.mxu0 %v1175
    %v1907 = vpop.f32.mrf.mxu0
    %v1908 = vadd.f32 %v1888, %v1907
    %1909 = vdwg.mxu0
    %1910 = vmatpush.msra.mxu0 %v555
    %1911 = vmatpush.msra.mxu0 %v554
    %1912 = vmatpush.msra.mxu0 %v553
    %1913 = vmatpush.msra.mxu0 %v552
    %1914 = vmatpush.msra.mxu0 %v551
    %1915 = vmatpush.msra.mxu0 %v550
    %1916 = vmatpush.msra.mxu0 %v549
    %1917 = vmatpush.msra.mxu0 %v548
    %1918 = vmatpush.msra.mxu0 %v547
    %1919 = vmatpush.msra.mxu0 %v546
    %1920 = vmatpush.msra.mxu0 %v545
    %1921 = vmatpush.msra.mxu0 %v544
    %1922 = vmatpush.msra.mxu0 %v543
    %1923 = vmatpush.msra.mxu0 %v542
    %1924 = vmatpush.msra.mxu0 %v541
    %1925 = vmatpush.msra.mxu0 %v540
    %1926 = vmatmul.f32.gmra.mxu0 %v1176
    %v1927 = vpop.f32.mrf.mxu0
    %v1928 = vadd.f32 %v1908, %v1927
    %1929 = vdwg.mxu0
    %1930 = vmatpush.msra.mxu0 %v571
    %1931 = vmatpush.msra.mxu0 %v570
    %1932 = vmatpush.msra.mxu0 %v569
    %1933 = vmatpush.msra.mxu0 %v568
    %1934 = vmatpush.msra.mxu0 %v567
    %1935 = vmatpush.msra.mxu0 %v566
    %1936 = vmatpush.msra.mxu0 %v565
    %1937 = vmatpush.msra.mxu0 %v564
    %1938 = vmatpush.msra.mxu0 %v563
    %1939 = vmatpush.msra.mxu0 %v562
    %1940 = vmatpush.msra.mxu0 %v561
    %1941 = vmatpush.msra.mxu0 %v560
    %1942 = vmatpush.msra.mxu0 %v559
    %1943 = vmatpush.msra.mxu0 %v558
    %1944 = vmatpush.msra.mxu0 %v557
    %1945 = vmatpush.msra.mxu0 %v556
    %1946 = vmatmul.f32.gmra.mxu0 %v1179
    %v1947 = vpop.f32.mrf.mxu0
    %v1948 = vadd.f32 %v1928, %v1947
    %1949 = vdwg.mxu0
    %1950 = vmatpush.msra.mxu0 %v587
    %1951 = vmatpush.msra.mxu0 %v586
    %1952 = vmatpush.msra.mxu0 %v585
    %1953 = vmatpush.msra.mxu0 %v584
    %1954 = vmatpush.msra.mxu0 %v583
    %1955 = vmatpush.msra.mxu0 %v582
    %1956 = vmatpush.msra.mxu0 %v581
    %1957 = vmatpush.msra.mxu0 %v580
    %1958 = vmatpush.msra.mxu0 %v579
    %1959 = vmatpush.msra.mxu0 %v578
    %1960 = vmatpush.msra.mxu0 %v577
    %1961 = vmatpush.msra.mxu0 %v576
    %1962 = vmatpush.msra.mxu0 %v575
    %1963 = vmatpush.msra.mxu0 %v574
    %1964 = vmatpush.msra.mxu0 %v573
    %1965 = vmatpush.msra.mxu0 %v572
    %1966 = vmatmul.f32.gmra.mxu0 %v1180
    %v1967 = vpop.f32.mrf.mxu0
    %v1968 = vadd.f32 %v1948, %v1967
    %1969 = vdwg.mxu0
    %1970 = vmatpush.msra.mxu0 %v603
    %1971 = vmatpush.msra.mxu0 %v602
    %1972 = vmatpush.msra.mxu0 %v601
    %1973 = vmatpush.msra.mxu0 %v600
    %1974 = vmatpush.msra.mxu0 %v599
    %1975 = vmatpush.msra.mxu0 %v598
    %1976 = vmatpush.msra.mxu0 %v597
    %1977 = vmatpush.msra.mxu0 %v596
    %1978 = vmatpush.msra.mxu0 %v595
    %1979 = vmatpush.msra.mxu0 %v594
    %1980 = vmatpush.msra.mxu0 %v593
    %1981 = vmatpush.msra.mxu0 %v592
    %1982 = vmatpush.msra.mxu0 %v591
    %1983 = vmatpush.msra.mxu0 %v590
    %1984 = vmatpush.msra.mxu0 %v589
    %1985 = vmatpush.msra.mxu0 %v588
    %1986 = vmatmul.f32.gmra.mxu0 %v1181
    %v1987 = vpop.f32.mrf.mxu0
    %v1988 = vadd.f32 %v1968, %v1987
    %1989 = vdwg.mxu0
    %1990 = vmatpush.msra.mxu0 %v619
    %1991 = vmatpush.msra.mxu0 %v618
    %1992 = vmatpush.msra.mxu0 %v617
    %1993 = vmatpush.msra.mxu0 %v616
    %1994 = vmatpush.msra.mxu0 %v615
    %1995 = vmatpush.msra.mxu0 %v614
    %1996 = vmatpush.msra.mxu0 %v613
    %1997 = vmatpush.msra.mxu0 %v612
    %1998 = vmatpush.msra.mxu0 %v611
    %1999 = vmatpush.msra.mxu0 %v610
    %2000 = vmatpush.msra.mxu0 %v609
    %2001 = vmatpush.msra.mxu0 %v608
    %2002 = vmatpush.msra.mxu0 %v607
    %2003 = vmatpush.msra.mxu0 %v606
    %2004 = vmatpush.msra.mxu0 %v605
    %2005 = vmatpush.msra.mxu0 %v604
    %2006 = vmatmul.f32.gmra.mxu0 %v1182
    %v2007 = vpop.f32.mrf.mxu0
    %v2008 = vadd.f32 %v1988, %v2007
    %2009 = vdwg.mxu0
    %2010 = vmatpush.msra.mxu0 %v635
    %2011 = vmatpush.msra.mxu0 %v634
    %2012 = vmatpush.msra.mxu0 %v633
    %2013 = vmatpush.msra.mxu0 %v632
    %2014 = vmatpush.msra.mxu0 %v631
    %2015 = vmatpush.msra.mxu0 %v630
    %2016 = vmatpush.msra.mxu0 %v629
    %2017 = vmatpush.msra.mxu0 %v628
    %2018 = vmatpush.msra.mxu0 %v627
    %2019 = vmatpush.msra.mxu0 %v626
    %2020 = vmatpush.msra.mxu0 %v625
    %2021 = vmatpush.msra.mxu0 %v624
    %2022 = vmatpush.msra.mxu0 %v623
    %2023 = vmatpush.msra.mxu0 %v622
    %2024 = vmatpush.msra.mxu0 %v621
    %2025 = vmatpush.msra.mxu0 %v620
    %2026 = vmatmul.f32.gmra.mxu0 %v1183
    %v2027 = vpop.f32.mrf.mxu0
    %v2028 = vadd.f32 %v2008, %v2027
    %2029 = vdwg.mxu0
    %2030 = vmatpush.msra.mxu0 %v651
    %2031 = vmatpush.msra.mxu0 %v650
    %2032 = vmatpush.msra.mxu0 %v649
    %2033 = vmatpush.msra.mxu0 %v648
    %2034 = vmatpush.msra.mxu0 %v647
    %2035 = vmatpush.msra.mxu0 %v646
    %2036 = vmatpush.msra.mxu0 %v645
    %2037 = vmatpush.msra.mxu0 %v644
    %2038 = vmatpush.msra.mxu0 %v643
    %2039 = vmatpush.msra.mxu0 %v642
    %2040 = vmatpush.msra.mxu0 %v641
    %2041 = vmatpush.msra.mxu0 %v640
    %2042 = vmatpush.msra.mxu0 %v639
    %2043 = vmatpush.msra.mxu0 %v638
    %2044 = vmatpush.msra.mxu0 %v637
    %2045 = vmatpush.msra.mxu0 %v636
    %2046 = vmatmul.f32.gmra.mxu0 %v1184
    %v2047 = vpop.f32.mrf.mxu0
    %v2048 = vadd.f32 %v2028, %v2047
    %2049 = vdwg.mxu0
    %2050 = vmatpush.msra.mxu0 %v667
    %2051 = vmatpush.msra.mxu0 %v666
    %2052 = vmatpush.msra.mxu0 %v665
    %2053 = vmatpush.msra.mxu0 %v664
    %2054 = vmatpush.msra.mxu0 %v663
    %2055 = vmatpush.msra.mxu0 %v662
    %2056 = vmatpush.msra.mxu0 %v661
    %2057 = vmatpush.msra.mxu0 %v660
    %2058 = vmatpush.msra.mxu0 %v659
    %2059 = vmatpush.msra.mxu0 %v658
    %2060 = vmatpush.msra.mxu0 %v657
    %2061 = vmatpush.msra.mxu0 %v656
    %2062 = vmatpush.msra.mxu0 %v655
    %2063 = vmatpush.msra.mxu0 %v654
    %2064 = vmatpush.msra.mxu0 %v653
    %2065 = vmatpush.msra.mxu0 %v652
    %2066 = vmatmul.f32.gmra.mxu0 %v1185
    %v2067 = vpop.f32.mrf.mxu0
    %v2068 = vadd.f32 %v2048, %v2067
    %2069 = vdwg.mxu0
    %2070 = vmatpush.msra.mxu0 %v683
    %2071 = vmatpush.msra.mxu0 %v682
    %2072 = vmatpush.msra.mxu0 %v681
    %2073 = vmatpush.msra.mxu0 %v680
    %2074 = vmatpush.msra.mxu0 %v679
    %2075 = vmatpush.msra.mxu0 %v678
    %2076 = vmatpush.msra.mxu0 %v677
    %2077 = vmatpush.msra.mxu0 %v676
    %2078 = vmatpush.msra.mxu0 %v675
    %2079 = vmatpush.msra.mxu0 %v674
    %2080 = vmatpush.msra.mxu0 %v673
    %2081 = vmatpush.msra.mxu0 %v672
    %2082 = vmatpush.msra.mxu0 %v671
    %2083 = vmatpush.msra.mxu0 %v670
    %2084 = vmatpush.msra.mxu0 %v669
    %2085 = vmatpush.msra.mxu0 %v668
    %2086 = vmatmul.f32.gmra.mxu0 %v1186
    %v2087 = vpop.f32.mrf.mxu0
    %v2088 = vadd.f32 %v2068, %v2087
    %2089 = vdwg.mxu0
    %2090 = vmatpush.msra.mxu0 %v699
    %2091 = vmatpush.msra.mxu0 %v698
    %2092 = vmatpush.msra.mxu0 %v697
    %2093 = vmatpush.msra.mxu0 %v696
    %2094 = vmatpush.msra.mxu0 %v695
    %2095 = vmatpush.msra.mxu0 %v694
    %2096 = vmatpush.msra.mxu0 %v693
    %2097 = vmatpush.msra.mxu0 %v692
    %2098 = vmatpush.msra.mxu0 %v691
    %2099 = vmatpush.msra.mxu0 %v690
    %2100 = vmatpush.msra.mxu0 %v689
    %2101 = vmatpush.msra.mxu0 %v688
    %2102 = vmatpush.msra.mxu0 %v687
    %2103 = vmatpush.msra.mxu0 %v686
    %2104 = vmatpush.msra.mxu0 %v685
    %2105 = vmatpush.msra.mxu0 %v684
    %2106 = vmatmul.f32.gmra.mxu0 %v1189
    %v2107 = vpop.f32.mrf.mxu0
    %v2108 = vadd.f32 %v2088, %v2107
    %2109 = vdwg.mxu0
    %2110 = vmatpush.msra.mxu0 %v715
    %2111 = vmatpush.msra.mxu0 %v714
    %2112 = vmatpush.msra.mxu0 %v713
    %2113 = vmatpush.msra.mxu0 %v712
    %2114 = vmatpush.msra.mxu0 %v711
    %2115 = vmatpush.msra.mxu0 %v710
    %2116 = vmatpush.msra.mxu0 %v709
    %2117 = vmatpush.msra.mxu0 %v708
    %2118 = vmatpush.msra.mxu0 %v707
    %2119 = vmatpush.msra.mxu0 %v706
    %2120 = vmatpush.msra.mxu0 %v705
    %2121 = vmatpush.msra.mxu0 %v704
    %2122 = vmatpush.msra.mxu0 %v703
    %2123 = vmatpush.msra.mxu0 %v702
    %2124 = vmatpush.msra.mxu0 %v701
    %2125 = vmatpush.msra.mxu0 %v700
    %2126 = vmatmul.f32.gmra.mxu0 %v1190
    %v2127 = vpop.f32.mrf.mxu0
    %v2128 = vadd.f32 %v2108, %v2127
    %2129 = vdwg.mxu0
    %2130 = vmatpush.msra.mxu0 %v731
    %2131 = vmatpush.msra.mxu0 %v730
    %2132 = vmatpush.msra.mxu0 %v729
    %2133 = vmatpush.msra.mxu0 %v728
    %2134 = vmatpush.msra.mxu0 %v727
    %2135 = vmatpush.msra.mxu0 %v726
    %2136 = vmatpush.msra.mxu0 %v725
    %2137 = vmatpush.msra.mxu0 %v724
    %2138 = vmatpush.msra.mxu0 %v723
    %2139 = vmatpush.msra.mxu0 %v722
    %2140 = vmatpush.msra.mxu0 %v721
    %2141 = vmatpush.msra.mxu0 %v720
    %2142 = vmatpush.msra.mxu0 %v719
    %2143 = vmatpush.msra.mxu0 %v718
    %2144 = vmatpush.msra.mxu0 %v717
    %2145 = vmatpush.msra.mxu0 %v716
    %2146 = vmatmul.f32.gmra.mxu0 %v1191
    %v2147 = vpop.f32.mrf.mxu0
    %v2148 = vadd.f32 %v2128, %v2147
    %2149 = vdwg.mxu0
    %2150 = vmatpush.msra.mxu0 %v747
    %2151 = vmatpush.msra.mxu0 %v746
    %2152 = vmatpush.msra.mxu0 %v745
    %2153 = vmatpush.msra.mxu0 %v744
    %2154 = vmatpush.msra.mxu0 %v743
    %2155 = vmatpush.msra.mxu0 %v742
    %2156 = vmatpush.msra.mxu0 %v741
    %2157 = vmatpush.msra.mxu0 %v740
    %2158 = vmatpush.msra.mxu0 %v739
    %2159 = vmatpush.msra.mxu0 %v738
    %2160 = vmatpush.msra.mxu0 %v737
    %2161 = vmatpush.msra.mxu0 %v736
    %2162 = vmatpush.msra.mxu0 %v735
    %2163 = vmatpush.msra.mxu0 %v734
    %2164 = vmatpush.msra.mxu0 %v733
    %2165 = vmatpush.msra.mxu0 %v732
    %2166 = vmatmul.f32.gmra.mxu0 %v1192
    %v2167 = vpop.f32.mrf.mxu0
    %v2168 = vadd.f32 %v2148, %v2167
    %2169 = vdwg.mxu0
    %2170 = vmatpush.msra.mxu0 %v763
    %2171 = vmatpush.msra.mxu0 %v762
    %2172 = vmatpush.msra.mxu0 %v761
    %2173 = vmatpush.msra.mxu0 %v760
    %2174 = vmatpush.msra.mxu0 %v759
    %2175 = vmatpush.msra.mxu0 %v758
    %2176 = vmatpush.msra.mxu0 %v757
    %2177 = vmatpush.msra.mxu0 %v756
    %2178 = vmatpush.msra.mxu0 %v755
    %2179 = vmatpush.msra.mxu0 %v754
    %2180 = vmatpush.msra.mxu0 %v753
    %2181 = vmatpush.msra.mxu0 %v752
    %2182 = vmatpush.msra.mxu0 %v751
    %2183 = vmatpush.msra.mxu0 %v750
    %2184 = vmatpush.msra.mxu0 %v749
    %2185 = vmatpush.msra.mxu0 %v748
    %2186 = vmatmul.f32.gmra.mxu0 %v1193
    %v2187 = vpop.f32.mrf.mxu0
    %v2188 = vadd.f32 %v2168, %v2187
    %2189 = vdwg.mxu0
    %2190 = vmatpush.msra.mxu0 %v779
    %2191 = vmatpush.msra.mxu0 %v778
    %2192 = vmatpush.msra.mxu0 %v777
    %2193 = vmatpush.msra.mxu0 %v776
    %2194 = vmatpush.msra.mxu0 %v775
    %2195 = vmatpush.msra.mxu0 %v774
    %2196 = vmatpush.msra.mxu0 %v773
    %2197 = vmatpush.msra.mxu0 %v772
    %2198 = vmatpush.msra.mxu0 %v771
    %2199 = vmatpush.msra.mxu0 %v770
    %2200 = vmatpush.msra.mxu0 %v769
    %2201 = vmatpush.msra.mxu0 %v768
    %2202 = vmatpush.msra.mxu0 %v767
    %2203 = vmatpush.msra.mxu0 %v766
    %2204 = vmatpush.msra.mxu0 %v765
    %2205 = vmatpush.msra.mxu0 %v764
    %2206 = vmatmul.f32.gmra.mxu0 %v1194
    %v2207 = vpop.f32.mrf.mxu0
    %v2208 = vadd.f32 %v2188, %v2207
    %2209 = vdwg.mxu0
    %2210 = vmatpush.msra.mxu0 %v795
    %2211 = vmatpush.msra.mxu0 %v794
    %2212 = vmatpush.msra.mxu0 %v793
    %2213 = vmatpush.msra.mxu0 %v792
    %2214 = vmatpush.msra.mxu0 %v791
    %2215 = vmatpush.msra.mxu0 %v790
    %2216 = vmatpush.msra.mxu0 %v789
    %2217 = vmatpush.msra.mxu0 %v788
    %2218 = vmatpush.msra.mxu0 %v787
    %2219 = vmatpush.msra.mxu0 %v786
    %2220 = vmatpush.msra.mxu0 %v785
    %2221 = vmatpush.msra.mxu0 %v784
    %2222 = vmatpush.msra.mxu0 %v783
    %2223 = vmatpush.msra.mxu0 %v782
    %2224 = vmatpush.msra.mxu0 %v781
    %2225 = vmatpush.msra.mxu0 %v780
    %2226 = vmatmul.f32.gmra.mxu0 %v1195
    %v2227 = vpop.f32.mrf.mxu0
    %v2228 = vadd.f32 %v2208, %v2227
    %2229 = vdwg.mxu0
    %2230 = vmatpush.msra.mxu0 %v811
    %2231 = vmatpush.msra.mxu0 %v810
    %2232 = vmatpush.msra.mxu0 %v809
    %2233 = vmatpush.msra.mxu0 %v808
    %2234 = vmatpush.msra.mxu0 %v807
    %2235 = vmatpush.msra.mxu0 %v806
    %2236 = vmatpush.msra.mxu0 %v805
    %2237 = vmatpush.msra.mxu0 %v804
    %2238 = vmatpush.msra.mxu0 %v803
    %2239 = vmatpush.msra.mxu0 %v802
    %2240 = vmatpush.msra.mxu0 %v801
    %2241 = vmatpush.msra.mxu0 %v800
    %2242 = vmatpush.msra.mxu0 %v799
    %2243 = vmatpush.msra.mxu0 %v798
    %2244 = vmatpush.msra.mxu0 %v797
    %2245 = vmatpush.msra.mxu0 %v796
    %2246 = vmatmul.f32.gmra.mxu0 %v1196
    %v2247 = vpop.f32.mrf.mxu0
    %v2248 = vadd.f32 %v2228, %v2247
    %2249 = vdwg.mxu0
    %2250 = vmatpush.msra.mxu0 %v827
    %2251 = vmatpush.msra.mxu0 %v826
    %2252 = vmatpush.msra.mxu0 %v825
    %2253 = vmatpush.msra.mxu0 %v824
    %2254 = vmatpush.msra.mxu0 %v823
    %2255 = vmatpush.msra.mxu0 %v822
    %2256 = vmatpush.msra.mxu0 %v821
    %2257 = vmatpush.msra.mxu0 %v820
    %2258 = vmatpush.msra.mxu0 %v819
    %2259 = vmatpush.msra.mxu0 %v818
    %2260 = vmatpush.msra.mxu0 %v817
    %2261 = vmatpush.msra.mxu0 %v816
    %2262 = vmatpush.msra.mxu0 %v815
    %2263 = vmatpush.msra.mxu0 %v814
    %2264 = vmatpush.msra.mxu0 %v813
    %2265 = vmatpush.msra.mxu0 %v812
    %2266 = vmatmul.f32.gmra.mxu0 %v1199
    %v2267 = vpop.f32.mrf.mxu0
    %v2268 = vadd.f32 %v2248, %v2267
    %2269 = vdwg.mxu0
    %2270 = vmatpush.msra.mxu0 %v843
    %2271 = vmatpush.msra.mxu0 %v842
    %2272 = vmatpush.msra.mxu0 %v841
    %2273 = vmatpush.msra.mxu0 %v840
    %2274 = vmatpush.msra.mxu0 %v839
    %2275 = vmatpush.msra.mxu0 %v838
    %2276 = vmatpush.msra.mxu0 %v837
    %2277 = vmatpush.msra.mxu0 %v836
    %2278 = vmatpush.msra.mxu0 %v835
    %2279 = vmatpush.msra.mxu0 %v834
    %2280 = vmatpush.msra.mxu0 %v833
    %2281 = vmatpush.msra.mxu0 %v832
    %2282 = vmatpush.msra.mxu0 %v831
    %2283 = vmatpush.msra.mxu0 %v830
    %2284 = vmatpush.msra.mxu0 %v829
    %2285 = vmatpush.msra.mxu0 %v828
    %2286 = vmatmul.f32.gmra.mxu0 %v1200
    %v2287 = vpop.f32.mrf.mxu0
    %v2288 = vadd.f32 %v2268, %v2287
    %2289 = vdwg.mxu0
    %2290 = vmatpush.msra.mxu0 %v859
    %2291 = vmatpush.msra.mxu0 %v858
    %2292 = vmatpush.msra.mxu0 %v857
    %2293 = vmatpush.msra.mxu0 %v856
    %2294 = vmatpush.msra.mxu0 %v855
    %2295 = vmatpush.msra.mxu0 %v854
    %2296 = vmatpush.msra.mxu0 %v853
    %2297 = vmatpush.msra.mxu0 %v852
    %2298 = vmatpush.msra.mxu0 %v851
    %2299 = vmatpush.msra.mxu0 %v850
    %2300 = vmatpush.msra.mxu0 %v849
    %2301 = vmatpush.msra.mxu0 %v848
    %2302 = vmatpush.msra.mxu0 %v847
    %2303 = vmatpush.msra.mxu0 %v846
    %2304 = vmatpush.msra.mxu0 %v845
    %2305 = vmatpush.msra.mxu0 %v844
    %2306 = vmatmul.f32.gmra.mxu0 %v1201
    %v2307 = vpop.f32.mrf.mxu0
    %v2308 = vadd.f32 %v2288, %v2307
    %2309 = vdwg.mxu0
    %2310 = vmatpush.msra.mxu0 %v875
    %2311 = vmatpush.msra.mxu0 %v874
    %2312 = vmatpush.msra.mxu0 %v873
    %2313 = vmatpush.msra.mxu0 %v872
    %2314 = vmatpush.msra.mxu0 %v871
    %2315 = vmatpush.msra.mxu0 %v870
    %2316 = vmatpush.msra.mxu0 %v869
    %2317 = vmatpush.msra.mxu0 %v868
    %2318 = vmatpush.msra.mxu0 %v867
    %2319 = vmatpush.msra.mxu0 %v866
    %2320 = vmatpush.msra.mxu0 %v865
    %2321 = vmatpush.msra.mxu0 %v864
    %2322 = vmatpush.msra.mxu0 %v863
    %2323 = vmatpush.msra.mxu0 %v862
    %2324 = vmatpush.msra.mxu0 %v861
    %2325 = vmatpush.msra.mxu0 %v860
    %2326 = vmatmul.f32.gmra.mxu0 %v1202
    %v2327 = vpop.f32.mrf.mxu0
    %v2328 = vadd.f32 %v2308, %v2327
    %2329 = vdwg.mxu0
    %2330 = vmatpush.msra.mxu0 %v891
    %2331 = vmatpush.msra.mxu0 %v890
    %2332 = vmatpush.msra.mxu0 %v889
    %2333 = vmatpush.msra.mxu0 %v888
    %2334 = vmatpush.msra.mxu0 %v887
    %2335 = vmatpush.msra.mxu0 %v886
    %2336 = vmatpush.msra.mxu0 %v885
    %2337 = vmatpush.msra.mxu0 %v884
    %2338 = vmatpush.msra.mxu0 %v883
    %2339 = vmatpush.msra.mxu0 %v882
    %2340 = vmatpush.msra.mxu0 %v881
    %2341 = vmatpush.msra.mxu0 %v880
    %2342 = vmatpush.msra.mxu0 %v879
    %2343 = vmatpush.msra.mxu0 %v878
    %2344 = vmatpush.msra.mxu0 %v877
    %2345 = vmatpush.msra.mxu0 %v876
    %2346 = vmatmul.f32.gmra.mxu0 %v1203
    %v2347 = vpop.f32.mrf.mxu0
    %v2348 = vadd.f32 %v2328, %v2347
    %2349 = vdwg.mxu0
    %2350 = vmatpush.msra.mxu0 %v907
    %2351 = vmatpush.msra.mxu0 %v906
    %2352 = vmatpush.msra.mxu0 %v905
    %2353 = vmatpush.msra.mxu0 %v904
    %2354 = vmatpush.msra.mxu0 %v903
    %2355 = vmatpush.msra.mxu0 %v902
    %2356 = vmatpush.msra.mxu0 %v901
    %2357 = vmatpush.msra.mxu0 %v900
    %2358 = vmatpush.msra.mxu0 %v899
    %2359 = vmatpush.msra.mxu0 %v898
    %2360 = vmatpush.msra.mxu0 %v897
    %2361 = vmatpush.msra.mxu0 %v896
    %2362 = vmatpush.msra.mxu0 %v895
    %2363 = vmatpush.msra.mxu0 %v894
    %2364 = vmatpush.msra.mxu0 %v893
    %2365 = vmatpush.msra.mxu0 %v892
    %2366 = vmatmul.f32.gmra.mxu0 %v1204
    %v2367 = vpop.f32.mrf.mxu0
    %v2368 = vadd.f32 %v2348, %v2367
    %2369 = vdwg.mxu0
    %2370 = vmatpush.msra.mxu0 %v923
    %2371 = vmatpush.msra.mxu0 %v922
    %2372 = vmatpush.msra.mxu0 %v921
    %2373 = vmatpush.msra.mxu0 %v920
    %2374 = vmatpush.msra.mxu0 %v919
    %2375 = vmatpush.msra.mxu0 %v918
    %2376 = vmatpush.msra.mxu0 %v917
    %2377 = vmatpush.msra.mxu0 %v916
    %2378 = vmatpush.msra.mxu0 %v915
    %2379 = vmatpush.msra.mxu0 %v914
    %2380 = vmatpush.msra.mxu0 %v913
    %2381 = vmatpush.msra.mxu0 %v912
    %2382 = vmatpush.msra.mxu0 %v911
    %2383 = vmatpush.msra.mxu0 %v910
    %2384 = vmatpush.msra.mxu0 %v909
    %2385 = vmatpush.msra.mxu0 %v908
    %2386 = vmatmul.f32.gmra.mxu0 %v1205
    %v2387 = vpop.f32.mrf.mxu0
    %v2388 = vadd.f32 %v2368, %v2387
    %2389 = vdwg.mxu0
    %2390 = vmatpush.msra.mxu0 %v939
    %2391 = vmatpush.msra.mxu0 %v938
    %2392 = vmatpush.msra.mxu0 %v937
    %2393 = vmatpush.msra.mxu0 %v936
    %2394 = vmatpush.msra.mxu0 %v935
    %2395 = vmatpush.msra.mxu0 %v934
    %2396 = vmatpush.msra.mxu0 %v933
    %2397 = vmatpush.msra.mxu0 %v932
    %2398 = vmatpush.msra.mxu0 %v931
    %2399 = vmatpush.msra.mxu0 %v930
    %2400 = vmatpush.msra.mxu0 %v929
    %2401 = vmatpush.msra.mxu0 %v928
    %2402 = vmatpush.msra.mxu0 %v927
    %2403 = vmatpush.msra.mxu0 %v926
    %2404 = vmatpush.msra.mxu0 %v925
    %2405 = vmatpush.msra.mxu0 %v924
    %2406 = vmatmul.f32.gmra.mxu0 %v1206
    %v2407 = vpop.f32.mrf.mxu0
    %v2408 = vadd.f32 %v2388, %v2407
    %2409 = vdwg.mxu0
    %2410 = vmatpush.msra.mxu0 %v955
    %2411 = vmatpush.msra.mxu0 %v954
    %2412 = vmatpush.msra.mxu0 %v953
    %2413 = vmatpush.msra.mxu0 %v952
    %2414 = vmatpush.msra.mxu0 %v951
    %2415 = vmatpush.msra.mxu0 %v950
    %2416 = vmatpush.msra.mxu0 %v949
    %2417 = vmatpush.msra.mxu0 %v948
    %2418 = vmatpush.msra.mxu0 %v947
    %2419 = vmatpush.msra.mxu0 %v946
    %2420 = vmatpush.msra.mxu0 %v945
    %2421 = vmatpush.msra.mxu0 %v944
    %2422 = vmatpush.msra.mxu0 %v943
    %2423 = vmatpush.msra.mxu0 %v942
    %2424 = vmatpush.msra.mxu0 %v941
    %2425 = vmatpush.msra.mxu0 %v940
    %2426 = vmatmul.f32.gmra.mxu0 %v1209
    %v2427 = vpop.f32.mrf.mxu0
    %v2428 = vadd.f32 %v2408, %v2427
    %2429 = vdwg.mxu0
    %2430 = vmatpush.msra.mxu0 %v971
    %2431 = vmatpush.msra.mxu0 %v970
    %2432 = vmatpush.msra.mxu0 %v969
    %2433 = vmatpush.msra.mxu0 %v968
    %2434 = vmatpush.msra.mxu0 %v967
    %2435 = vmatpush.msra.mxu0 %v966
    %2436 = vmatpush.msra.mxu0 %v965
    %2437 = vmatpush.msra.mxu0 %v964
    %2438 = vmatpush.msra.mxu0 %v963
    %2439 = vmatpush.msra.mxu0 %v962
    %2440 = vmatpush.msra.mxu0 %v961
    %2441 = vmatpush.msra.mxu0 %v960
    %2442 = vmatpush.msra.mxu0 %v959
    %2443 = vmatpush.msra.mxu0 %v958
    %2444 = vmatpush.msra.mxu0 %v957
    %2445 = vmatpush.msra.mxu0 %v956
    %2446 = vmatmul.f32.gmra.mxu0 %v1210
    %v2447 = vpop.f32.mrf.mxu0
    %v2448 = vadd.f32 %v2428, %v2447
    %2449 = vdwg.mxu0
    %2450 = vmatpush.msra.mxu0 %v987
    %2451 = vmatpush.msra.mxu0 %v986
    %2452 = vmatpush.msra.mxu0 %v985
    %2453 = vmatpush.msra.mxu0 %v984
    %2454 = vmatpush.msra.mxu0 %v983
    %2455 = vmatpush.msra.mxu0 %v982
    %2456 = vmatpush.msra.mxu0 %v981
    %2457 = vmatpush.msra.mxu0 %v980
    %2458 = vmatpush.msra.mxu0 %v979
    %2459 = vmatpush.msra.mxu0 %v978
    %2460 = vmatpush.msra.mxu0 %v977
    %2461 = vmatpush.msra.mxu0 %v976
    %2462 = vmatpush.msra.mxu0 %v975
    %2463 = vmatpush.msra.mxu0 %v974
    %2464 = vmatpush.msra.mxu0 %v973
    %2465 = vmatpush.msra.mxu0 %v972
    %2466 = vmatmul.f32.gmra.mxu0 %v1211
    %v2467 = vpop.f32.mrf.mxu0
    %v2468 = vadd.f32 %v2448, %v2467
    %2469 = vdwg.mxu0
    %2470 = vmatpush.msra.mxu0 %v1003
    %2471 = vmatpush.msra.mxu0 %v1002
    %2472 = vmatpush.msra.mxu0 %v1001
    %2473 = vmatpush.msra.mxu0 %v1000
    %2474 = vmatpush.msra.mxu0 %v999
    %2475 = vmatpush.msra.mxu0 %v998
    %2476 = vmatpush.msra.mxu0 %v997
    %2477 = vmatpush.msra.mxu0 %v996
    %2478 = vmatpush.msra.mxu0 %v995
    %2479 = vmatpush.msra.mxu0 %v994
    %2480 = vmatpush.msra.mxu0 %v993
    %2481 = vmatpush.msra.mxu0 %v992
    %2482 = vmatpush.msra.mxu0 %v991
    %2483 = vmatpush.msra.mxu0 %v990
    %2484 = vmatpush.msra.mxu0 %v989
    %2485 = vmatpush.msra.mxu0 %v988
    %2486 = vmatmul.f32.gmra.mxu0 %v1212
    %v2487 = vpop.f32.mrf.mxu0
    %v2488 = vadd.f32 %v2468, %v2487
    %2489 = vdwg.mxu0
    %2490 = vmatpush.msra.mxu0 %v1019
    %2491 = vmatpush.msra.mxu0 %v1018
    %2492 = vmatpush.msra.mxu0 %v1017
    %2493 = vmatpush.msra.mxu0 %v1016
    %2494 = vmatpush.msra.mxu0 %v1015
    %2495 = vmatpush.msra.mxu0 %v1014
    %2496 = vmatpush.msra.mxu0 %v1013
    %2497 = vmatpush.msra.mxu0 %v1012
    %2498 = vmatpush.msra.mxu0 %v1011
    %2499 = vmatpush.msra.mxu0 %v1010
    %2500 = vmatpush.msra.mxu0 %v1009
    %2501 = vmatpush.msra.mxu0 %v1008
    %2502 = vmatpush.msra.mxu0 %v1007
    %2503 = vmatpush.msra.mxu0 %v1006
    %2504 = vmatpush.msra.mxu0 %v1005
    %2505 = vmatpush.msra.mxu0 %v1004
    %2506 = vmatmul.f32.gmra.mxu0 %v1213
    %v2507 = vpop.f32.mrf.mxu0
    %v2508 = vadd.f32 %v2488, %v2507
    %2509 = vdwg.mxu0
    %2510 = vmatpush.msra.mxu0 %v1035
    %2511 = vmatpush.msra.mxu0 %v1034
    %2512 = vmatpush.msra.mxu0 %v1033
    %2513 = vmatpush.msra.mxu0 %v1032
    %2514 = vmatpush.msra.mxu0 %v1031
    %2515 = vmatpush.msra.mxu0 %v1030
    %2516 = vmatpush.msra.mxu0 %v1029
    %2517 = vmatpush.msra.mxu0 %v1028
    %2518 = vmatpush.msra.mxu0 %v1027
    %2519 = vmatpush.msra.mxu0 %v1026
    %2520 = vmatpush.msra.mxu0 %v1025
    %2521 = vmatpush.msra.mxu0 %v1024
    %2522 = vmatpush.msra.mxu0 %v1023
    %2523 = vmatpush.msra.mxu0 %v1022
    %2524 = vmatpush.msra.mxu0 %v1021
    %2525 = vmatpush.msra.mxu0 %v1020
    %2526 = vmatmul.f32.gmra.mxu0 %v1214
    %v2527 = vpop.f32.mrf.mxu0
    %v2528 = vadd.f32 %v2508, %v2527
    %2529 = vdwg.mxu0
    %2530 = vmatpush.msra.mxu0 %v1051
    %2531 = vmatpush.msra.mxu0 %v1050
    %2532 = vmatpush.msra.mxu0 %v1049
    %2533 = vmatpush.msra.mxu0 %v1048
    %2534 = vmatpush.msra.mxu0 %v1047
    %2535 = vmatpush.msra.mxu0 %v1046
    %2536 = vmatpush.msra.mxu0 %v1045
    %2537 = vmatpush.msra.mxu0 %v1044
    %2538 = vmatpush.msra.mxu0 %v1043
    %2539 = vmatpush.msra.mxu0 %v1042
    %2540 = vmatpush.msra.mxu0 %v1041
    %2541 = vmatpush.msra.mxu0 %v1040
    %2542 = vmatpush.msra.mxu0 %v1039
    %2543 = vmatpush.msra.mxu0 %v1038
    %2544 = vmatpush.msra.mxu0 %v1037
    %2545 = vmatpush.msra.mxu0 %v1036
    %2546 = vmatmul.f32.gmra.mxu0 %v1215
    %v2547 = vpop.f32.mrf.mxu0
    %v2548 = vadd.f32 %v2528, %v2547
    %2549 = vdwg.mxu0
    %2550 = vmatpush.msra.mxu0 %v1067
    %2551 = vmatpush.msra.mxu0 %v1066
    %2552 = vmatpush.msra.mxu0 %v1065
    %2553 = vmatpush.msra.mxu0 %v1064
    %2554 = vmatpush.msra.mxu0 %v1063
    %2555 = vmatpush.msra.mxu0 %v1062
    %2556 = vmatpush.msra.mxu0 %v1061
    %2557 = vmatpush.msra.mxu0 %v1060
    %2558 = vmatpush.msra.mxu0 %v1059
    %2559 = vmatpush.msra.mxu0 %v1058
    %2560 = vmatpush.msra.mxu0 %v1057
    %2561 = vmatpush.msra.mxu0 %v1056
    %2562 = vmatpush.msra.mxu0 %v1055
    %2563 = vmatpush.msra.mxu0 %v1054
    %2564 = vmatpush.msra.mxu0 %v1053
    %2565 = vmatpush.msra.mxu0 %v1052
    %2566 = vmatmul.f32.gmra.mxu0 %v1216
    %v2567 = vpop.f32.mrf.mxu0
    %v2568 = vadd.f32 %v2548, %v2567
    %2569 = vdwg.mxu0
    %2570 = vmatpush.msra.mxu0 %v1083
    %2571 = vmatpush.msra.mxu0 %v1082
    %2572 = vmatpush.msra.mxu0 %v1081
    %2573 = vmatpush.msra.mxu0 %v1080
    %2574 = vmatpush.msra.mxu0 %v1079
    %2575 = vmatpush.msra.mxu0 %v1078
    %2576 = vmatpush.msra.mxu0 %v1077
    %2577 = vmatpush.msra.mxu0 %v1076
    %2578 = vmatpush.msra.mxu0 %v1075
    %2579 = vmatpush.msra.mxu0 %v1074
    %2580 = vmatpush.msra.mxu0 %v1073
    %2581 = vmatpush.msra.mxu0 %v1072
    %2582 = vmatpush.msra.mxu0 %v1071
    %2583 = vmatpush.msra.mxu0 %v1070
    %2584 = vmatpush.msra.mxu0 %v1069
    %2585 = vmatpush.msra.mxu0 %v1068
    %2586 = vmatmul.f32.gmra.mxu0 %v1218
    %v2587 = vpop.f32.mrf.mxu0
    %v2588 = vadd.f32 %v2568, %v2587
    %2589 = vdwg.mxu0
    %2590 = vmatpush.msra.mxu0 %v1099
    %2591 = vmatpush.msra.mxu0 %v1098
    %2592 = vmatpush.msra.mxu0 %v1097
    %2593 = vmatpush.msra.mxu0 %v1096
    %2594 = vmatpush.msra.mxu0 %v1095
    %2595 = vmatpush.msra.mxu0 %v1094
    %2596 = vmatpush.msra.mxu0 %v1093
    %2597 = vmatpush.msra.mxu0 %v1092
    %2598 = vmatpush.msra.mxu0 %v1091
    %2599 = vmatpush.msra.mxu0 %v1090
    %2600 = vmatpush.msra.mxu0 %v1089
    %2601 = vmatpush.msra.mxu0 %v1088
    %2602 = vmatpush.msra.mxu0 %v1087
    %2603 = vmatpush.msra.mxu0 %v1086
    %2604 = vmatpush.msra.mxu0 %v1085
    %2605 = vmatpush.msra.mxu0 %v1084
    %2606 = vmatmul.f32.gmra.mxu0 %v1219
    %v2607 = vpop.f32.mrf.mxu0
    %v2608 = vadd.f32 %v2588, %v2607
    %2609 = vdwg.mxu0
    %2610 = vmatpush.msra.mxu0 0.0
    %2611 = vmatpush.msra.mxu0 %v1114
    %2612 = vmatpush.msra.mxu0 %v1113
    %2613 = vmatpush.msra.mxu0 %v1112
    %2614 = vmatpush.msra.mxu0 %v1111
    %2615 = vmatpush.msra.mxu0 %v1110
    %2616 = vmatpush.msra.mxu0 %v1109
    %2617 = vmatpush.msra.mxu0 %v1108
    %2618 = vmatpush.msra.mxu0 %v1107
    %2619 = vmatpush.msra.mxu0 %v1106
    %2620 = vmatpush.msra.mxu0 %v1105
    %2621 = vmatpush.msra.mxu0 %v1104
    %2622 = vmatpush.msra.mxu0 %v1103
    %2623 = vmatpush.msra.mxu0 %v1102
    %2624 = vmatpush.msra.mxu0 %v1101
    %2625 = vmatpush.msra.mxu0 %v1100
    %2626 = vmatmul.f32.gmra.mxu0 %v1288
    %v2627 = vpop.f32.mrf.mxu0
    %v2628 = vadd.f32 %v2608, %v2627
    %2629 = vdwg.mxu0
    %v2630 = vmax.f32 %v2628, 0.0
    %v2631 = vld [vmem:[%s3] sm:$0xff]
    %v2632 = vld [vmem:[%s3 + $0x8] sm:$0xff]
    %v2633 = vld [vmem:[%s3 + $0x10] sm:$0xff]
    %v2634 = vld [vmem:[%s3 + $0x18] sm:$0xff]
    %v2635 = vld [vmem:[%s4] sm:$0x1]
    %v2637 = vperm.slane %v2635, 0
    %vm2639 = vcmask 261120
    %v2641 = vsel %vm2639, %v2630, 0
    %2643 = vmatpush.msra.mxu0 0.0
    %2644 = vmatpush.msra.mxu0 0.0
    %2645 = vmatpush.msra.mxu0 0.0
    %2646 = vmatpush.msra.mxu0 0.0
    %2647 = vmatpush.msra.mxu0 0.0
    %2648 = vmatpush.msra.mxu0 0.0
    %2649 = vmatpush.msra.mxu0 0.0
    %2650 = vmatpush.msra.mxu0 0.0
    %2651 = vmatpush.msra.mxu0 0.0
    %2652 = vmatpush.msra.mxu0 0.0
    %2653 = vmatpush.msra.mxu0 0.0
    %2654 = vmatpush.msra.mxu0 0.0
    %2655 = vmatpush.msra.mxu0 %v2634
    %2656 = vmatpush.msra.mxu0 %v2633
    %2657 = vmatpush.msra.mxu0 %v2632
    %2658 = vmatpush.msra.mxu0 %v2631
    %2659 = vmatmul.f32.gmra.mxu0 %v2641
    %v2660 = vpop.f32.mrf.mxu0
    %v2661 = vadd.f32 %v2637, %v2660
    %2662 = vdwg.mxu0
    %v2663 = vmax.f32 %v2661, 0.0
    %v2664 = vld [vmem:[%s5] sm:$0xff]
    %v2665 = vld [vmem:[%s5 + $0x8] sm:$0xff]
    %v2666 = vld [vmem:[%s5 + $0x10] sm:$0xff]
    %v2667 = vld [vmem:[%s5 + $0x18] sm:$0xff]
    %v2668 = vld [vmem:[%s5 + $0x20] sm:$0xff]
    %v2669 = vld [vmem:[%s5 + $0x28] sm:$0xff]
    %v2670 = vld [vmem:[%s5 + $0x30] sm:$0xff]
    %v2671 = vld [vmem:[%s5 + $0x38] sm:$0xff]
    %v2672 = vld [vmem:[%s5 + $0x40] sm:$0xff]
    %v2673 = vld [vmem:[%s5 + $0x48] sm:$0xff]
    %v2674 = vld [vmem:[%s5 + $0x50] sm:$0xff]
    %v2675 = vld [vmem:[%s5 + $0x58] sm:$0xff]
    %v2676 = vld [vmem:[%s5 + $0x60] sm:$0xff]
    %v2677 = vld [vmem:[%s5 + $0x68] sm:$0xff]
    %v2678 = vld [vmem:[%s5 + $0x70] sm:$0xff]
    %v2679 = vld [vmem:[%s5 + $0x78] sm:$0xff]
    %v2680 = vld [vmem:[%s5 + $0x80] sm:$0xff]
    %v2681 = vld [vmem:[%s5 + $0x88] sm:$0xff]
    %v2682 = vld [vmem:[%s5 + $0x90] sm:$0xff]
    %v2683 = vld [vmem:[%s5 + $0x98] sm:$0xff]
    %v2684 = vld [vmem:[%s5 + $0xa0] sm:$0xff]
    %v2685 = vld [vmem:[%s5 + $0xa8] sm:$0xff]
    %v2686 = vld [vmem:[%s5 + $0xb0] sm:$0xff]
    %v2687 = vld [vmem:[%s5 + $0xb8] sm:$0xff]
    %v2688 = vld [vmem:[%s5 + $0xc0] sm:$0xff]
    %v2689 = vld [vmem:[%s5 + $0xc8] sm:$0xff]
    %v2690 = vld [vmem:[%s5 + $0xd0] sm:$0xff]
    %v2691 = vld [vmem:[%s5 + $0xd8] sm:$0xff]
    %v2692 = vld [vmem:[%s5 + $0xe0] sm:$0xff]
    %v2693 = vld [vmem:[%s5 + $0xe8] sm:$0xff]
    %v2694 = vld [vmem:[%s5 + $0xf0] sm:$0xff]
    %v2695 = vld [vmem:[%s5 + $0xf8] sm:$0xff]
    %v2696 = vld [vmem:[%s5 + $0x100] sm:$0xff]
    %v2697 = vld [vmem:[%s5 + $0x108] sm:$0xff]
    %v2698 = vld [vmem:[%s5 + $0x110] sm:$0xff]
    %v2699 = vld [vmem:[%s5 + $0x118] sm:$0xff]
    %v2700 = vld [vmem:[%s5 + $0x120] sm:$0xff]
    %v2701 = vld [vmem:[%s5 + $0x128] sm:$0xff]
    %v2702 = vld [vmem:[%s5 + $0x130] sm:$0xff]
    %v2703 = vld [vmem:[%s5 + $0x138] sm:$0xff]
    %v2704 = vld [vmem:[%s5 + $0x140] sm:$0xff]
    %v2705 = vld [vmem:[%s5 + $0x148] sm:$0xff]
    %v2706 = vld [vmem:[%s5 + $0x150] sm:$0xff]
    %v2707 = vld [vmem:[%s5 + $0x158] sm:$0xff]
    %v2708 = vld [vmem:[%s5 + $0x160] sm:$0xff]
    %v2709 = vld [vmem:[%s5 + $0x168] sm:$0xff]
    %v2710 = vld [vmem:[%s5 + $0x170] sm:$0xff]
    %v2711 = vld [vmem:[%s5 + $0x178] sm:$0xff]
    %v2712 = vld [vmem:[%s5 + $0x180] sm:$0xff]
    %v2713 = vld [vmem:[%s5 + $0x188] sm:$0xff]
    %v2714 = vld [vmem:[%s5 + $0x190] sm:$0xff]
    %v2715 = vld [vmem:[%s5 + $0x198] sm:$0xff]
    %v2716 = vld [vmem:[%s5 + $0x1a0] sm:$0xff]
    %v2717 = vld [vmem:[%s5 + $0x1a8] sm:$0xff]
    %v2718 = vld [vmem:[%s5 + $0x1b0] sm:$0xff]
    %v2719 = vld [vmem:[%s5 + $0x1b8] sm:$0xff]
    %v2720 = vld [vmem:[%s5 + $0x1c0] sm:$0xff]
    %v2721 = vld [vmem:[%s5 + $0x1c8] sm:$0xff]
    %v2722 = vld [vmem:[%s5 + $0x1d0] sm:$0xff]
    %v2723 = vld [vmem:[%s5 + $0x1d8] sm:$0xff]
    %v2724 = vld [vmem:[%s5 + $0x1e0] sm:$0xff]
    %v2725 = vld [vmem:[%s5 + $0x1e8] sm:$0xff]
    %v2726 = vld [vmem:[%s5 + $0x1f0] sm:$0xff]
    %v2727 = vld [vmem:[%s5 + $0x1f8] sm:$0xff]
    %v2728 = vld [vmem:[%s5 + $0x200] sm:$0xff]
    %v2729 = vld [vmem:[%s5 + $0x208] sm:$0xff]
    %v2730 = vld [vmem:[%s5 + $0x210] sm:$0xff]
    %v2731 = vld [vmem:[%s5 + $0x218] sm:$0xff]
    %v2732 = vld [vmem:[%s5 + $0x220] sm:$0xff]
    %v2733 = vld [vmem:[%s5 + $0x228] sm:$0xff]
    %v2734 = vld [vmem:[%s5 + $0x230] sm:$0xff]
    %v2735 = vld [vmem:[%s5 + $0x238] sm:$0xff]
    %v2736 = vld [vmem:[%s5 + $0x240] sm:$0xff]
    %v2737 = vld [vmem:[%s5 + $0x248] sm:$0xff]
    %v2738 = vld [vmem:[%s5 + $0x250] sm:$0xff]
    %v2739 = vld [vmem:[%s5 + $0x258] sm:$0xff]
    %v2740 = vld [vmem:[%s5 + $0x260] sm:$0xff]
    %v2741 = vld [vmem:[%s5 + $0x268] sm:$0xff]
    %v2742 = vld [vmem:[%s5 + $0x270] sm:$0xff]
    %v2743 = vld [vmem:[%s5 + $0x278] sm:$0xff]
    %v2744 = vld [vmem:[%s5 + $0x280] sm:$0xff]
    %v2745 = vld [vmem:[%s5 + $0x288] sm:$0xff]
    %v2746 = vld [vmem:[%s5 + $0x290] sm:$0xff]
    %v2747 = vld [vmem:[%s5 + $0x298] sm:$0xff]
    %v2748 = vld [vmem:[%s5 + $0x2a0] sm:$0xff]
    %v2749 = vld [vmem:[%s5 + $0x2a8] sm:$0xff]
    %v2750 = vld [vmem:[%s5 + $0x2b0] sm:$0xff]
    %v2751 = vld [vmem:[%s5 + $0x2b8] sm:$0xff]
    %v2752 = vld [vmem:[%s5 + $0x2c0] sm:$0xff]
    %v2753 = vld [vmem:[%s5 + $0x2c8] sm:$0xff]
    %v2754 = vld [vmem:[%s5 + $0x2d0] sm:$0xff]
    %v2755 = vld [vmem:[%s5 + $0x2d8] sm:$0xff]
    %v2756 = vld [vmem:[%s5 + $0x2e0] sm:$0xff]
    %v2757 = vld [vmem:[%s5 + $0x2e8] sm:$0xff]
    %v2758 = vld [vmem:[%s5 + $0x2f0] sm:$0xff]
    %v2759 = vld [vmem:[%s5 + $0x2f8] sm:$0xff]
    %v2760 = vld [vmem:[%s5 + $0x300] sm:$0xff]
    %v2761 = vld [vmem:[%s5 + $0x308] sm:$0xff]
    %v2762 = vld [vmem:[%s5 + $0x310] sm:$0xff]
    %v2763 = vld [vmem:[%s5 + $0x318] sm:$0xff]
    %v2764 = vld [vmem:[%s5 + $0x320] sm:$0xff]
    %v2765 = vld [vmem:[%s5 + $0x328] sm:$0xff]
    %v2766 = vld [vmem:[%s5 + $0x330] sm:$0xff]
    %v2767 = vld [vmem:[%s5 + $0x338] sm:$0xff]
    %v2768 = vld [vmem:[%s5 + $0x340] sm:$0xff]
    %v2769 = vld [vmem:[%s5 + $0x348] sm:$0xff]
    %v2770 = vld [vmem:[%s5 + $0x350] sm:$0xff]
    %v2771 = vld [vmem:[%s5 + $0x358] sm:$0xff]
    %v2772 = vld [vmem:[%s5 + $0x360] sm:$0xff]
    %v2773 = vld [vmem:[%s5 + $0x368] sm:$0xff]
    %v2774 = vld [vmem:[%s5 + $0x370] sm:$0xff]
    %v2775 = vld [vmem:[%s5 + $0x378] sm:$0xff]
    %v2776 = vld [vmem:[%s5 + $0x380] sm:$0xff]
    %v2777 = vld [vmem:[%s5 + $0x388] sm:$0xff]
    %v2778 = vld [vmem:[%s5 + $0x390] sm:$0xff]
    %v2779 = vld [vmem:[%s5 + $0x398] sm:$0xff]
    %v2780 = vld [vmem:[%s5 + $0x3a0] sm:$0xff]
    %v2781 = vld [vmem:[%s5 + $0x3a8] sm:$0xff]
    %v2782 = vld [vmem:[%s5 + $0x3b0] sm:$0xff]
    %v2783 = vld [vmem:[%s5 + $0x3b8] sm:$0xff]
    %v2784 = vld [vmem:[%s5 + $0x3c0] sm:$0xff]
    %v2785 = vld [vmem:[%s5 + $0x3c8] sm:$0xff]
    %v2786 = vld [vmem:[%s5 + $0x3d0] sm:$0xff]
    %v2787 = vld [vmem:[%s5 + $0x3d8] sm:$0xff]
    %v2788 = vld [vmem:[%s5 + $0x3e0] sm:$0xff]
    %v2789 = vld [vmem:[%s5 + $0x3e8] sm:$0xff]
    %v2790 = vld [vmem:[%s5 + $0x3f0] sm:$0xff]
    %v2791 = vld [vmem:[%s5 + $0x3f8] sm:$0xff]
    %v2792 = vld [vmem:[%s5 + $0x400] sm:$0xff]
    %v2793 = vld [vmem:[%s5 + $0x408] sm:$0xff]
    %v2794 = vld [vmem:[%s5 + $0x410] sm:$0xff]
    %v2795 = vld [vmem:[%s5 + $0x418] sm:$0xff]
    %v2796 = vld [vmem:[%s5 + $0x420] sm:$0xff]
    %v2797 = vld [vmem:[%s5 + $0x428] sm:$0xff]
    %v2798 = vld [vmem:[%s5 + $0x430] sm:$0xff]
    %v2799 = vld [vmem:[%s5 + $0x438] sm:$0xff]
    %v2800 = vld [vmem:[%s5 + $0x440] sm:$0xff]
    %v2801 = vld [vmem:[%s5 + $0x448] sm:$0xff]
    %v2802 = vld [vmem:[%s5 + $0x450] sm:$0xff]
    %v2803 = vld [vmem:[%s5 + $0x458] sm:$0xff]
    %v2804 = vld [vmem:[%s5 + $0x460] sm:$0xff]
    %v2805 = vld [vmem:[%s5 + $0x468] sm:$0xff]
    %v2806 = vld [vmem:[%s5 + $0x470] sm:$0xff]
    %v2807 = vld [vmem:[%s5 + $0x478] sm:$0xff]
    %v2808 = vld [vmem:[%s5 + $0x480] sm:$0xff]
    %v2809 = vld [vmem:[%s5 + $0x488] sm:$0xff]
    %v2810 = vld [vmem:[%s5 + $0x490] sm:$0xff]
    %v2811 = vld [vmem:[%s5 + $0x498] sm:$0xff]
    %v2812 = vld [vmem:[%s5 + $0x4a0] sm:$0xff]
    %v2813 = vld [vmem:[%s5 + $0x4a8] sm:$0xff]
    %v2814 = vld [vmem:[%s5 + $0x4b0] sm:$0xff]
    %v2815 = vld [vmem:[%s5 + $0x4b8] sm:$0xff]
    %v2816 = vld [vmem:[%s5 + $0x4c0] sm:$0xff]
    %v2817 = vld [vmem:[%s5 + $0x4c8] sm:$0xff]
    %v2818 = vld [vmem:[%s5 + $0x4d0] sm:$0xff]
    %v2819 = vld [vmem:[%s5 + $0x4d8] sm:$0xff]
    %v2820 = vld [vmem:[%s5 + $0x4e0] sm:$0xff]
    %v2821 = vld [vmem:[%s5 + $0x4e8] sm:$0xff]
    %v2822 = vld [vmem:[%s5 + $0x4f0] sm:$0xff]
    %v2823 = vld [vmem:[%s5 + $0x4f8] sm:$0xff]
    %v2824 = vld [vmem:[%s5 + $0x500] sm:$0xff]
    %v2825 = vld [vmem:[%s5 + $0x508] sm:$0xff]
    %v2826 = vld [vmem:[%s5 + $0x510] sm:$0xff]
    %v2827 = vld [vmem:[%s5 + $0x518] sm:$0xff]
    %v2828 = vld [vmem:[%s5 + $0x520] sm:$0xff]
    %v2829 = vld [vmem:[%s5 + $0x528] sm:$0xff]
    %v2830 = vld [vmem:[%s5 + $0x530] sm:$0xff]
    %v2831 = vld [vmem:[%s5 + $0x538] sm:$0xff]
    %v2832 = vld [vmem:[%s5 + $0x540] sm:$0xff]
    %v2833 = vld [vmem:[%s5 + $0x548] sm:$0xff]
    %v2834 = vld [vmem:[%s5 + $0x550] sm:$0xff]
    %v2835 = vld [vmem:[%s5 + $0x558] sm:$0xff]
    %v2836 = vld [vmem:[%s5 + $0x560] sm:$0xff]
    %v2837 = vld [vmem:[%s5 + $0x568] sm:$0xff]
    %v2838 = vld [vmem:[%s5 + $0x570] sm:$0xff]
    %v2839 = vld [vmem:[%s5 + $0x578] sm:$0xff]
    %v2840 = vld [vmem:[%s5 + $0x580] sm:$0xff]
    %v2841 = vld [vmem:[%s5 + $0x588] sm:$0xff]
    %v2842 = vld [vmem:[%s5 + $0x590] sm:$0xff]
    %v2843 = vld [vmem:[%s5 + $0x598] sm:$0xff]
    %v2844 = vld [vmem:[%s5 + $0x5a0] sm:$0xff]
    %v2845 = vld [vmem:[%s5 + $0x5a8] sm:$0xff]
    %v2846 = vld [vmem:[%s5 + $0x5b0] sm:$0xff]
    %v2847 = vld [vmem:[%s5 + $0x5b8] sm:$0xff]
    %v2848 = vld [vmem:[%s5 + $0x5c0] sm:$0xff]
    %v2849 = vld [vmem:[%s5 + $0x5c8] sm:$0xff]
    %v2850 = vld [vmem:[%s5 + $0x5d0] sm:$0xff]
    %v2851 = vld [vmem:[%s5 + $0x5d8] sm:$0xff]
    %v2852 = vld [vmem:[%s5 + $0x5e0] sm:$0xff]
    %v2853 = vld [vmem:[%s5 + $0x5e8] sm:$0xff]
    %v2854 = vld [vmem:[%s5 + $0x5f0] sm:$0xff]
    %v2855 = vld [vmem:[%s5 + $0x5f8] sm:$0xff]
    %v2856 = vld [vmem:[%s5 + $0x600] sm:$0xff]
    %v2857 = vld [vmem:[%s5 + $0x608] sm:$0xff]
    %v2858 = vld [vmem:[%s5 + $0x610] sm:$0xff]
    %v2859 = vld [vmem:[%s5 + $0x618] sm:$0xff]
    %v2860 = vld [vmem:[%s5 + $0x620] sm:$0xff]
    %v2861 = vld [vmem:[%s5 + $0x628] sm:$0xff]
    %v2862 = vld [vmem:[%s5 + $0x630] sm:$0xff]
    %v2863 = vld [vmem:[%s5 + $0x638] sm:$0xff]
    %v2864 = vld [vmem:[%s5 + $0x640] sm:$0xff]
    %v2865 = vld [vmem:[%s5 + $0x648] sm:$0xff]
    %v2866 = vld [vmem:[%s5 + $0x650] sm:$0xff]
    %v2867 = vld [vmem:[%s5 + $0x658] sm:$0xff]
    %v2868 = vld [vmem:[%s5 + $0x660] sm:$0xff]
    %v2869 = vld [vmem:[%s5 + $0x668] sm:$0xff]
    %v2870 = vld [vmem:[%s5 + $0x670] sm:$0xff]
    %v2871 = vld [vmem:[%s5 + $0x678] sm:$0xff]
    %v2872 = vld [vmem:[%s5 + $0x680] sm:$0xff]
    %v2873 = vld [vmem:[%s5 + $0x688] sm:$0xff]
    %v2874 = vld [vmem:[%s5 + $0x690] sm:$0xff]
    %v2875 = vld [vmem:[%s5 + $0x698] sm:$0xff]
    %v2876 = vld [vmem:[%s5 + $0x6a0] sm:$0xff]
    %v2877 = vld [vmem:[%s5 + $0x6a8] sm:$0xff]
    %v2878 = vld [vmem:[%s5 + $0x6b0] sm:$0xff]
    %v2879 = vld [vmem:[%s5 + $0x6b8] sm:$0xff]
    %v2880 = vld [vmem:[%s5 + $0x6c0] sm:$0xff]
    %v2881 = vld [vmem:[%s5 + $0x6c8] sm:$0xff]
    %v2882 = vld [vmem:[%s5 + $0x6d0] sm:$0xff]
    %v2883 = vld [vmem:[%s5 + $0x6d8] sm:$0xff]
    %v2884 = vld [vmem:[%s5 + $0x6e0] sm:$0xff]
    %v2885 = vld [vmem:[%s5 + $0x6e8] sm:$0xff]
    %v2886 = vld [vmem:[%s5 + $0x6f0] sm:$0xff]
    %v2887 = vld [vmem:[%s5 + $0x6f8] sm:$0xff]
    %v2888 = vld [vmem:[%s5 + $0x700] sm:$0xff]
    %v2889 = vld [vmem:[%s5 + $0x708] sm:$0xff]
    %v2890 = vld [vmem:[%s5 + $0x710] sm:$0xff]
    %v2891 = vld [vmem:[%s5 + $0x718] sm:$0xff]
    %v2892 = vld [vmem:[%s5 + $0x720] sm:$0xff]
    %v2893 = vld [vmem:[%s5 + $0x728] sm:$0xff]
    %v2894 = vld [vmem:[%s5 + $0x730] sm:$0xff]
    %v2895 = vld [vmem:[%s5 + $0x738] sm:$0xff]
    %v2896 = vld [vmem:[%s5 + $0x740] sm:$0xff]
    %v2897 = vld [vmem:[%s5 + $0x748] sm:$0xff]
    %v2898 = vld [vmem:[%s5 + $0x750] sm:$0xff]
    %v2899 = vld [vmem:[%s5 + $0x758] sm:$0xff]
    %v2900 = vld [vmem:[%s5 + $0x760] sm:$0xff]
    %v2901 = vld [vmem:[%s5 + $0x768] sm:$0xff]
    %v2902 = vld [vmem:[%s5 + $0x770] sm:$0xff]
    %v2903 = vld [vmem:[%s5 + $0x778] sm:$0xff]
    %v2904 = vld [vmem:[%s5 + $0x780] sm:$0xff]
    %v2905 = vld [vmem:[%s5 + $0x788] sm:$0xff]
    %v2906 = vld [vmem:[%s5 + $0x790] sm:$0xff]
    %v2907 = vld [vmem:[%s5 + $0x798] sm:$0xff]
    %v2908 = vld [vmem:[%s5 + $0x7a0] sm:$0xff]
    %v2909 = vld [vmem:[%s5 + $0x7a8] sm:$0xff]
    %v2910 = vld [vmem:[%s5 + $0x7b0] sm:$0xff]
    %v2911 = vld [vmem:[%s5 + $0x7b8] sm:$0xff]
    %v2912 = vld [vmem:[%s5 + $0x7c0] sm:$0xff]
    %v2913 = vld [vmem:[%s5 + $0x7c8] sm:$0xff]
    %v2914 = vld [vmem:[%s5 + $0x7d0] sm:$0xff]
    %v2915 = vld [vmem:[%s5 + $0x7d8] sm:$0xff]
    %v2916 = vld [vmem:[%s5 + $0x7e0] sm:$0xff]
    %v2917 = vld [vmem:[%s5 + $0x7e8] sm:$0xff]
    %v2918 = vld [vmem:[%s5 + $0x7f0] sm:$0xff]
    %v2919 = vld [vmem:[%s5 + $0x7f8] sm:$0xff]
    %v2920 = vld [vmem:[%s5 + $0x800] sm:$0xff]
    %v2921 = vld [vmem:[%s5 + $0x808] sm:$0xff]
    %v2922 = vld [vmem:[%s5 + $0x810] sm:$0xff]
    %v2923 = vld [vmem:[%s5 + $0x818] sm:$0xff]
    %v2924 = vld [vmem:[%s5 + $0x820] sm:$0xff]
    %v2925 = vld [vmem:[%s5 + $0x828] sm:$0xff]
    %v2926 = vld [vmem:[%s5 + $0x830] sm:$0xff]
    %v2927 = vld [vmem:[%s5 + $0x838] sm:$0xff]
    %v2928 = vld [vmem:[%s5 + $0x840] sm:$0xff]
    %v2929 = vld [vmem:[%s5 + $0x848] sm:$0xff]
    %v2930 = vld [vmem:[%s5 + $0x850] sm:$0xff]
    %v2931 = vld [vmem:[%s5 + $0x858] sm:$0xff]
    %v2932 = vld [vmem:[%s6] sm:$0xff]
    %v2933 = vld [vmem:[%s6 + $0x8] sm:$0xff]
    %v2934 = vld [vmem:[%s6 + $0x10] sm:$0xff]
    %v2935 = vld [vmem:[%s6 + $0x18] sm:$0xff]
    %v2936 = vld [vmem:[%s6 + $0x20] sm:$0xff]
    %v2937 = vld [vmem:[%s6 + $0x28] sm:$0xff]
    %v2938 = vld [vmem:[%s6 + $0x30] sm:$0xff]
    %v2939 = vld [vmem:[%s6 + $0x38] sm:$0xff]
    %v2940 = vld [vmem:[%s6 + $0x40] sm:$0x7]
    %v2950 = vperm.slane %v2932, 0
    %v2951 = vperm.slane %v2932, 1
    %v2952 = vperm.slane %v2932, 2
    %v2953 = vperm.slane %v2932, 3
    %v2954 = vperm.slane %v2932, 4
    %v2955 = vperm.slane %v2932, 5
    %v2956 = vperm.slane %v2932, 6
    %v2957 = vperm.slane %v2932, 7
    %v2958 = vperm.slane %v2933, 0
    %v2959 = vperm.slane %v2933, 1
    %v2960 = vperm.slane %v2933, 2
    %v2961 = vperm.slane %v2933, 3
    %v2962 = vperm.slane %v2933, 4
    %v2963 = vperm.slane %v2933, 5
    %v2964 = vperm.slane %v2933, 6
    %v2965 = vperm.slane %v2933, 7
    %v2966 = vperm.slane %v2934, 0
    %v2967 = vperm.slane %v2934, 1
    %v2968 = vperm.slane %v2934, 2
    %v2969 = vperm.slane %v2934, 3
    %v2970 = vperm.slane %v2934, 4
    %v2971 = vperm.slane %v2934, 5
    %v2972 = vperm.slane %v2934, 6
    %v2973 = vperm.slane %v2934, 7
    %v2974 = vperm.slane %v2935, 0
    %v2975 = vperm.slane %v2935, 1
    %v2976 = vperm.slane %v2935, 2
    %v2977 = vperm.slane %v2935, 3
    %v2978 = vperm.slane %v2935, 4
    %v2979 = vperm.slane %v2935, 5
    %v2980 = vperm.slane %v2935, 6
    %v2981 = vperm.slane %v2935, 7
    %v2982 = vperm.slane %v2936, 0
    %v2983 = vperm.slane %v2936, 1
    %v2984 = vperm.slane %v2936, 2
    %v2985 = vperm.slane %v2936, 3
    %v2986 = vperm.slane %v2936, 4
    %v2987 = vperm.slane %v2936, 5
    %v2988 = vperm.slane %v2936, 6
    %v2989 = vperm.slane %v2936, 7
    %v2990 = vperm.slane %v2937, 0
    %v2991 = vperm.slane %v2937, 1
    %v2992 = vperm.slane %v2937, 2
    %v2993 = vperm.slane %v2937, 3
    %v2994 = vperm.slane %v2937, 4
    %v2995 = vperm.slane %v2937, 5
    %v2996 = vperm.slane %v2937, 6
    %v2997 = vperm.slane %v2937, 7
    %v2998 = vperm.slane %v2938, 0
    %v2999 = vperm.slane %v2938, 1
    %v3000 = vperm.slane %v2938, 2
    %v3001 = vperm.slane %v2938, 3
    %v3002 = vperm.slane %v2938, 4
    %v3003 = vperm.slane %v2938, 5
    %v3004 = vperm.slane %v2938, 6
    %v3005 = vperm.slane %v2938, 7
    %v3006 = vperm.slane %v2939, 0
    %v3007 = vperm.slane %v2939, 1
    %v3008 = vperm.slane %v2939, 2
    %v3009 = vperm.slane %v2939, 3
    %v3010 = vperm.slane %v2939, 4
    %v3011 = vperm.slane %v2939, 5
    %v3012 = vperm.slane %v2939, 6
    %v3013 = vperm.slane %v2939, 7
    %v3014 = vperm.slane %v2940, 0
    %v3015 = vperm.slane %v2940, 1
    %v3016 = vperm.slane %v2940, 2
    %v3085 = vsel %vm2639, %v2663, 0
    %3087 = vmatpush.msra.mxu0 0.0
    %3088 = vmatpush.msra.mxu0 0.0
    %3089 = vmatpush.msra.mxu0 0.0
    %3090 = vmatpush.msra.mxu0 0.0
    %3091 = vmatpush.msra.mxu0 0.0
    %3092 = vmatpush.msra.mxu0 0.0
    %3093 = vmatpush.msra.mxu0 0.0
    %3094 = vmatpush.msra.mxu0 0.0
    %3095 = vmatpush.msra.mxu0 0.0
    %3096 = vmatpush.msra.mxu0 0.0
    %3097 = vmatpush.msra.mxu0 0.0
    %3098 = vmatpush.msra.mxu0 0.0
    %3099 = vmatpush.msra.mxu0 %v2865
    %3100 = vmatpush.msra.mxu0 %v2798
    %3101 = vmatpush.msra.mxu0 %v2731
    %3102 = vmatpush.msra.mxu0 %v2664
    %3103 = vmatmul.f32.gmra.mxu0 %v3085
    %v3104 = vpop.f32.mrf.mxu0
    %v3105 = vadd.f32 %v2950, %v3104
    %3106 = vdwg.mxu0
    %3107 = vmatpush.msra.mxu0 0.0
    %3108 = vmatpush.msra.mxu0 0.0
    %3109 = vmatpush.msra.mxu0 0.0
    %3110 = vmatpush.msra.mxu0 0.0
    %3111 = vmatpush.msra.mxu0 0.0
    %3112 = vmatpush.msra.mxu0 0.0
    %3113 = vmatpush.msra.mxu0 0.0
    %3114 = vmatpush.msra.mxu0 0.0
    %3115 = vmatpush.msra.mxu0 0.0
    %3116 = vmatpush.msra.mxu0 0.0
    %3117 = vmatpush.msra.mxu0 0.0
    %3118 = vmatpush.msra.mxu0 0.0
    %3119 = vmatpush.msra.mxu0 %v2866
    %3120 = vmatpush.msra.mxu0 %v2799
    %3121 = vmatpush.msra.mxu0 %v2732
    %3122 = vmatpush.msra.mxu0 %v2665
    %3123 = vmatmul.f32.gmra.mxu0 %v3085
    %v3124 = vpop.f32.mrf.mxu0
    %v3125 = vadd.f32 %v2951, %v3124
    %3126 = vdwg.mxu0
    %3127 = vmatpush.msra.mxu0 0.0
    %3128 = vmatpush.msra.mxu0 0.0
    %3129 = vmatpush.msra.mxu0 0.0
    %3130 = vmatpush.msra.mxu0 0.0
    %3131 = vmatpush.msra.mxu0 0.0
    %3132 = vmatpush.msra.mxu0 0.0
    %3133 = vmatpush.msra.mxu0 0.0
    %3134 = vmatpush.msra.mxu0 0.0
    %3135 = vmatpush.msra.mxu0 0.0
    %3136 = vmatpush.msra.mxu0 0.0
    %3137 = vmatpush.msra.mxu0 0.0
    %3138 = vmatpush.msra.mxu0 0.0
    %3139 = vmatpush.msra.mxu0 %v2867
    %3140 = vmatpush.msra.mxu0 %v2800
    %3141 = vmatpush.msra.mxu0 %v2733
    %3142 = vmatpush.msra.mxu0 %v2666
    %3143 = vmatmul.f32.gmra.mxu0 %v3085
    %v3144 = vpop.f32.mrf.mxu0
    %v3145 = vadd.f32 %v2952, %v3144
    %3146 = vdwg.mxu0
    %3147 = vmatpush.msra.mxu0 0.0
    %3148 = vmatpush.msra.mxu0 0.0
    %3149 = vmatpush.msra.mxu0 0.0
    %3150 = vmatpush.msra.mxu0 0.0
    %3151 = vmatpush.msra.mxu0 0.0
    %3152 = vmatpush.msra.mxu0 0.0
    %3153 = vmatpush.msra.mxu0 0.0
    %3154 = vmatpush.msra.mxu0 0.0
    %3155 = vmatpush.msra.mxu0 0.0
    %3156 = vmatpush.msra.mxu0 0.0
    %3157 = vmatpush.msra.mxu0 0.0
    %3158 = vmatpush.msra.mxu0 0.0
    %3159 = vmatpush.msra.mxu0 %v2868
    %3160 = vmatpush.msra.mxu0 %v2801
    %3161 = vmatpush.msra.mxu0 %v2734
    %3162 = vmatpush.msra.mxu0 %v2667
    %3163 = vmatmul.f32.gmra.mxu0 %v3085
    %v3164 = vpop.f32.mrf.mxu0
    %v3165 = vadd.f32 %v2953, %v3164
    %3166 = vdwg.mxu0
    %3167 = vmatpush.msra.mxu0 0.0
    %3168 = vmatpush.msra.mxu0 0.0
    %3169 = vmatpush.msra.mxu0 0.0
    %3170 = vmatpush.msra.mxu0 0.0
    %3171 = vmatpush.msra.mxu0 0.0
    %3172 = vmatpush.msra.mxu0 0.0
    %3173 = vmatpush.msra.mxu0 0.0
    %3174 = vmatpush.msra.mxu0 0.0
    %3175 = vmatpush.msra.mxu0 0.0
    %3176 = vmatpush.msra.mxu0 0.0
    %3177 = vmatpush.msra.mxu0 0.0
    %3178 = vmatpush.msra.mxu0 0.0
    %3179 = vmatpush.msra.mxu0 %v2869
    %3180 = vmatpush.msra.mxu0 %v2802
    %3181 = vmatpush.msra.mxu0 %v2735
    %3182 = vmatpush.msra.mxu0 %v2668
    %3183 = vmatmul.f32.gmra.mxu0 %v3085
    %v3184 = vpop.f32.mrf.mxu0
    %v3185 = vadd.f32 %v2954, %v3184
    %3186 = vdwg.mxu0
    %3187 = vmatpush.msra.mxu0 0.0
    %3188 = vmatpush.msra.mxu0 0.0
    %3189 = vmatpush.msra.mxu0 0.0
    %3190 = vmatpush.msra.mxu0 0.0
    %3191 = vmatpush.msra.mxu0 0.0
    %3192 = vmatpush.msra.mxu0 0.0
    %3193 = vmatpush.msra.mxu0 0.0
    %3194 = vmatpush.msra.mxu0 0.0
    %3195 = vmatpush.msra.mxu0 0.0
    %3196 = vmatpush.msra.mxu0 0.0
    %3197 = vmatpush.msra.mxu0 0.0
    %3198 = vmatpush.msra.mxu0 0.0
    %3199 = vmatpush.msra.mxu0 %v2870
    %3200 = vmatpush.msra.mxu0 %v2803
    %3201 = vmatpush.msra.mxu0 %v2736
    %3202 = vmatpush.msra.mxu0 %v2669
    %3203 = vmatmul.f32.gmra.mxu0 %v3085
    %v3204 = vpop.f32.mrf.mxu0
    %v3205 = vadd.f32 %v2955, %v3204
    %3206 = vdwg.mxu0
    %3207 = vmatpush.msra.mxu0 0.0
    %3208 = vmatpush.msra.mxu0 0.0
    %3209 = vmatpush.msra.mxu0 0.0
    %3210 = vmatpush.msra.mxu0 0.0
    %3211 = vmatpush.msra.mxu0 0.0
    %3212 = vmatpush.msra.mxu0 0.0
    %3213 = vmatpush.msra.mxu0 0.0
    %3214 = vmatpush.msra.mxu0 0.0
    %3215 = vmatpush.msra.mxu0 0.0
    %3216 = vmatpush.msra.mxu0 0.0
    %3217 = vmatpush.msra.mxu0 0.0
    %3218 = vmatpush.msra.mxu0 0.0
    %3219 = vmatpush.msra.mxu0 %v2871
    %3220 = vmatpush.msra.mxu0 %v2804
    %3221 = vmatpush.msra.mxu0 %v2737
    %3222 = vmatpush.msra.mxu0 %v2670
    %3223 = vmatmul.f32.gmra.mxu0 %v3085
    %v3224 = vpop.f32.mrf.mxu0
    %v3225 = vadd.f32 %v2956, %v3224
    %3226 = vdwg.mxu0
    %3227 = vmatpush.msra.mxu0 0.0
    %3228 = vmatpush.msra.mxu0 0.0
    %3229 = vmatpush.msra.mxu0 0.0
    %3230 = vmatpush.msra.mxu0 0.0
    %3231 = vmatpush.msra.mxu0 0.0
    %3232 = vmatpush.msra.mxu0 0.0
    %3233 = vmatpush.msra.mxu0 0.0
    %3234 = vmatpush.msra.mxu0 0.0
    %3235 = vmatpush.msra.mxu0 0.0
    %3236 = vmatpush.msra.mxu0 0.0
    %3237 = vmatpush.msra.mxu0 0.0
    %3238 = vmatpush.msra.mxu0 0.0
    %3239 = vmatpush.msra.mxu0 %v2872
    %3240 = vmatpush.msra.mxu0 %v2805
    %3241 = vmatpush.msra.mxu0 %v2738
    %3242 = vmatpush.msra.mxu0 %v2671
    %3243 = vmatmul.f32.gmra.mxu0 %v3085
    %v3244 = vpop.f32.mrf.mxu0
    %v3245 = vadd.f32 %v2957, %v3244
    %3246 = vdwg.mxu0
    %3247 = vmatpush.msra.mxu0 0.0
    %3248 = vmatpush.msra.mxu0 0.0
    %3249 = vmatpush.msra.mxu0 0.0
    %3250 = vmatpush.msra.mxu0 0.0
    %3251 = vmatpush.msra.mxu0 0.0
    %3252 = vmatpush.msra.mxu0 0.0
    %3253 = vmatpush.msra.mxu0 0.0
    %3254 = vmatpush.msra.mxu0 0.0
    %3255 = vmatpush.msra.mxu0 0.0
    %3256 = vmatpush.msra.mxu0 0.0
    %3257 = vmatpush.msra.mxu0 0.0
    %3258 = vmatpush.msra.mxu0 0.0
    %3259 = vmatpush.msra.mxu0 %v2873
    %3260 = vmatpush.msra.mxu0 %v2806
    %3261 = vmatpush.msra.mxu0 %v2739
    %3262 = vmatpush.msra.mxu0 %v2672
    %3263 = vmatmul.f32.gmra.mxu0 %v3085
    %v3264 = vpop.f32.mrf.mxu0
    %v3265 = vadd.f32 %v2958, %v3264
    %3266 = vdwg.mxu0
    %3267 = vmatpush.msra.mxu0 0.0
    %3268 = vmatpush.msra.mxu0 0.0
    %3269 = vmatpush.msra.mxu0 0.0
    %3270 = vmatpush.msra.mxu0 0.0
    %3271 = vmatpush.msra.mxu0 0.0
    %3272 = vmatpush.msra.mxu0 0.0
    %3273 = vmatpush.msra.mxu0 0.0
    %3274 = vmatpush.msra.mxu0 0.0
    %3275 = vmatpush.msra.mxu0 0.0
    %3276 = vmatpush.msra.mxu0 0.0
    %3277 = vmatpush.msra.mxu0 0.0
    %3278 = vmatpush.msra.mxu0 0.0
    %3279 = vmatpush.msra.mxu0 %v2874
    %3280 = vmatpush.msra.mxu0 %v2807
    %3281 = vmatpush.msra.mxu0 %v2740
    %3282 = vmatpush.msra.mxu0 %v2673
    %3283 = vmatmul.f32.gmra.mxu0 %v3085
    %v3284 = vpop.f32.mrf.mxu0
    %v3285 = vadd.f32 %v2959, %v3284
    %3286 = vdwg.mxu0
    %3287 = vmatpush.msra.mxu0 0.0
    %3288 = vmatpush.msra.mxu0 0.0
    %3289 = vmatpush.msra.mxu0 0.0
    %3290 = vmatpush.msra.mxu0 0.0
    %3291 = vmatpush.msra.mxu0 0.0
    %3292 = vmatpush.msra.mxu0 0.0
    %3293 = vmatpush.msra.mxu0 0.0
    %3294 = vmatpush.msra.mxu0 0.0
    %3295 = vmatpush.msra.mxu0 0.0
    %3296 = vmatpush.msra.mxu0 0.0
    %3297 = vmatpush.msra.mxu0 0.0
    %3298 = vmatpush.msra.mxu0 0.0
    %3299 = vmatpush.msra.mxu0 %v2875
    %3300 = vmatpush.msra.mxu0 %v2808
    %3301 = vmatpush.msra.mxu0 %v2741
    %3302 = vmatpush.msra.mxu0 %v2674
    %3303 = vmatmul.f32.gmra.mxu0 %v3085
    %v3304 = vpop.f32.mrf.mxu0
    %v3305 = vadd.f32 %v2960, %v3304
    %3306 = vdwg.mxu0
    %3307 = vmatpush.msra.mxu0 0.0
    %3308 = vmatpush.msra.mxu0 0.0
    %3309 = vmatpush.msra.mxu0 0.0
    %3310 = vmatpush.msra.mxu0 0.0
    %3311 = vmatpush.msra.mxu0 0.0
    %3312 = vmatpush.msra.mxu0 0.0
    %3313 = vmatpush.msra.mxu0 0.0
    %3314 = vmatpush.msra.mxu0 0.0
    %3315 = vmatpush.msra.mxu0 0.0
    %3316 = vmatpush.msra.mxu0 0.0
    %3317 = vmatpush.msra.mxu0 0.0
    %3318 = vmatpush.msra.mxu0 0.0
    %3319 = vmatpush.msra.mxu0 %v2876
    %3320 = vmatpush.msra.mxu0 %v2809
    %3321 = vmatpush.msra.mxu0 %v2742
    %3322 = vmatpush.msra.mxu0 %v2675
    %3323 = vmatmul.f32.gmra.mxu0 %v3085
    %v3324 = vpop.f32.mrf.mxu0
    %v3325 = vadd.f32 %v2961, %v3324
    %3326 = vdwg.mxu0
    %3327 = vmatpush.msra.mxu0 0.0
    %3328 = vmatpush.msra.mxu0 0.0
    %3329 = vmatpush.msra.mxu0 0.0
    %3330 = vmatpush.msra.mxu0 0.0
    %3331 = vmatpush.msra.mxu0 0.0
    %3332 = vmatpush.msra.mxu0 0.0
    %3333 = vmatpush.msra.mxu0 0.0
    %3334 = vmatpush.msra.mxu0 0.0
    %3335 = vmatpush.msra.mxu0 0.0
    %3336 = vmatpush.msra.mxu0 0.0
    %3337 = vmatpush.msra.mxu0 0.0
    %3338 = vmatpush.msra.mxu0 0.0
    %3339 = vmatpush.msra.mxu0 %v2877
    %3340 = vmatpush.msra.mxu0 %v2810
    %3341 = vmatpush.msra.mxu0 %v2743
    %3342 = vmatpush.msra.mxu0 %v2676
    %3343 = vmatmul.f32.gmra.mxu0 %v3085
    %v3344 = vpop.f32.mrf.mxu0
    %v3345 = vadd.f32 %v2962, %v3344
    %3346 = vdwg.mxu0
    %3347 = vmatpush.msra.mxu0 0.0
    %3348 = vmatpush.msra.mxu0 0.0
    %3349 = vmatpush.msra.mxu0 0.0
    %3350 = vmatpush.msra.mxu0 0.0
    %3351 = vmatpush.msra.mxu0 0.0
    %3352 = vmatpush.msra.mxu0 0.0
    %3353 = vmatpush.msra.mxu0 0.0
    %3354 = vmatpush.msra.mxu0 0.0
    %3355 = vmatpush.msra.mxu0 0.0
    %3356 = vmatpush.msra.mxu0 0.0
    %3357 = vmatpush.msra.mxu0 0.0
    %3358 = vmatpush.msra.mxu0 0.0
    %3359 = vmatpush.msra.mxu0 %v2878
    %3360 = vmatpush.msra.mxu0 %v2811
    %3361 = vmatpush.msra.mxu0 %v2744
    %3362 = vmatpush.msra.mxu0 %v2677
    %3363 = vmatmul.f32.gmra.mxu0 %v3085
    %v3364 = vpop.f32.mrf.mxu0
    %v3365 = vadd.f32 %v2963, %v3364
    %3366 = vdwg.mxu0
    %3367 = vmatpush.msra.mxu0 0.0
    %3368 = vmatpush.msra.mxu0 0.0
    %3369 = vmatpush.msra.mxu0 0.0
    %3370 = vmatpush.msra.mxu0 0.0
    %3371 = vmatpush.msra.mxu0 0.0
    %3372 = vmatpush.msra.mxu0 0.0
    %3373 = vmatpush.msra.mxu0 0.0
    %3374 = vmatpush.msra.mxu0 0.0
    %3375 = vmatpush.msra.mxu0 0.0
    %3376 = vmatpush.msra.mxu0 0.0
    %3377 = vmatpush.msra.mxu0 0.0
    %3378 = vmatpush.msra.mxu0 0.0
    %3379 = vmatpush.msra.mxu0 %v2879
    %3380 = vmatpush.msra.mxu0 %v2812
    %3381 = vmatpush.msra.mxu0 %v2745
    %3382 = vmatpush.msra.mxu0 %v2678
    %3383 = vmatmul.f32.gmra.mxu0 %v3085
    %v3384 = vpop.f32.mrf.mxu0
    %v3385 = vadd.f32 %v2964, %v3384
    %3386 = vdwg.mxu0
    %3387 = vmatpush.msra.mxu0 0.0
    %3388 = vmatpush.msra.mxu0 0.0
    %3389 = vmatpush.msra.mxu0 0.0
    %3390 = vmatpush.msra.mxu0 0.0
    %3391 = vmatpush.msra.mxu0 0.0
    %3392 = vmatpush.msra.mxu0 0.0
    %3393 = vmatpush.msra.mxu0 0.0
    %3394 = vmatpush.msra.mxu0 0.0
    %3395 = vmatpush.msra.mxu0 0.0
    %3396 = vmatpush.msra.mxu0 0.0
    %3397 = vmatpush.msra.mxu0 0.0
    %3398 = vmatpush.msra.mxu0 0.0
    %3399 = vmatpush.msra.mxu0 %v2880
    %3400 = vmatpush.msra.mxu0 %v2813
    %3401 = vmatpush.msra.mxu0 %v2746
    %3402 = vmatpush.msra.mxu0 %v2679
    %3403 = vmatmul.f32.gmra.mxu0 %v3085
    %v3404 = vpop.f32.mrf.mxu0
    %v3405 = vadd.f32 %v2965, %v3404
    %3406 = vdwg.mxu0
    %3407 = vmatpush.msra.mxu0 0.0
    %3408 = vmatpush.msra.mxu0 0.0
    %3409 = vmatpush.msra.mxu0 0.0
    %3410 = vmatpush.msra.mxu0 0.0
    %3411 = vmatpush.msra.mxu0 0.0
    %3412 = vmatpush.msra.mxu0 0.0
    %3413 = vmatpush.msra.mxu0 0.0
    %3414 = vmatpush.msra.mxu0 0.0
    %3415 = vmatpush.msra.mxu0 0.0
    %3416 = vmatpush.msra.mxu0 0.0
    %3417 = vmatpush.msra.mxu0 0.0
    %3418 = vmatpush.msra.mxu0 0.0
    %3419 = vmatpush.msra.mxu0 %v2881
    %3420 = vmatpush.msra.mxu0 %v2814
    %3421 = vmatpush.msra.mxu0 %v2747
    %3422 = vmatpush.msra.mxu0 %v2680
    %3423 = vmatmul.f32.gmra.mxu0 %v3085
    %v3424 = vpop.f32.mrf.mxu0
    %v3425 = vadd.f32 %v2966, %v3424
    %3426 = vdwg.mxu0
    %3427 = vmatpush.msra.mxu0 0.0
    %3428 = vmatpush.msra.mxu0 0.0
    %3429 = vmatpush.msra.mxu0 0.0
    %3430 = vmatpush.msra.mxu0 0.0
    %3431 = vmatpush.msra.mxu0 0.0
    %3432 = vmatpush.msra.mxu0 0.0
    %3433 = vmatpush.msra.mxu0 0.0
    %3434 = vmatpush.msra.mxu0 0.0
    %3435 = vmatpush.msra.mxu0 0.0
    %3436 = vmatpush.msra.mxu0 0.0
    %3437 = vmatpush.msra.mxu0 0.0
    %3438 = vmatpush.msra.mxu0 0.0
    %3439 = vmatpush.msra.mxu0 %v2882
    %3440 = vmatpush.msra.mxu0 %v2815
    %3441 = vmatpush.msra.mxu0 %v2748
    %3442 = vmatpush.msra.mxu0 %v2681
    %3443 = vmatmul.f32.gmra.mxu0 %v3085
    %v3444 = vpop.f32.mrf.mxu0
    %v3445 = vadd.f32 %v2967, %v3444
    %3446 = vdwg.mxu0
    %3447 = vmatpush.msra.mxu0 0.0
    %3448 = vmatpush.msra.mxu0 0.0
    %3449 = vmatpush.msra.mxu0 0.0
    %3450 = vmatpush.msra.mxu0 0.0
    %3451 = vmatpush.msra.mxu0 0.0
    %3452 = vmatpush.msra.mxu0 0.0
    %3453 = vmatpush.msra.mxu0 0.0
    %3454 = vmatpush.msra.mxu0 0.0
    %3455 = vmatpush.msra.mxu0 0.0
    %3456 = vmatpush.msra.mxu0 0.0
    %3457 = vmatpush.msra.mxu0 0.0
    %3458 = vmatpush.msra.mxu0 0.0
    %3459 = vmatpush.msra.mxu0 %v2883
    %3460 = vmatpush.msra.mxu0 %v2816
    %3461 = vmatpush.msra.mxu0 %v2749
    %3462 = vmatpush.msra.mxu0 %v2682
    %3463 = vmatmul.f32.gmra.mxu0 %v3085
    %v3464 = vpop.f32.mrf.mxu0
    %v3465 = vadd.f32 %v2968, %v3464
    %3466 = vdwg.mxu0
    %3467 = vmatpush.msra.mxu0 0.0
    %3468 = vmatpush.msra.mxu0 0.0
    %3469 = vmatpush.msra.mxu0 0.0
    %3470 = vmatpush.msra.mxu0 0.0
    %3471 = vmatpush.msra.mxu0 0.0
    %3472 = vmatpush.msra.mxu0 0.0
    %3473 = vmatpush.msra.mxu0 0.0
    %3474 = vmatpush.msra.mxu0 0.0
    %3475 = vmatpush.msra.mxu0 0.0
    %3476 = vmatpush.msra.mxu0 0.0
    %3477 = vmatpush.msra.mxu0 0.0
    %3478 = vmatpush.msra.mxu0 0.0
    %3479 = vmatpush.msra.mxu0 %v2884
    %3480 = vmatpush.msra.mxu0 %v2817
    %3481 = vmatpush.msra.mxu0 %v2750
    %3482 = vmatpush.msra.mxu0 %v2683
    %3483 = vmatmul.f32.gmra.mxu0 %v3085
    %v3484 = vpop.f32.mrf.mxu0
    %v3485 = vadd.f32 %v2969, %v3484
    %3486 = vdwg.mxu0
    %3487 = vmatpush.msra.mxu0 0.0
    %3488 = vmatpush.msra.mxu0 0.0
    %3489 = vmatpush.msra.mxu0 0.0
    %3490 = vmatpush.msra.mxu0 0.0
    %3491 = vmatpush.msra.mxu0 0.0
    %3492 = vmatpush.msra.mxu0 0.0
    %3493 = vmatpush.msra.mxu0 0.0
    %3494 = vmatpush.msra.mxu0 0.0
    %3495 = vmatpush.msra.mxu0 0.0
    %3496 = vmatpush.msra.mxu0 0.0
    %3497 = vmatpush.msra.mxu0 0.0
    %3498 = vmatpush.msra.mxu0 0.0
    %3499 = vmatpush.msra.mxu0 %v2885
    %3500 = vmatpush.msra.mxu0 %v2818
    %3501 = vmatpush.msra.mxu0 %v2751
    %3502 = vmatpush.msra.mxu0 %v2684
    %3503 = vmatmul.f32.gmra.mxu0 %v3085
    %v3504 = vpop.f32.mrf.mxu0
    %v3505 = vadd.f32 %v2970, %v3504
    %3506 = vdwg.mxu0
    %3507 = vmatpush.msra.mxu0 0.0
    %3508 = vmatpush.msra.mxu0 0.0
    %3509 = vmatpush.msra.mxu0 0.0
    %3510 = vmatpush.msra.mxu0 0.0
    %3511 = vmatpush.msra.mxu0 0.0
    %3512 = vmatpush.msra.mxu0 0.0
    %3513 = vmatpush.msra.mxu0 0.0
    %3514 = vmatpush.msra.mxu0 0.0
    %3515 = vmatpush.msra.mxu0 0.0
    %3516 = vmatpush.msra.mxu0 0.0
    %3517 = vmatpush.msra.mxu0 0.0
    %3518 = vmatpush.msra.mxu0 0.0
    %3519 = vmatpush.msra.mxu0 %v2886
    %3520 = vmatpush.msra.mxu0 %v2819
    %3521 = vmatpush.msra.mxu0 %v2752
    %3522 = vmatpush.msra.mxu0 %v2685
    %3523 = vmatmul.f32.gmra.mxu0 %v3085
    %v3524 = vpop.f32.mrf.mxu0
    %v3525 = vadd.f32 %v2971, %v3524
    %3526 = vdwg.mxu0
    %3527 = vmatpush.msra.mxu0 0.0
    %3528 = vmatpush.msra.mxu0 0.0
    %3529 = vmatpush.msra.mxu0 0.0
    %3530 = vmatpush.msra.mxu0 0.0
    %3531 = vmatpush.msra.mxu0 0.0
    %3532 = vmatpush.msra.mxu0 0.0
    %3533 = vmatpush.msra.mxu0 0.0
    %3534 = vmatpush.msra.mxu0 0.0
    %3535 = vmatpush.msra.mxu0 0.0
    %3536 = vmatpush.msra.mxu0 0.0
    %3537 = vmatpush.msra.mxu0 0.0
    %3538 = vmatpush.msra.mxu0 0.0
    %3539 = vmatpush.msra.mxu0 %v2887
    %3540 = vmatpush.msra.mxu0 %v2820
    %3541 = vmatpush.msra.mxu0 %v2753
    %3542 = vmatpush.msra.mxu0 %v2686
    %3543 = vmatmul.f32.gmra.mxu0 %v3085
    %v3544 = vpop.f32.mrf.mxu0
    %v3545 = vadd.f32 %v2972, %v3544
    %3546 = vdwg.mxu0
    %3547 = vmatpush.msra.mxu0 0.0
    %3548 = vmatpush.msra.mxu0 0.0
    %3549 = vmatpush.msra.mxu0 0.0
    %3550 = vmatpush.msra.mxu0 0.0
    %3551 = vmatpush.msra.mxu0 0.0
    %3552 = vmatpush.msra.mxu0 0.0
    %3553 = vmatpush.msra.mxu0 0.0
    %3554 = vmatpush.msra.mxu0 0.0
    %3555 = vmatpush.msra.mxu0 0.0
    %3556 = vmatpush.msra.mxu0 0.0
    %3557 = vmatpush.msra.mxu0 0.0
    %3558 = vmatpush.msra.mxu0 0.0
    %3559 = vmatpush.msra.mxu0 %v2888
    %3560 = vmatpush.msra.mxu0 %v2821
    %3561 = vmatpush.msra.mxu0 %v2754
    %3562 = vmatpush.msra.mxu0 %v2687
    %3563 = vmatmul.f32.gmra.mxu0 %v3085
    %v3564 = vpop.f32.mrf.mxu0
    %v3565 = vadd.f32 %v2973, %v3564
    %3566 = vdwg.mxu0
    %3567 = vmatpush.msra.mxu0 0.0
    %3568 = vmatpush.msra.mxu0 0.0
    %3569 = vmatpush.msra.mxu0 0.0
    %3570 = vmatpush.msra.mxu0 0.0
    %3571 = vmatpush.msra.mxu0 0.0
    %3572 = vmatpush.msra.mxu0 0.0
    %3573 = vmatpush.msra.mxu0 0.0
    %3574 = vmatpush.msra.mxu0 0.0
    %3575 = vmatpush.msra.mxu0 0.0
    %3576 = vmatpush.msra.mxu0 0.0
    %3577 = vmatpush.msra.mxu0 0.0
    %3578 = vmatpush.msra.mxu0 0.0
    %3579 = vmatpush.msra.mxu0 %v2889
    %3580 = vmatpush.msra.mxu0 %v2822
    %3581 = vmatpush.msra.mxu0 %v2755
    %3582 = vmatpush.msra.mxu0 %v2688
    %3583 = vmatmul.f32.gmra.mxu0 %v3085
    %v3584 = vpop.f32.mrf.mxu0
    %v3585 = vadd.f32 %v2974, %v3584
    %3586 = vdwg.mxu0
    %3587 = vmatpush.msra.mxu0 0.0
    %3588 = vmatpush.msra.mxu0 0.0
    %3589 = vmatpush.msra.mxu0 0.0
    %3590 = vmatpush.msra.mxu0 0.0
    %3591 = vmatpush.msra.mxu0 0.0
    %3592 = vmatpush.msra.mxu0 0.0
    %3593 = vmatpush.msra.mxu0 0.0
    %3594 = vmatpush.msra.mxu0 0.0
    %3595 = vmatpush.msra.mxu0 0.0
    %3596 = vmatpush.msra.mxu0 0.0
    %3597 = vmatpush.msra.mxu0 0.0
    %3598 = vmatpush.msra.mxu0 0.0
    %3599 = vmatpush.msra.mxu0 %v2890
    %3600 = vmatpush.msra.mxu0 %v2823
    %3601 = vmatpush.msra.mxu0 %v2756
    %3602 = vmatpush.msra.mxu0 %v2689
    %3603 = vmatmul.f32.gmra.mxu0 %v3085
    %v3604 = vpop.f32.mrf.mxu0
    %v3605 = vadd.f32 %v2975, %v3604
    %3606 = vdwg.mxu0
    %3607 = vmatpush.msra.mxu0 0.0
    %3608 = vmatpush.msra.mxu0 0.0
    %3609 = vmatpush.msra.mxu0 0.0
    %3610 = vmatpush.msra.mxu0 0.0
    %3611 = vmatpush.msra.mxu0 0.0
    %3612 = vmatpush.msra.mxu0 0.0
    %3613 = vmatpush.msra.mxu0 0.0
    %3614 = vmatpush.msra.mxu0 0.0
    %3615 = vmatpush.msra.mxu0 0.0
    %3616 = vmatpush.msra.mxu0 0.0
    %3617 = vmatpush.msra.mxu0 0.0
    %3618 = vmatpush.msra.mxu0 0.0
    %3619 = vmatpush.msra.mxu0 %v2891
    %3620 = vmatpush.msra.mxu0 %v2824
    %3621 = vmatpush.msra.mxu0 %v2757
    %3622 = vmatpush.msra.mxu0 %v2690
    %3623 = vmatmul.f32.gmra.mxu0 %v3085
    %v3624 = vpop.f32.mrf.mxu0
    %v3625 = vadd.f32 %v2976, %v3624
    %3626 = vdwg.mxu0
    %3627 = vmatpush.msra.mxu0 0.0
    %3628 = vmatpush.msra.mxu0 0.0
    %3629 = vmatpush.msra.mxu0 0.0
    %3630 = vmatpush.msra.mxu0 0.0
    %3631 = vmatpush.msra.mxu0 0.0
    %3632 = vmatpush.msra.mxu0 0.0
    %3633 = vmatpush.msra.mxu0 0.0
    %3634 = vmatpush.msra.mxu0 0.0
    %3635 = vmatpush.msra.mxu0 0.0
    %3636 = vmatpush.msra.mxu0 0.0
    %3637 = vmatpush.msra.mxu0 0.0
    %3638 = vmatpush.msra.mxu0 0.0
    %3639 = vmatpush.msra.mxu0 %v2892
    %3640 = vmatpush.msra.mxu0 %v2825
    %3641 = vmatpush.msra.mxu0 %v2758
    %3642 = vmatpush.msra.mxu0 %v2691
    %3643 = vmatmul.f32.gmra.mxu0 %v3085
    %v3644 = vpop.f32.mrf.mxu0
    %v3645 = vadd.f32 %v2977, %v3644
    %3646 = vdwg.mxu0
    %3647 = vmatpush.msra.mxu0 0.0
    %3648 = vmatpush.msra.mxu0 0.0
    %3649 = vmatpush.msra.mxu0 0.0
    %3650 = vmatpush.msra.mxu0 0.0
    %3651 = vmatpush.msra.mxu0 0.0
    %3652 = vmatpush.msra.mxu0 0.0
    %3653 = vmatpush.msra.mxu0 0.0
    %3654 = vmatpush.msra.mxu0 0.0
    %3655 = vmatpush.msra.mxu0 0.0
    %3656 = vmatpush.msra.mxu0 0.0
    %3657 = vmatpush.msra.mxu0 0.0
    %3658 = vmatpush.msra.mxu0 0.0
    %3659 = vmatpush.msra.mxu0 %v2893
    %3660 = vmatpush.msra.mxu0 %v2826
    %3661 = vmatpush.msra.mxu0 %v2759
    %3662 = vmatpush.msra.mxu0 %v2692
    %3663 = vmatmul.f32.gmra.mxu0 %v3085
    %v3664 = vpop.f32.mrf.mxu0
    %v3665 = vadd.f32 %v2978, %v3664
    %3666 = vdwg.mxu0
    %3667 = vmatpush.msra.mxu0 0.0
    %3668 = vmatpush.msra.mxu0 0.0
    %3669 = vmatpush.msra.mxu0 0.0
    %3670 = vmatpush.msra.mxu0 0.0
    %3671 = vmatpush.msra.mxu0 0.0
    %3672 = vmatpush.msra.mxu0 0.0
    %3673 = vmatpush.msra.mxu0 0.0
    %3674 = vmatpush.msra.mxu0 0.0
    %3675 = vmatpush.msra.mxu0 0.0
    %3676 = vmatpush.msra.mxu0 0.0
    %3677 = vmatpush.msra.mxu0 0.0
    %3678 = vmatpush.msra.mxu0 0.0
    %3679 = vmatpush.msra.mxu0 %v2894
    %3680 = vmatpush.msra.mxu0 %v2827
    %3681 = vmatpush.msra.mxu0 %v2760
    %3682 = vmatpush.msra.mxu0 %v2693
    %3683 = vmatmul.f32.gmra.mxu0 %v3085
    %v3684 = vpop.f32.mrf.mxu0
    %v3685 = vadd.f32 %v2979, %v3684
    %3686 = vdwg.mxu0
    %3687 = vmatpush.msra.mxu0 0.0
    %3688 = vmatpush.msra.mxu0 0.0
    %3689 = vmatpush.msra.mxu0 0.0
    %3690 = vmatpush.msra.mxu0 0.0
    %3691 = vmatpush.msra.mxu0 0.0
    %3692 = vmatpush.msra.mxu0 0.0
    %3693 = vmatpush.msra.mxu0 0.0
    %3694 = vmatpush.msra.mxu0 0.0
    %3695 = vmatpush.msra.mxu0 0.0
    %3696 = vmatpush.msra.mxu0 0.0
    %3697 = vmatpush.msra.mxu0 0.0
    %3698 = vmatpush.msra.mxu0 0.0
    %3699 = vmatpush.msra.mxu0 %v2895
    %3700 = vmatpush.msra.mxu0 %v2828
    %3701 = vmatpush.msra.mxu0 %v2761
    %3702 = vmatpush.msra.mxu0 %v2694
    %3703 = vmatmul.f32.gmra.mxu0 %v3085
    %v3704 = vpop.f32.mrf.mxu0
    %v3705 = vadd.f32 %v2980, %v3704
    %3706 = vdwg.mxu0
    %3707 = vmatpush.msra.mxu0 0.0
    %3708 = vmatpush.msra.mxu0 0.0
    %3709 = vmatpush.msra.mxu0 0.0
    %3710 = vmatpush.msra.mxu0 0.0
    %3711 = vmatpush.msra.mxu0 0.0
    %3712 = vmatpush.msra.mxu0 0.0
    %3713 = vmatpush.msra.mxu0 0.0
    %3714 = vmatpush.msra.mxu0 0.0
    %3715 = vmatpush.msra.mxu0 0.0
    %3716 = vmatpush.msra.mxu0 0.0
    %3717 = vmatpush.msra.mxu0 0.0
    %3718 = vmatpush.msra.mxu0 0.0
    %3719 = vmatpush.msra.mxu0 %v2896
    %3720 = vmatpush.msra.mxu0 %v2829
    %3721 = vmatpush.msra.mxu0 %v2762
    %3722 = vmatpush.msra.mxu0 %v2695
    %3723 = vmatmul.f32.gmra.mxu0 %v3085
    %v3724 = vpop.f32.mrf.mxu0
    %v3725 = vadd.f32 %v2981, %v3724
    %3726 = vdwg.mxu0
    %3727 = vmatpush.msra.mxu0 0.0
    %3728 = vmatpush.msra.mxu0 0.0
    %3729 = vmatpush.msra.mxu0 0.0
    %3730 = vmatpush.msra.mxu0 0.0
    %3731 = vmatpush.msra.mxu0 0.0
    %3732 = vmatpush.msra.mxu0 0.0
    %3733 = vmatpush.msra.mxu0 0.0
    %3734 = vmatpush.msra.mxu0 0.0
    %3735 = vmatpush.msra.mxu0 0.0
    %3736 = vmatpush.msra.mxu0 0.0
    %3737 = vmatpush.msra.mxu0 0.0
    %3738 = vmatpush.msra.mxu0 0.0
    %3739 = vmatpush.msra.mxu0 %v2897
    %3740 = vmatpush.msra.mxu0 %v2830
    %3741 = vmatpush.msra.mxu0 %v2763
    %3742 = vmatpush.msra.mxu0 %v2696
    %3743 = vmatmul.f32.gmra.mxu0 %v3085
    %v3744 = vpop.f32.mrf.mxu0
    %v3745 = vadd.f32 %v2982, %v3744
    %3746 = vdwg.mxu0
    %3747 = vmatpush.msra.mxu0 0.0
    %3748 = vmatpush.msra.mxu0 0.0
    %3749 = vmatpush.msra.mxu0 0.0
    %3750 = vmatpush.msra.mxu0 0.0
    %3751 = vmatpush.msra.mxu0 0.0
    %3752 = vmatpush.msra.mxu0 0.0
    %3753 = vmatpush.msra.mxu0 0.0
    %3754 = vmatpush.msra.mxu0 0.0
    %3755 = vmatpush.msra.mxu0 0.0
    %3756 = vmatpush.msra.mxu0 0.0
    %3757 = vmatpush.msra.mxu0 0.0
    %3758 = vmatpush.msra.mxu0 0.0
    %3759 = vmatpush.msra.mxu0 %v2898
    %3760 = vmatpush.msra.mxu0 %v2831
    %3761 = vmatpush.msra.mxu0 %v2764
    %3762 = vmatpush.msra.mxu0 %v2697
    %3763 = vmatmul.f32.gmra.mxu0 %v3085
    %v3764 = vpop.f32.mrf.mxu0
    %v3765 = vadd.f32 %v2983, %v3764
    %3766 = vdwg.mxu0
    %3767 = vmatpush.msra.mxu0 0.0
    %3768 = vmatpush.msra.mxu0 0.0
    %3769 = vmatpush.msra.mxu0 0.0
    %3770 = vmatpush.msra.mxu0 0.0
    %3771 = vmatpush.msra.mxu0 0.0
    %3772 = vmatpush.msra.mxu0 0.0
    %3773 = vmatpush.msra.mxu0 0.0
    %3774 = vmatpush.msra.mxu0 0.0
    %3775 = vmatpush.msra.mxu0 0.0
    %3776 = vmatpush.msra.mxu0 0.0
    %3777 = vmatpush.msra.mxu0 0.0
    %3778 = vmatpush.msra.mxu0 0.0
    %3779 = vmatpush.msra.mxu0 %v2899
    %3780 = vmatpush.msra.mxu0 %v2832
    %3781 = vmatpush.msra.mxu0 %v2765
    %3782 = vmatpush.msra.mxu0 %v2698
    %3783 = vmatmul.f32.gmra.mxu0 %v3085
    %v3784 = vpop.f32.mrf.mxu0
    %v3785 = vadd.f32 %v2984, %v3784
    %3786 = vdwg.mxu0
    %3787 = vmatpush.msra.mxu0 0.0
    %3788 = vmatpush.msra.mxu0 0.0
    %3789 = vmatpush.msra.mxu0 0.0
    %3790 = vmatpush.msra.mxu0 0.0
    %3791 = vmatpush.msra.mxu0 0.0
    %3792 = vmatpush.msra.mxu0 0.0
    %3793 = vmatpush.msra.mxu0 0.0
    %3794 = vmatpush.msra.mxu0 0.0
    %3795 = vmatpush.msra.mxu0 0.0
    %3796 = vmatpush.msra.mxu0 0.0
    %3797 = vmatpush.msra.mxu0 0.0
    %3798 = vmatpush.msra.mxu0 0.0
    %3799 = vmatpush.msra.mxu0 %v2900
    %3800 = vmatpush.msra.mxu0 %v2833
    %3801 = vmatpush.msra.mxu0 %v2766
    %3802 = vmatpush.msra.mxu0 %v2699
    %3803 = vmatmul.f32.gmra.mxu0 %v3085
    %v3804 = vpop.f32.mrf.mxu0
    %v3805 = vadd.f32 %v2985, %v3804
    %3806 = vdwg.mxu0
    %3807 = vmatpush.msra.mxu0 0.0
    %3808 = vmatpush.msra.mxu0 0.0
    %3809 = vmatpush.msra.mxu0 0.0
    %3810 = vmatpush.msra.mxu0 0.0
    %3811 = vmatpush.msra.mxu0 0.0
    %3812 = vmatpush.msra.mxu0 0.0
    %3813 = vmatpush.msra.mxu0 0.0
    %3814 = vmatpush.msra.mxu0 0.0
    %3815 = vmatpush.msra.mxu0 0.0
    %3816 = vmatpush.msra.mxu0 0.0
    %3817 = vmatpush.msra.mxu0 0.0
    %3818 = vmatpush.msra.mxu0 0.0
    %3819 = vmatpush.msra.mxu0 %v2901
    %3820 = vmatpush.msra.mxu0 %v2834
    %3821 = vmatpush.msra.mxu0 %v2767
    %3822 = vmatpush.msra.mxu0 %v2700
    %3823 = vmatmul.f32.gmra.mxu0 %v3085
    %v3824 = vpop.f32.mrf.mxu0
    %v3825 = vadd.f32 %v2986, %v3824
    %3826 = vdwg.mxu0
    %3827 = vmatpush.msra.mxu0 0.0
    %3828 = vmatpush.msra.mxu0 0.0
    %3829 = vmatpush.msra.mxu0 0.0
    %3830 = vmatpush.msra.mxu0 0.0
    %3831 = vmatpush.msra.mxu0 0.0
    %3832 = vmatpush.msra.mxu0 0.0
    %3833 = vmatpush.msra.mxu0 0.0
    %3834 = vmatpush.msra.mxu0 0.0
    %3835 = vmatpush.msra.mxu0 0.0
    %3836 = vmatpush.msra.mxu0 0.0
    %3837 = vmatpush.msra.mxu0 0.0
    %3838 = vmatpush.msra.mxu0 0.0
    %3839 = vmatpush.msra.mxu0 %v2902
    %3840 = vmatpush.msra.mxu0 %v2835
    %3841 = vmatpush.msra.mxu0 %v2768
    %3842 = vmatpush.msra.mxu0 %v2701
    %3843 = vmatmul.f32.gmra.mxu0 %v3085
    %v3844 = vpop.f32.mrf.mxu0
    %v3845 = vadd.f32 %v2987, %v3844
    %3846 = vdwg.mxu0
    %3847 = vmatpush.msra.mxu0 0.0
    %3848 = vmatpush.msra.mxu0 0.0
    %3849 = vmatpush.msra.mxu0 0.0
    %3850 = vmatpush.msra.mxu0 0.0
    %3851 = vmatpush.msra.mxu0 0.0
    %3852 = vmatpush.msra.mxu0 0.0
    %3853 = vmatpush.msra.mxu0 0.0
    %3854 = vmatpush.msra.mxu0 0.0
    %3855 = vmatpush.msra.mxu0 0.0
    %3856 = vmatpush.msra.mxu0 0.0
    %3857 = vmatpush.msra.mxu0 0.0
    %3858 = vmatpush.msra.mxu0 0.0
    %3859 = vmatpush.msra.mxu0 %v2903
    %3860 = vmatpush.msra.mxu0 %v2836
    %3861 = vmatpush.msra.mxu0 %v2769
    %3862 = vmatpush.msra.mxu0 %v2702
    %3863 = vmatmul.f32.gmra.mxu0 %v3085
    %v3864 = vpop.f32.mrf.mxu0
    %v3865 = vadd.f32 %v2988, %v3864
    %3866 = vdwg.mxu0
    %3867 = vmatpush.msra.mxu0 0.0
    %3868 = vmatpush.msra.mxu0 0.0
    %3869 = vmatpush.msra.mxu0 0.0
    %3870 = vmatpush.msra.mxu0 0.0
    %3871 = vmatpush.msra.mxu0 0.0
    %3872 = vmatpush.msra.mxu0 0.0
    %3873 = vmatpush.msra.mxu0 0.0
    %3874 = vmatpush.msra.mxu0 0.0
    %3875 = vmatpush.msra.mxu0 0.0
    %3876 = vmatpush.msra.mxu0 0.0
    %3877 = vmatpush.msra.mxu0 0.0
    %3878 = vmatpush.msra.mxu0 0.0
    %3879 = vmatpush.msra.mxu0 %v2904
    %3880 = vmatpush.msra.mxu0 %v2837
    %3881 = vmatpush.msra.mxu0 %v2770
    %3882 = vmatpush.msra.mxu0 %v2703
    %3883 = vmatmul.f32.gmra.mxu0 %v3085
    %v3884 = vpop.f32.mrf.mxu0
    %v3885 = vadd.f32 %v2989, %v3884
    %3886 = vdwg.mxu0
    %3887 = vmatpush.msra.mxu0 0.0
    %3888 = vmatpush.msra.mxu0 0.0
    %3889 = vmatpush.msra.mxu0 0.0
    %3890 = vmatpush.msra.mxu0 0.0
    %3891 = vmatpush.msra.mxu0 0.0
    %3892 = vmatpush.msra.mxu0 0.0
    %3893 = vmatpush.msra.mxu0 0.0
    %3894 = vmatpush.msra.mxu0 0.0
    %3895 = vmatpush.msra.mxu0 0.0
    %3896 = vmatpush.msra.mxu0 0.0
    %3897 = vmatpush.msra.mxu0 0.0
    %3898 = vmatpush.msra.mxu0 0.0
    %3899 = vmatpush.msra.mxu0 %v2905
    %3900 = vmatpush.msra.mxu0 %v2838
    %3901 = vmatpush.msra.mxu0 %v2771
    %3902 = vmatpush.msra.mxu0 %v2704
    %3903 = vmatmul.f32.gmra.mxu0 %v3085
    %v3904 = vpop.f32.mrf.mxu0
    %v3905 = vadd.f32 %v2990, %v3904
    %3906 = vdwg.mxu0
    %3907 = vmatpush.msra.mxu0 0.0
    %3908 = vmatpush.msra.mxu0 0.0
    %3909 = vmatpush.msra.mxu0 0.0
    %3910 = vmatpush.msra.mxu0 0.0
    %3911 = vmatpush.msra.mxu0 0.0
    %3912 = vmatpush.msra.mxu0 0.0
    %3913 = vmatpush.msra.mxu0 0.0
    %3914 = vmatpush.msra.mxu0 0.0
    %3915 = vmatpush.msra.mxu0 0.0
    %3916 = vmatpush.msra.mxu0 0.0
    %3917 = vmatpush.msra.mxu0 0.0
    %3918 = vmatpush.msra.mxu0 0.0
    %3919 = vmatpush.msra.mxu0 %v2906
    %3920 = vmatpush.msra.mxu0 %v2839
    %3921 = vmatpush.msra.mxu0 %v2772
    %3922 = vmatpush.msra.mxu0 %v2705
    %3923 = vmatmul.f32.gmra.mxu0 %v3085
    %v3924 = vpop.f32.mrf.mxu0
    %v3925 = vadd.f32 %v2991, %v3924
    %3926 = vdwg.mxu0
    %3927 = vmatpush.msra.mxu0 0.0
    %3928 = vmatpush.msra.mxu0 0.0
    %3929 = vmatpush.msra.mxu0 0.0
    %3930 = vmatpush.msra.mxu0 0.0
    %3931 = vmatpush.msra.mxu0 0.0
    %3932 = vmatpush.msra.mxu0 0.0
    %3933 = vmatpush.msra.mxu0 0.0
    %3934 = vmatpush.msra.mxu0 0.0
    %3935 = vmatpush.msra.mxu0 0.0
    %3936 = vmatpush.msra.mxu0 0.0
    %3937 = vmatpush.msra.mxu0 0.0
    %3938 = vmatpush.msra.mxu0 0.0
    %3939 = vmatpush.msra.mxu0 %v2907
    %3940 = vmatpush.msra.mxu0 %v2840
    %3941 = vmatpush.msra.mxu0 %v2773
    %3942 = vmatpush.msra.mxu0 %v2706
    %3943 = vmatmul.f32.gmra.mxu0 %v3085
    %v3944 = vpop.f32.mrf.mxu0
    %v3945 = vadd.f32 %v2992, %v3944
    %3946 = vdwg.mxu0
    %3947 = vmatpush.msra.mxu0 0.0
    %3948 = vmatpush.msra.mxu0 0.0
    %3949 = vmatpush.msra.mxu0 0.0
    %3950 = vmatpush.msra.mxu0 0.0
    %3951 = vmatpush.msra.mxu0 0.0
    %3952 = vmatpush.msra.mxu0 0.0
    %3953 = vmatpush.msra.mxu0 0.0
    %3954 = vmatpush.msra.mxu0 0.0
    %3955 = vmatpush.msra.mxu0 0.0
    %3956 = vmatpush.msra.mxu0 0.0
    %3957 = vmatpush.msra.mxu0 0.0
    %3958 = vmatpush.msra.mxu0 0.0
    %3959 = vmatpush.msra.mxu0 %v2908
    %3960 = vmatpush.msra.mxu0 %v2841
    %3961 = vmatpush.msra.mxu0 %v2774
    %3962 = vmatpush.msra.mxu0 %v2707
    %3963 = vmatmul.f32.gmra.mxu0 %v3085
    %v3964 = vpop.f32.mrf.mxu0
    %v3965 = vadd.f32 %v2993, %v3964
    %3966 = vdwg.mxu0
    %3967 = vmatpush.msra.mxu0 0.0
    %3968 = vmatpush.msra.mxu0 0.0
    %3969 = vmatpush.msra.mxu0 0.0
    %3970 = vmatpush.msra.mxu0 0.0
    %3971 = vmatpush.msra.mxu0 0.0
    %3972 = vmatpush.msra.mxu0 0.0
    %3973 = vmatpush.msra.mxu0 0.0
    %3974 = vmatpush.msra.mxu0 0.0
    %3975 = vmatpush.msra.mxu0 0.0
    %3976 = vmatpush.msra.mxu0 0.0
    %3977 = vmatpush.msra.mxu0 0.0
    %3978 = vmatpush.msra.mxu0 0.0
    %3979 = vmatpush.msra.mxu0 %v2909
    %3980 = vmatpush.msra.mxu0 %v2842
    %3981 = vmatpush.msra.mxu0 %v2775
    %3982 = vmatpush.msra.mxu0 %v2708
    %3983 = vmatmul.f32.gmra.mxu0 %v3085
    %v3984 = vpop.f32.mrf.mxu0
    %v3985 = vadd.f32 %v2994, %v3984
    %3986 = vdwg.mxu0
    %3987 = vmatpush.msra.mxu0 0.0
    %3988 = vmatpush.msra.mxu0 0.0
    %3989 = vmatpush.msra.mxu0 0.0
    %3990 = vmatpush.msra.mxu0 0.0
    %3991 = vmatpush.msra.mxu0 0.0
    %3992 = vmatpush.msra.mxu0 0.0
    %3993 = vmatpush.msra.mxu0 0.0
    %3994 = vmatpush.msra.mxu0 0.0
    %3995 = vmatpush.msra.mxu0 0.0
    %3996 = vmatpush.msra.mxu0 0.0
    %3997 = vmatpush.msra.mxu0 0.0
    %3998 = vmatpush.msra.mxu0 0.0
    %3999 = vmatpush.msra.mxu0 %v2910
    %4000 = vmatpush.msra.mxu0 %v2843
    %4001 = vmatpush.msra.mxu0 %v2776
    %4002 = vmatpush.msra.mxu0 %v2709
    %4003 = vmatmul.f32.gmra.mxu0 %v3085
    %v4004 = vpop.f32.mrf.mxu0
    %v4005 = vadd.f32 %v2995, %v4004
    %4006 = vdwg.mxu0
    %4007 = vmatpush.msra.mxu0 0.0
    %4008 = vmatpush.msra.mxu0 0.0
    %4009 = vmatpush.msra.mxu0 0.0
    %4010 = vmatpush.msra.mxu0 0.0
    %4011 = vmatpush.msra.mxu0 0.0
    %4012 = vmatpush.msra.mxu0 0.0
    %4013 = vmatpush.msra.mxu0 0.0
    %4014 = vmatpush.msra.mxu0 0.0
    %4015 = vmatpush.msra.mxu0 0.0
    %4016 = vmatpush.msra.mxu0 0.0
    %4017 = vmatpush.msra.mxu0 0.0
    %4018 = vmatpush.msra.mxu0 0.0
    %4019 = vmatpush.msra.mxu0 %v2911
    %4020 = vmatpush.msra.mxu0 %v2844
    %4021 = vmatpush.msra.mxu0 %v2777
    %4022 = vmatpush.msra.mxu0 %v2710
    %4023 = vmatmul.f32.gmra.mxu0 %v3085
    %v4024 = vpop.f32.mrf.mxu0
    %v4025 = vadd.f32 %v2996, %v4024
    %4026 = vdwg.mxu0
    %4027 = vmatpush.msra.mxu0 0.0
    %4028 = vmatpush.msra.mxu0 0.0
    %4029 = vmatpush.msra.mxu0 0.0
    %4030 = vmatpush.msra.mxu0 0.0
    %4031 = vmatpush.msra.mxu0 0.0
    %4032 = vmatpush.msra.mxu0 0.0
    %4033 = vmatpush.msra.mxu0 0.0
    %4034 = vmatpush.msra.mxu0 0.0
    %4035 = vmatpush.msra.mxu0 0.0
    %4036 = vmatpush.msra.mxu0 0.0
    %4037 = vmatpush.msra.mxu0 0.0
    %4038 = vmatpush.msra.mxu0 0.0
    %4039 = vmatpush.msra.mxu0 %v2912
    %4040 = vmatpush.msra.mxu0 %v2845
    %4041 = vmatpush.msra.mxu0 %v2778
    %4042 = vmatpush.msra.mxu0 %v2711
    %4043 = vmatmul.f32.gmra.mxu0 %v3085
    %v4044 = vpop.f32.mrf.mxu0
    %v4045 = vadd.f32 %v2997, %v4044
    %4046 = vdwg.mxu0
    %4047 = vmatpush.msra.mxu0 0.0
    %4048 = vmatpush.msra.mxu0 0.0
    %4049 = vmatpush.msra.mxu0 0.0
    %4050 = vmatpush.msra.mxu0 0.0
    %4051 = vmatpush.msra.mxu0 0.0
    %4052 = vmatpush.msra.mxu0 0.0
    %4053 = vmatpush.msra.mxu0 0.0
    %4054 = vmatpush.msra.mxu0 0.0
    %4055 = vmatpush.msra.mxu0 0.0
    %4056 = vmatpush.msra.mxu0 0.0
    %4057 = vmatpush.msra.mxu0 0.0
    %4058 = vmatpush.msra.mxu0 0.0
    %4059 = vmatpush.msra.mxu0 %v2913
    %4060 = vmatpush.msra.mxu0 %v2846
    %4061 = vmatpush.msra.mxu0 %v2779
    %4062 = vmatpush.msra.mxu0 %v2712
    %4063 = vmatmul.f32.gmra.mxu0 %v3085
    %v4064 = vpop.f32.mrf.mxu0
    %v4065 = vadd.f32 %v2998, %v4064
    %4066 = vdwg.mxu0
    %4067 = vmatpush.msra.mxu0 0.0
    %4068 = vmatpush.msra.mxu0 0.0
    %4069 = vmatpush.msra.mxu0 0.0
    %4070 = vmatpush.msra.mxu0 0.0
    %4071 = vmatpush.msra.mxu0 0.0
    %4072 = vmatpush.msra.mxu0 0.0
    %4073 = vmatpush.msra.mxu0 0.0
    %4074 = vmatpush.msra.mxu0 0.0
    %4075 = vmatpush.msra.mxu0 0.0
    %4076 = vmatpush.msra.mxu0 0.0
    %4077 = vmatpush.msra.mxu0 0.0
    %4078 = vmatpush.msra.mxu0 0.0
    %4079 = vmatpush.msra.mxu0 %v2914
    %4080 = vmatpush.msra.mxu0 %v2847
    %4081 = vmatpush.msra.mxu0 %v2780
    %4082 = vmatpush.msra.mxu0 %v2713
    %4083 = vmatmul.f32.gmra.mxu0 %v3085
    %v4084 = vpop.f32.mrf.mxu0
    %v4085 = vadd.f32 %v2999, %v4084
    %4086 = vdwg.mxu0
    %4087 = vmatpush.msra.mxu0 0.0
    %4088 = vmatpush.msra.mxu0 0.0
    %4089 = vmatpush.msra.mxu0 0.0
    %4090 = vmatpush.msra.mxu0 0.0
    %4091 = vmatpush.msra.mxu0 0.0
    %4092 = vmatpush.msra.mxu0 0.0
    %4093 = vmatpush.msra.mxu0 0.0
    %4094 = vmatpush.msra.mxu0 0.0
    %4095 = vmatpush.msra.mxu0 0.0
    %4096 = vmatpush.msra.mxu0 0.0
    %4097 = vmatpush.msra.mxu0 0.0
    %4098 = vmatpush.msra.mxu0 0.0
    %4099 = vmatpush.msra.mxu0 %v2915
    %4100 = vmatpush.msra.mxu0 %v2848
    %4101 = vmatpush.msra.mxu0 %v2781
    %4102 = vmatpush.msra.mxu0 %v2714
    %4103 = vmatmul.f32.gmra.mxu0 %v3085
    %v4104 = vpop.f32.mrf.mxu0
    %v4105 = vadd.f32 %v3000, %v4104
    %4106 = vdwg.mxu0
    %4107 = vmatpush.msra.mxu0 0.0
    %4108 = vmatpush.msra.mxu0 0.0
    %4109 = vmatpush.msra.mxu0 0.0
    %4110 = vmatpush.msra.mxu0 0.0
    %4111 = vmatpush.msra.mxu0 0.0
    %4112 = vmatpush.msra.mxu0 0.0
    %4113 = vmatpush.msra.mxu0 0.0
    %4114 = vmatpush.msra.mxu0 0.0
    %4115 = vmatpush.msra.mxu0 0.0
    %4116 = vmatpush.msra.mxu0 0.0
    %4117 = vmatpush.msra.mxu0 0.0
    %4118 = vmatpush.msra.mxu0 0.0
    %4119 = vmatpush.msra.mxu0 %v2916
    %4120 = vmatpush.msra.mxu0 %v2849
    %4121 = vmatpush.msra.mxu0 %v2782
    %4122 = vmatpush.msra.mxu0 %v2715
    %4123 = vmatmul.f32.gmra.mxu0 %v3085
    %v4124 = vpop.f32.mrf.mxu0
    %v4125 = vadd.f32 %v3001, %v4124
    %4126 = vdwg.mxu0
    %4127 = vmatpush.msra.mxu0 0.0
    %4128 = vmatpush.msra.mxu0 0.0
    %4129 = vmatpush.msra.mxu0 0.0
    %4130 = vmatpush.msra.mxu0 0.0
    %4131 = vmatpush.msra.mxu0 0.0
    %4132 = vmatpush.msra.mxu0 0.0
    %4133 = vmatpush.msra.mxu0 0.0
    %4134 = vmatpush.msra.mxu0 0.0
    %4135 = vmatpush.msra.mxu0 0.0
    %4136 = vmatpush.msra.mxu0 0.0
    %4137 = vmatpush.msra.mxu0 0.0
    %4138 = vmatpush.msra.mxu0 0.0
    %4139 = vmatpush.msra.mxu0 %v2917
    %4140 = vmatpush.msra.mxu0 %v2850
    %4141 = vmatpush.msra.mxu0 %v2783
    %4142 = vmatpush.msra.mxu0 %v2716
    %4143 = vmatmul.f32.gmra.mxu0 %v3085
    %v4144 = vpop.f32.mrf.mxu0
    %v4145 = vadd.f32 %v3002, %v4144
    %4146 = vdwg.mxu0
    %4147 = vmatpush.msra.mxu0 0.0
    %4148 = vmatpush.msra.mxu0 0.0
    %4149 = vmatpush.msra.mxu0 0.0
    %4150 = vmatpush.msra.mxu0 0.0
    %4151 = vmatpush.msra.mxu0 0.0
    %4152 = vmatpush.msra.mxu0 0.0
    %4153 = vmatpush.msra.mxu0 0.0
    %4154 = vmatpush.msra.mxu0 0.0
    %4155 = vmatpush.msra.mxu0 0.0
    %4156 = vmatpush.msra.mxu0 0.0
    %4157 = vmatpush.msra.mxu0 0.0
    %4158 = vmatpush.msra.mxu0 0.0
    %4159 = vmatpush.msra.mxu0 %v2918
    %4160 = vmatpush.msra.mxu0 %v2851
    %4161 = vmatpush.msra.mxu0 %v2784
    %4162 = vmatpush.msra.mxu0 %v2717
    %4163 = vmatmul.f32.gmra.mxu0 %v3085
    %v4164 = vpop.f32.mrf.mxu0
    %v4165 = vadd.f32 %v3003, %v4164
    %4166 = vdwg.mxu0
    %4167 = vmatpush.msra.mxu0 0.0
    %4168 = vmatpush.msra.mxu0 0.0
    %4169 = vmatpush.msra.mxu0 0.0
    %4170 = vmatpush.msra.mxu0 0.0
    %4171 = vmatpush.msra.mxu0 0.0
    %4172 = vmatpush.msra.mxu0 0.0
    %4173 = vmatpush.msra.mxu0 0.0
    %4174 = vmatpush.msra.mxu0 0.0
    %4175 = vmatpush.msra.mxu0 0.0
    %4176 = vmatpush.msra.mxu0 0.0
    %4177 = vmatpush.msra.mxu0 0.0
    %4178 = vmatpush.msra.mxu0 0.0
    %4179 = vmatpush.msra.mxu0 %v2919
    %4180 = vmatpush.msra.mxu0 %v2852
    %4181 = vmatpush.msra.mxu0 %v2785
    %4182 = vmatpush.msra.mxu0 %v2718
    %4183 = vmatmul.f32.gmra.mxu0 %v3085
    %v4184 = vpop.f32.mrf.mxu0
    %v4185 = vadd.f32 %v3004, %v4184
    %4186 = vdwg.mxu0
    %4187 = vmatpush.msra.mxu0 0.0
    %4188 = vmatpush.msra.mxu0 0.0
    %4189 = vmatpush.msra.mxu0 0.0
    %4190 = vmatpush.msra.mxu0 0.0
    %4191 = vmatpush.msra.mxu0 0.0
    %4192 = vmatpush.msra.mxu0 0.0
    %4193 = vmatpush.msra.mxu0 0.0
    %4194 = vmatpush.msra.mxu0 0.0
    %4195 = vmatpush.msra.mxu0 0.0
    %4196 = vmatpush.msra.mxu0 0.0
    %4197 = vmatpush.msra.mxu0 0.0
    %4198 = vmatpush.msra.mxu0 0.0
    %4199 = vmatpush.msra.mxu0 %v2920
    %4200 = vmatpush.msra.mxu0 %v2853
    %4201 = vmatpush.msra.mxu0 %v2786
    %4202 = vmatpush.msra.mxu0 %v2719
    %4203 = vmatmul.f32.gmra.mxu0 %v3085
    %v4204 = vpop.f32.mrf.mxu0
    %v4205 = vadd.f32 %v3005, %v4204
    %4206 = vdwg.mxu0
    %4207 = vmatpush.msra.mxu0 0.0
    %4208 = vmatpush.msra.mxu0 0.0
    %4209 = vmatpush.msra.mxu0 0.0
    %4210 = vmatpush.msra.mxu0 0.0
    %4211 = vmatpush.msra.mxu0 0.0
    %4212 = vmatpush.msra.mxu0 0.0
    %4213 = vmatpush.msra.mxu0 0.0
    %4214 = vmatpush.msra.mxu0 0.0
    %4215 = vmatpush.msra.mxu0 0.0
    %4216 = vmatpush.msra.mxu0 0.0
    %4217 = vmatpush.msra.mxu0 0.0
    %4218 = vmatpush.msra.mxu0 0.0
    %4219 = vmatpush.msra.mxu0 %v2921
    %4220 = vmatpush.msra.mxu0 %v2854
    %4221 = vmatpush.msra.mxu0 %v2787
    %4222 = vmatpush.msra.mxu0 %v2720
    %4223 = vmatmul.f32.gmra.mxu0 %v3085
    %v4224 = vpop.f32.mrf.mxu0
    %v4225 = vadd.f32 %v3006, %v4224
    %4226 = vdwg.mxu0
    %4227 = vmatpush.msra.mxu0 0.0
    %4228 = vmatpush.msra.mxu0 0.0
    %4229 = vmatpush.msra.mxu0 0.0
    %4230 = vmatpush.msra.mxu0 0.0
    %4231 = vmatpush.msra.mxu0 0.0
    %4232 = vmatpush.msra.mxu0 0.0
    %4233 = vmatpush.msra.mxu0 0.0
    %4234 = vmatpush.msra.mxu0 0.0
    %4235 = vmatpush.msra.mxu0 0.0
    %4236 = vmatpush.msra.mxu0 0.0
    %4237 = vmatpush.msra.mxu0 0.0
    %4238 = vmatpush.msra.mxu0 0.0
    %4239 = vmatpush.msra.mxu0 %v2922
    %4240 = vmatpush.msra.mxu0 %v2855
    %4241 = vmatpush.msra.mxu0 %v2788
    %4242 = vmatpush.msra.mxu0 %v2721
    %4243 = vmatmul.f32.gmra.mxu0 %v3085
    %v4244 = vpop.f32.mrf.mxu0
    %v4245 = vadd.f32 %v3007, %v4244
    %4246 = vdwg.mxu0
    %4247 = vmatpush.msra.mxu0 0.0
    %4248 = vmatpush.msra.mxu0 0.0
    %4249 = vmatpush.msra.mxu0 0.0
    %4250 = vmatpush.msra.mxu0 0.0
    %4251 = vmatpush.msra.mxu0 0.0
    %4252 = vmatpush.msra.mxu0 0.0
    %4253 = vmatpush.msra.mxu0 0.0
    %4254 = vmatpush.msra.mxu0 0.0
    %4255 = vmatpush.msra.mxu0 0.0
    %4256 = vmatpush.msra.mxu0 0.0
    %4257 = vmatpush.msra.mxu0 0.0
    %4258 = vmatpush.msra.mxu0 0.0
    %4259 = vmatpush.msra.mxu0 %v2923
    %4260 = vmatpush.msra.mxu0 %v2856
    %4261 = vmatpush.msra.mxu0 %v2789
    %4262 = vmatpush.msra.mxu0 %v2722
    %4263 = vmatmul.f32.gmra.mxu0 %v3085
    %v4264 = vpop.f32.mrf.mxu0
    %v4265 = vadd.f32 %v3008, %v4264
    %4266 = vdwg.mxu0
    %4267 = vmatpush.msra.mxu0 0.0
    %4268 = vmatpush.msra.mxu0 0.0
    %4269 = vmatpush.msra.mxu0 0.0
    %4270 = vmatpush.msra.mxu0 0.0
    %4271 = vmatpush.msra.mxu0 0.0
    %4272 = vmatpush.msra.mxu0 0.0
    %4273 = vmatpush.msra.mxu0 0.0
    %4274 = vmatpush.msra.mxu0 0.0
    %4275 = vmatpush.msra.mxu0 0.0
    %4276 = vmatpush.msra.mxu0 0.0
    %4277 = vmatpush.msra.mxu0 0.0
    %4278 = vmatpush.msra.mxu0 0.0
    %4279 = vmatpush.msra.mxu0 %v2924
    %4280 = vmatpush.msra.mxu0 %v2857
    %4281 = vmatpush.msra.mxu0 %v2790
    %4282 = vmatpush.msra.mxu0 %v2723
    %4283 = vmatmul.f32.gmra.mxu0 %v3085
    %v4284 = vpop.f32.mrf.mxu0
    %v4285 = vadd.f32 %v3009, %v4284
    %4286 = vdwg.mxu0
    %4287 = vmatpush.msra.mxu0 0.0
    %4288 = vmatpush.msra.mxu0 0.0
    %4289 = vmatpush.msra.mxu0 0.0
    %4290 = vmatpush.msra.mxu0 0.0
    %4291 = vmatpush.msra.mxu0 0.0
    %4292 = vmatpush.msra.mxu0 0.0
    %4293 = vmatpush.msra.mxu0 0.0
    %4294 = vmatpush.msra.mxu0 0.0
    %4295 = vmatpush.msra.mxu0 0.0
    %4296 = vmatpush.msra.mxu0 0.0
    %4297 = vmatpush.msra.mxu0 0.0
    %4298 = vmatpush.msra.mxu0 0.0
    %4299 = vmatpush.msra.mxu0 %v2925
    %4300 = vmatpush.msra.mxu0 %v2858
    %4301 = vmatpush.msra.mxu0 %v2791
    %4302 = vmatpush.msra.mxu0 %v2724
    %4303 = vmatmul.f32.gmra.mxu0 %v3085
    %v4304 = vpop.f32.mrf.mxu0
    %v4305 = vadd.f32 %v3010, %v4304
    %4306 = vdwg.mxu0
    %4307 = vmatpush.msra.mxu0 0.0
    %4308 = vmatpush.msra.mxu0 0.0
    %4309 = vmatpush.msra.mxu0 0.0
    %4310 = vmatpush.msra.mxu0 0.0
    %4311 = vmatpush.msra.mxu0 0.0
    %4312 = vmatpush.msra.mxu0 0.0
    %4313 = vmatpush.msra.mxu0 0.0
    %4314 = vmatpush.msra.mxu0 0.0
    %4315 = vmatpush.msra.mxu0 0.0
    %4316 = vmatpush.msra.mxu0 0.0
    %4317 = vmatpush.msra.mxu0 0.0
    %4318 = vmatpush.msra.mxu0 0.0
    %4319 = vmatpush.msra.mxu0 %v2926
    %4320 = vmatpush.msra.mxu0 %v2859
    %4321 = vmatpush.msra.mxu0 %v2792
    %4322 = vmatpush.msra.mxu0 %v2725
    %4323 = vmatmul.f32.gmra.mxu0 %v3085
    %v4324 = vpop.f32.mrf.mxu0
    %v4325 = vadd.f32 %v3011, %v4324
    %4326 = vdwg.mxu0
    %4327 = vmatpush.msra.mxu0 0.0
    %4328 = vmatpush.msra.mxu0 0.0
    %4329 = vmatpush.msra.mxu0 0.0
    %4330 = vmatpush.msra.mxu0 0.0
    %4331 = vmatpush.msra.mxu0 0.0
    %4332 = vmatpush.msra.mxu0 0.0
    %4333 = vmatpush.msra.mxu0 0.0
    %4334 = vmatpush.msra.mxu0 0.0
    %4335 = vmatpush.msra.mxu0 0.0
    %4336 = vmatpush.msra.mxu0 0.0
    %4337 = vmatpush.msra.mxu0 0.0
    %4338 = vmatpush.msra.mxu0 0.0
    %4339 = vmatpush.msra.mxu0 %v2927
    %4340 = vmatpush.msra.mxu0 %v2860
    %4341 = vmatpush.msra.mxu0 %v2793
    %4342 = vmatpush.msra.mxu0 %v2726
    %4343 = vmatmul.f32.gmra.mxu0 %v3085
    %v4344 = vpop.f32.mrf.mxu0
    %v4345 = vadd.f32 %v3012, %v4344
    %4346 = vdwg.mxu0
    %4347 = vmatpush.msra.mxu0 0.0
    %4348 = vmatpush.msra.mxu0 0.0
    %4349 = vmatpush.msra.mxu0 0.0
    %4350 = vmatpush.msra.mxu0 0.0
    %4351 = vmatpush.msra.mxu0 0.0
    %4352 = vmatpush.msra.mxu0 0.0
    %4353 = vmatpush.msra.mxu0 0.0
    %4354 = vmatpush.msra.mxu0 0.0
    %4355 = vmatpush.msra.mxu0 0.0
    %4356 = vmatpush.msra.mxu0 0.0
    %4357 = vmatpush.msra.mxu0 0.0
    %4358 = vmatpush.msra.mxu0 0.0
    %4359 = vmatpush.msra.mxu0 %v2928
    %4360 = vmatpush.msra.mxu0 %v2861
    %4361 = vmatpush.msra.mxu0 %v2794
    %4362 = vmatpush.msra.mxu0 %v2727
    %4363 = vmatmul.f32.gmra.mxu0 %v3085
    %v4364 = vpop.f32.mrf.mxu0
    %v4365 = vadd.f32 %v3013, %v4364
    %4366 = vdwg.mxu0
    %4367 = vmatpush.msra.mxu0 0.0
    %4368 = vmatpush.msra.mxu0 0.0
    %4369 = vmatpush.msra.mxu0 0.0
    %4370 = vmatpush.msra.mxu0 0.0
    %4371 = vmatpush.msra.mxu0 0.0
    %4372 = vmatpush.msra.mxu0 0.0
    %4373 = vmatpush.msra.mxu0 0.0
    %4374 = vmatpush.msra.mxu0 0.0
    %4375 = vmatpush.msra.mxu0 0.0
    %4376 = vmatpush.msra.mxu0 0.0
    %4377 = vmatpush.msra.mxu0 0.0
    %4378 = vmatpush.msra.mxu0 0.0
    %4379 = vmatpush.msra.mxu0 %v2929
    %4380 = vmatpush.msra.mxu0 %v2862
    %4381 = vmatpush.msra.mxu0 %v2795
    %4382 = vmatpush.msra.mxu0 %v2728
    %4383 = vmatmul.f32.gmra.mxu0 %v3085
    %v4384 = vpop.f32.mrf.mxu0
    %v4385 = vadd.f32 %v3014, %v4384
    %4386 = vdwg.mxu0
    %4387 = vmatpush.msra.mxu0 0.0
    %4388 = vmatpush.msra.mxu0 0.0
    %4389 = vmatpush.msra.mxu0 0.0
    %4390 = vmatpush.msra.mxu0 0.0
    %4391 = vmatpush.msra.mxu0 0.0
    %4392 = vmatpush.msra.mxu0 0.0
    %4393 = vmatpush.msra.mxu0 0.0
    %4394 = vmatpush.msra.mxu0 0.0
    %4395 = vmatpush.msra.mxu0 0.0
    %4396 = vmatpush.msra.mxu0 0.0
    %4397 = vmatpush.msra.mxu0 0.0
    %4398 = vmatpush.msra.mxu0 0.0
    %4399 = vmatpush.msra.mxu0 %v2930
    %4400 = vmatpush.msra.mxu0 %v2863
    %4401 = vmatpush.msra.mxu0 %v2796
    %4402 = vmatpush.msra.mxu0 %v2729
    %4403 = vmatmul.f32.gmra.mxu0 %v3085
    %v4404 = vpop.f32.mrf.mxu0
    %v4405 = vadd.f32 %v3015, %v4404
    %4406 = vdwg.mxu0
    %4407 = vmatpush.msra.mxu0 0.0
    %4408 = vmatpush.msra.mxu0 0.0
    %4409 = vmatpush.msra.mxu0 0.0
    %4410 = vmatpush.msra.mxu0 0.0
    %4411 = vmatpush.msra.mxu0 0.0
    %4412 = vmatpush.msra.mxu0 0.0
    %4413 = vmatpush.msra.mxu0 0.0
    %4414 = vmatpush.msra.mxu0 0.0
    %4415 = vmatpush.msra.mxu0 0.0
    %4416 = vmatpush.msra.mxu0 0.0
    %4417 = vmatpush.msra.mxu0 0.0
    %4418 = vmatpush.msra.mxu0 0.0
    %4419 = vmatpush.msra.mxu0 %v2931
    %4420 = vmatpush.msra.mxu0 %v2864
    %4421 = vmatpush.msra.mxu0 %v2797
    %4422 = vmatpush.msra.mxu0 %v2730
    %4423 = vmatmul.f32.gmra.mxu0 %v3085
    %v4424 = vpop.f32.mrf.mxu0
    %v4425 = vadd.f32 %v3016, %v4424
    %4426 = vdwg.mxu0
    %v4427 = vmax.f32 %v3105, 0.0
    %v4428 = vmax.f32 %v3125, 0.0
    %v4429 = vmax.f32 %v3145, 0.0
    %v4430 = vmax.f32 %v3165, 0.0
    %v4431 = vmax.f32 %v3185, 0.0
    %v4432 = vmax.f32 %v3205, 0.0
    %v4433 = vmax.f32 %v3225, 0.0
    %v4434 = vmax.f32 %v3245, 0.0
    %v4435 = vmax.f32 %v3265, 0.0
    %v4436 = vmax.f32 %v3285, 0.0
    %v4437 = vmax.f32 %v3305, 0.0
    %v4438 = vmax.f32 %v3325, 0.0
    %v4439 = vmax.f32 %v3345, 0.0
    %v4440 = vmax.f32 %v3365, 0.0
    %v4441 = vmax.f32 %v3385, 0.0
    %v4442 = vmax.f32 %v3405, 0.0
    %v4443 = vmax.f32 %v3425, 0.0
    %v4444 = vmax.f32 %v3445, 0.0
    %v4445 = vmax.f32 %v3465, 0.0
    %v4446 = vmax.f32 %v3485, 0.0
    %v4447 = vmax.f32 %v3505, 0.0
    %v4448 = vmax.f32 %v3525, 0.0
    %v4449 = vmax.f32 %v3545, 0.0
    %v4450 = vmax.f32 %v3565, 0.0
    %v4451 = vmax.f32 %v3585, 0.0
    %v4452 = vmax.f32 %v3605, 0.0
    %v4453 = vmax.f32 %v3625, 0.0
    %v4454 = vmax.f32 %v3645, 0.0
    %v4455 = vmax.f32 %v3665, 0.0
    %v4456 = vmax.f32 %v3685, 0.0
    %v4457 = vmax.f32 %v3705, 0.0
    %v4458 = vmax.f32 %v3725, 0.0
    %v4459 = vmax.f32 %v3745, 0.0
    %v4460 = vmax.f32 %v3765, 0.0
    %v4461 = vmax.f32 %v3785, 0.0
    %v4462 = vmax.f32 %v3805, 0.0
    %v4463 = vmax.f32 %v3825, 0.0
    %v4464 = vmax.f32 %v3845, 0.0
    %v4465 = vmax.f32 %v3865, 0.0
    %v4466 = vmax.f32 %v3885, 0.0
    %v4467 = vmax.f32 %v3905, 0.0
    %v4468 = vmax.f32 %v3925, 0.0
    %v4469 = vmax.f32 %v3945, 0.0
    %v4470 = vmax.f32 %v3965, 0.0
    %v4471 = vmax.f32 %v3985, 0.0
    %v4472 = vmax.f32 %v4005, 0.0
    %v4473 = vmax.f32 %v4025, 0.0
    %v4474 = vmax.f32 %v4045, 0.0
    %v4475 = vmax.f32 %v4065, 0.0
    %v4476 = vmax.f32 %v4085, 0.0
    %v4477 = vmax.f32 %v4105, 0.0
    %v4478 = vmax.f32 %v4125, 0.0
    %v4479 = vmax.f32 %v4145, 0.0
    %v4480 = vmax.f32 %v4165, 0.0
    %v4481 = vmax.f32 %v4185, 0.0
    %v4482 = vmax.f32 %v4205, 0.0
    %v4483 = vmax.f32 %v4225, 0.0
    %v4484 = vmax.f32 %v4245, 0.0
    %v4485 = vmax.f32 %v4265, 0.0
    %v4486 = vmax.f32 %v4285, 0.0
    %v4487 = vmax.f32 %v4305, 0.0
    %v4488 = vmax.f32 %v4325, 0.0
    %v4489 = vmax.f32 %v4345, 0.0
    %v4490 = vmax.f32 %v4365, 0.0
    %v4491 = vmax.f32 %v4385, 0.0
    %v4492 = vmax.f32 %v4405, 0.0
    %v4493 = vmax.f32 %v4425, 0.0
    %4494 = vst [vmem:[#allocation1] ss:$4 sm:$0xff] %v27
    %s4495 = scalar_lea.vmem [#allocation1], 32
    %4496 = vst [vmem:[%s4495] ss:$4 sm:$0xff] %v28
    %v4497 = vld.sshfl [vmem:[#allocation1] sm:$0xff pattern:$0x73625140]
    %v4498 = vld.sshfl [vmem:[#allocation1 + $0x8] sm:$0xff pattern:$0x73625140]
    %v4499 = vld.sshfl [vmem:[#allocation1 + $0x10] sm:$0xff pattern:$0x73625140]
    %v4500 = vld.sshfl [vmem:[#allocation1 + $0x18] sm:$0xff pattern:$0x73625140]
    %v4501 = vld.sshfl [vmem:[#allocation1 + $0x20] sm:$0xff pattern:$0x73625140]
    %v4502 = vld.sshfl [vmem:[#allocation1 + $0x28] sm:$0xff pattern:$0x73625140]
    %v4503 = vld.sshfl [vmem:[#allocation1 + $0x30] sm:$0xff pattern:$0x73625140]
    %v4504 = vld.sshfl [vmem:[#allocation1 + $0x38] sm:$0xff pattern:$0x73625140]
    %4505 = vst [vmem:[#allocation1] ss:$4 sm:$0xff] %v29
    %4506 = vst [vmem:[%s4495] ss:$4 sm:$0xff] %v30
    %v4507 = vld.sshfl [vmem:[#allocation1] sm:$0xff pattern:$0x73625140]
    %v4508 = vld.sshfl [vmem:[#allocation1 + $0x8] sm:$0xff pattern:$0x73625140]
    %v4509 = vld.sshfl [vmem:[#allocation1 + $0x10] sm:$0xff pattern:$0x73625140]
    %v4510 = vld.sshfl [vmem:[#allocation1 + $0x18] sm:$0xff pattern:$0x73625140]
    %v4511 = vld.sshfl [vmem:[#allocation1 + $0x20] sm:$0xff pattern:$0x73625140]
    %v4512 = vld.sshfl [vmem:[#allocation1 + $0x28] sm:$0xff pattern:$0x73625140]
    %v4513 = vld.sshfl [vmem:[#allocation1 + $0x30] sm:$0xff pattern:$0x73625140]
    %v4514 = vld.sshfl [vmem:[#allocation1 + $0x38] sm:$0xff pattern:$0x73625140]
    %4515 = vst [vmem:[#allocation1] ss:$4 sm:$0xff] %v31
    %4516 = vst [vmem:[%s4495] ss:$4 sm:$0xff] %v32
    %v4517 = vld.sshfl [vmem:[#allocation1] sm:$0xff pattern:$0x73625140]
    %v4518 = vld.sshfl [vmem:[#allocation1 + $0x8] sm:$0xff pattern:$0x73625140]
    %v4519 = vld.sshfl [vmem:[#allocation1 + $0x10] sm:$0xff pattern:$0x73625140]
    %v4520 = vld.sshfl [vmem:[#allocation1 + $0x18] sm:$0xff pattern:$0x73625140]
    %v4521 = vld.sshfl [vmem:[#allocation1 + $0x20] sm:$0xff pattern:$0x73625140]
    %v4522 = vld.sshfl [vmem:[#allocation1 + $0x28] sm:$0xff pattern:$0x73625140]
    %v4523 = vld.sshfl [vmem:[#allocation1 + $0x30] sm:$0xff pattern:$0x73625140]
    %v4524 = vld.sshfl [vmem:[#allocation1 + $0x38] sm:$0xff pattern:$0x73625140]
    %4525 = vst [vmem:[#allocation1] ss:$4 sm:$0xff] %v33
    %4526 = vst [vmem:[%s4495] ss:$4 sm:$0xff] %v34
    %v4527 = vld.sshfl [vmem:[#allocation1] sm:$0xff pattern:$0x73625140]
    %v4528 = vld.sshfl [vmem:[#allocation1 + $0x8] sm:$0xff pattern:$0x73625140]
    %v4529 = vld.sshfl [vmem:[#allocation1 + $0x10] sm:$0xff pattern:$0x73625140]
    %v4530 = vld.sshfl [vmem:[#allocation1 + $0x18] sm:$0xff pattern:$0x73625140]
    %v4531 = vld.sshfl [vmem:[#allocation1 + $0x20] sm:$0xff pattern:$0x73625140]
    %v4532 = vld.sshfl [vmem:[#allocation1 + $0x28] sm:$0xff pattern:$0x73625140]
    %v4533 = vld.sshfl [vmem:[#allocation1 + $0x30] sm:$0xff pattern:$0x73625140]
    %v4534 = vld.sshfl [vmem:[#allocation1 + $0x38] sm:$0xff pattern:$0x73625140]
    %4535 = vst [vmem:[#allocation1] ss:$4 sm:$0xff] %v35
    %4536 = vst [vmem:[%s4495] ss:$4 sm:$0xff] %v36
    %v4537 = vld.sshfl [vmem:[#allocation1] sm:$0xff pattern:$0x73625140]
    %v4538 = vld.sshfl [vmem:[#allocation1 + $0x8] sm:$0xff pattern:$0x73625140]
    %v4539 = vld.sshfl [vmem:[#allocation1 + $0x10] sm:$0xff pattern:$0x73625140]
    %v4540 = vld.sshfl [vmem:[#allocation1 + $0x18] sm:$0xff pattern:$0x73625140]
    %v4541 = vld.sshfl [vmem:[#allocation1 + $0x20] sm:$0xff pattern:$0x73625140]
    %v4542 = vld.sshfl [vmem:[#allocation1 + $0x28] sm:$0xff pattern:$0x73625140]
    %v4543 = vld.sshfl [vmem:[#allocation1 + $0x30] sm:$0xff pattern:$0x73625140]
    %v4544 = vld.sshfl [vmem:[#allocation1 + $0x38] sm:$0xff pattern:$0x73625140]
    %4545 = vst [vmem:[#allocation1] ss:$4 sm:$0xff] %v37
    %4546 = vst [vmem:[%s4495] ss:$4 sm:$0xff] %v38
    %v4547 = vld.sshfl [vmem:[#allocation1] sm:$0xff pattern:$0x73625140]
    %v4548 = vld.sshfl [vmem:[#allocation1 + $0x8] sm:$0xff pattern:$0x73625140]
    %v4549 = vld.sshfl [vmem:[#allocation1 + $0x10] sm:$0xff pattern:$0x73625140]
    %v4550 = vld.sshfl [vmem:[#allocation1 + $0x18] sm:$0xff pattern:$0x73625140]
    %v4551 = vld.sshfl [vmem:[#allocation1 + $0x20] sm:$0xff pattern:$0x73625140]
    %v4552 = vld.sshfl [vmem:[#allocation1 + $0x28] sm:$0xff pattern:$0x73625140]
    %v4553 = vld.sshfl [vmem:[#allocation1 + $0x30] sm:$0xff pattern:$0x73625140]
    %v4554 = vld.sshfl [vmem:[#allocation1 + $0x38] sm:$0xff pattern:$0x73625140]
    %4555 = vst [vmem:[#allocation1] ss:$4 sm:$0xff] %v39
    %4556 = vst [vmem:[%s4495] ss:$4 sm:$0xff] %v40
    %v4557 = vld.sshfl [vmem:[#allocation1] sm:$0xff pattern:$0x73625140]
    %v4558 = vld.sshfl [vmem:[#allocation1 + $0x8] sm:$0xff pattern:$0x73625140]
    %v4559 = vld.sshfl [vmem:[#allocation1 + $0x10] sm:$0xff pattern:$0x73625140]
    %v4560 = vld.sshfl [vmem:[#allocation1 + $0x18] sm:$0xff pattern:$0x73625140]
    %v4561 = vld.sshfl [vmem:[#allocation1 + $0x20] sm:$0xff pattern:$0x73625140]
    %v4562 = vld.sshfl [vmem:[#allocation1 + $0x28] sm:$0xff pattern:$0x73625140]
    %v4563 = vld.sshfl [vmem:[#allocation1 + $0x30] sm:$0xff pattern:$0x73625140]
    %v4564 = vld.sshfl [vmem:[#allocation1 + $0x38] sm:$0xff pattern:$0x73625140]
    %4565 = vst [vmem:[#allocation1] ss:$4 sm:$0xff] %v41
    %4566 = vst [vmem:[%s4495] ss:$4 sm:$0xff] %v42
    %v4567 = vld.sshfl [vmem:[#allocation1] sm:$0xff pattern:$0x73625140]
    %v4568 = vld.sshfl [vmem:[#allocation1 + $0x8] sm:$0xff pattern:$0x73625140]
    %v4569 = vld.sshfl [vmem:[#allocation1 + $0x10] sm:$0xff pattern:$0x73625140]
    %v4570 = vld.sshfl [vmem:[#allocation1 + $0x18] sm:$0xff pattern:$0x73625140]
    %v4571 = vld.sshfl [vmem:[#allocation1 + $0x20] sm:$0xff pattern:$0x73625140]
    %v4572 = vld.sshfl [vmem:[#allocation1 + $0x28] sm:$0xff pattern:$0x73625140]
    %v4573 = vld.sshfl [vmem:[#allocation1 + $0x30] sm:$0xff pattern:$0x73625140]
    %v4574 = vld.sshfl [vmem:[#allocation1 + $0x38] sm:$0xff pattern:$0x73625140]
    %4575 = vst [vmem:[#allocation1] ss:$4 sm:$0xff] %v43
    %v4576 = vld.sshfl [vmem:[#allocation1] sm:$0xff pattern:$0x73625140]
    %v4577 = vld.sshfl [vmem:[#allocation1 + $0x8] sm:$0xff pattern:$0x73625140]
    %v4578 = vld.sshfl [vmem:[#allocation1 + $0x10] sm:$0xff pattern:$0x73625140]
    %v4646 = vadd.f32 %v4427, %v4497
    %v4647 = vadd.f32 %v4428, %v4498
    %v4648 = vadd.f32 %v4429, %v4499
    %v4649 = vadd.f32 %v4430, %v4500
    %v4650 = vadd.f32 %v4431, %v4501
    %v4651 = vadd.f32 %v4432, %v4502
    %v4652 = vadd.f32 %v4433, %v4503
    %v4653 = vadd.f32 %v4434, %v4504
    %v4654 = vadd.f32 %v4435, %v4507
    %v4655 = vadd.f32 %v4436, %v4508
    %v4656 = vadd.f32 %v4437, %v4509
    %v4657 = vadd.f32 %v4438, %v4510
    %v4658 = vadd.f32 %v4439, %v4511
    %v4659 = vadd.f32 %v4440, %v4512
    %v4660 = vadd.f32 %v4441, %v4513
    %v4661 = vadd.f32 %v4442, %v4514
    %v4662 = vadd.f32 %v4443, %v4517
    %v4663 = vadd.f32 %v4444, %v4518
    %v4664 = vadd.f32 %v4445, %v4519
    %v4665 = vadd.f32 %v4446, %v4520
    %v4666 = vadd.f32 %v4447, %v4521
    %v4667 = vadd.f32 %v4448, %v4522
    %v4668 = vadd.f32 %v4449, %v4523
    %v4669 = vadd.f32 %v4450, %v4524
    %v4670 = vadd.f32 %v4451, %v4527
    %v4671 = vadd.f32 %v4452, %v4528
    %v4672 = vadd.f32 %v4453, %v4529
    %v4673 = vadd.f32 %v4454, %v4530
    %v4674 = vadd.f32 %v4455, %v4531
    %v4675 = vadd.f32 %v4456, %v4532
    %v4676 = vadd.f32 %v4457, %v4533
    %v4677 = vadd.f32 %v4458, %v4534
    %v4678 = vadd.f32 %v4459, %v4537
    %v4679 = vadd.f32 %v4460, %v4538
    %v4680 = vadd.f32 %v4461, %v4539
    %v4681 = vadd.f32 %v4462, %v4540
    %v4682 = vadd.f32 %v4463, %v4541
    %v4683 = vadd.f32 %v4464, %v4542
    %v4684 = vadd.f32 %v4465, %v4543
    %v4685 = vadd.f32 %v4466, %v4544
    %v4686 = vadd.f32 %v4467, %v4547
    %v4687 = vadd.f32 %v4468, %v4548
    %v4688 = vadd.f32 %v4469, %v4549
    %v4689 = vadd.f32 %v4470, %v4550
    %v4690 = vadd.f32 %v4471, %v4551
    %v4691 = vadd.f32 %v4472, %v4552
    %v4692 = vadd.f32 %v4473, %v4553
    %v4693 = vadd.f32 %v4474, %v4554
    %v4694 = vadd.f32 %v4475, %v4557
    %v4695 = vadd.f32 %v4476, %v4558
    %v4696 = vadd.f32 %v4477, %v4559
    %v4697 = vadd.f32 %v4478, %v4560
    %v4698 = vadd.f32 %v4479, %v4561
    %v4699 = vadd.f32 %v4480, %v4562
    %v4700 = vadd.f32 %v4481, %v4563
    %v4701 = vadd.f32 %v4482, %v4564
    %v4702 = vadd.f32 %v4483, %v4567
    %v4703 = vadd.f32 %v4484, %v4568
    %v4704 = vadd.f32 %v4485, %v4569
    %v4705 = vadd.f32 %v4486, %v4570
    %v4706 = vadd.f32 %v4487, %v4571
    %v4707 = vadd.f32 %v4488, %v4572
    %v4708 = vadd.f32 %v4489, %v4573
    %v4709 = vadd.f32 %v4490, %v4574
    %v4710 = vadd.f32 %v4491, %v4576
    %v4711 = vadd.f32 %v4492, %v4577
    %v4712 = vadd.f32 %v4493, %v4578
    %vm4713 = vcmask 1041408
    %v4714 = vsel %vm4713, %v4646, -inf
    %v4715 = vsel %vm4713, %v4647, -inf
    %v4716 = vsel %vm4713, %v4648, -inf
    %v4717 = vsel %vm4713, %v4649, -inf
    %v4718 = vsel %vm4713, %v4650, -inf
    %v4719 = vmax.f32 %v4714, %v4718
    %v4720 = vsel %vm4713, %v4651, -inf
    %v4721 = vmax.f32 %v4715, %v4720
    %v4722 = vsel %vm4713, %v4652, -inf
    %v4723 = vmax.f32 %v4716, %v4722
    %v4724 = vsel %vm4713, %v4653, -inf
    %v4725 = vmax.f32 %v4717, %v4724
    %v4726 = vsel %vm4713, %v4654, -inf
    %v4727 = vmax.f32 %v4719, %v4726
    %v4728 = vsel %vm4713, %v4655, -inf
    %v4729 = vmax.f32 %v4721, %v4728
    %v4730 = vsel %vm4713, %v4656, -inf
    %v4731 = vmax.f32 %v4723, %v4730
    %v4732 = vsel %vm4713, %v4657, -inf
    %v4733 = vmax.f32 %v4725, %v4732
    %v4734 = vsel %vm4713, %v4658, -inf
    %v4735 = vmax.f32 %v4727, %v4734
    %v4736 = vsel %vm4713, %v4659, -inf
    %v4737 = vmax.f32 %v4729, %v4736
    %v4738 = vsel %vm4713, %v4660, -inf
    %v4739 = vmax.f32 %v4731, %v4738
    %v4740 = vsel %vm4713, %v4661, -inf
    %v4741 = vmax.f32 %v4733, %v4740
    %v4742 = vsel %vm4713, %v4662, -inf
    %v4743 = vmax.f32 %v4735, %v4742
    %v4744 = vsel %vm4713, %v4663, -inf
    %v4745 = vmax.f32 %v4737, %v4744
    %v4746 = vsel %vm4713, %v4664, -inf
    %v4747 = vmax.f32 %v4739, %v4746
    %v4748 = vsel %vm4713, %v4665, -inf
    %v4749 = vmax.f32 %v4741, %v4748
    %v4750 = vsel %vm4713, %v4666, -inf
    %v4751 = vmax.f32 %v4743, %v4750
    %v4752 = vsel %vm4713, %v4667, -inf
    %v4753 = vmax.f32 %v4745, %v4752
    %v4754 = vsel %vm4713, %v4668, -inf
    %v4755 = vmax.f32 %v4747, %v4754
    %v4756 = vsel %vm4713, %v4669, -inf
    %v4757 = vmax.f32 %v4749, %v4756
    %v4758 = vsel %vm4713, %v4670, -inf
    %v4759 = vmax.f32 %v4751, %v4758
    %v4760 = vsel %vm4713, %v4671, -inf
    %v4761 = vmax.f32 %v4753, %v4760
    %v4762 = vsel %vm4713, %v4672, -inf
    %v4763 = vmax.f32 %v4755, %v4762
    %v4764 = vsel %vm4713, %v4673, -inf
    %v4765 = vmax.f32 %v4757, %v4764
    %v4766 = vsel %vm4713, %v4674, -inf
    %v4767 = vmax.f32 %v4759, %v4766
    %v4768 = vsel %vm4713, %v4675, -inf
    %v4769 = vmax.f32 %v4761, %v4768
    %v4770 = vsel %vm4713, %v4676, -inf
    %v4771 = vmax.f32 %v4763, %v4770
    %v4772 = vsel %vm4713, %v4677, -inf
    %v4773 = vmax.f32 %v4765, %v4772
    %v4774 = vsel %vm4713, %v4678, -inf
    %v4775 = vmax.f32 %v4767, %v4774
    %v4776 = vsel %vm4713, %v4679, -inf
    %v4777 = vmax.f32 %v4769, %v4776
    %v4778 = vsel %vm4713, %v4680, -inf
    %v4779 = vmax.f32 %v4771, %v4778
    %v4780 = vsel %vm4713, %v4681, -inf
    %v4781 = vmax.f32 %v4773, %v4780
    %v4782 = vsel %vm4713, %v4682, -inf
    %v4783 = vmax.f32 %v4775, %v4782
    %v4784 = vsel %vm4713, %v4683, -inf
    %v4785 = vmax.f32 %v4777, %v4784
    %v4786 = vsel %vm4713, %v4684, -inf
    %v4787 = vmax.f32 %v4779, %v4786
    %v4788 = vsel %vm4713, %v4685, -inf
    %v4789 = vmax.f32 %v4781, %v4788
    %v4790 = vsel %vm4713, %v4686, -inf
    %v4791 = vmax.f32 %v4783, %v4790
    %v4792 = vsel %vm4713, %v4687, -inf
    %v4793 = vmax.f32 %v4785, %v4792
    %v4794 = vsel %vm4713, %v4688, -inf
    %v4795 = vmax.f32 %v4787, %v4794
    %v4796 = vsel %vm4713, %v4689, -inf
    %v4797 = vmax.f32 %v4789, %v4796
    %v4798 = vsel %vm4713, %v4690, -inf
    %v4799 = vmax.f32 %v4791, %v4798
    %v4800 = vsel %vm4713, %v4691, -inf
    %v4801 = vmax.f32 %v4793, %v4800
    %v4802 = vsel %vm4713, %v4692, -inf
    %v4803 = vmax.f32 %v4795, %v4802
    %v4804 = vsel %vm4713, %v4693, -inf
    %v4805 = vmax.f32 %v4797, %v4804
    %v4806 = vsel %vm4713, %v4694, -inf
    %v4807 = vmax.f32 %v4799, %v4806
    %v4808 = vsel %vm4713, %v4695, -inf
    %v4809 = vmax.f32 %v4801, %v4808
    %v4810 = vsel %vm4713, %v4696, -inf
    %v4811 = vmax.f32 %v4803, %v4810
    %v4812 = vsel %vm4713, %v4697, -inf
    %v4813 = vmax.f32 %v4805, %v4812
    %v4814 = vsel %vm4713, %v4698, -inf
    %v4815 = vmax.f32 %v4807, %v4814
    %v4816 = vsel %vm4713, %v4699, -inf
    %v4817 = vmax.f32 %v4809, %v4816
    %v4818 = vsel %vm4713, %v4700, -inf
    %v4819 = vmax.f32 %v4811, %v4818
    %v4820 = vsel %vm4713, %v4701, -inf
    %v4821 = vmax.f32 %v4813, %v4820
    %v4822 = vsel %vm4713, %v4702, -inf
    %v4823 = vmax.f32 %v4815, %v4822
    %v4824 = vsel %vm4713, %v4703, -inf
    %v4825 = vmax.f32 %v4817, %v4824
    %v4826 = vsel %vm4713, %v4704, -inf
    %v4827 = vmax.f32 %v4819, %v4826
    %v4828 = vsel %vm4713, %v4705, -inf
    %v4829 = vmax.f32 %v4821, %v4828
    %v4830 = vsel %vm4713, %v4706, -inf
    %v4831 = vmax.f32 %v4823, %v4830
    %v4832 = vsel %vm4713, %v4707, -inf
    %v4833 = vmax.f32 %v4825, %v4832
    %v4834 = vsel %vm4713, %v4708, -inf
    %v4835 = vmax.f32 %v4827, %v4834
    %v4836 = vsel %vm4713, %v4709, -inf
    %v4837 = vmax.f32 %v4829, %v4836
    %v4838 = vsel %vm4713, %v4710, -inf
    %v4839 = vmax.f32 %v4831, %v4838
    %v4840 = vsel %vm4713, %v4711, -inf
    %v4841 = vmax.f32 %v4833, %v4840
    %vm4842 = vcmask 975872
    %v4843 = vsel %vm4842, %v4712, -inf
    %v4844 = vmax.f32 %v4835, %v4843
    %v4845 = vmax.f32 %v4839, %v4841
    %v4846 = vmax.f32 %v4844, %v4837
    %v4847 = vmax.f32 %v4845, %v4846
    %4848 = vmax.xlane.f32.xlu0 %v4847
    %v4849 = vpop.xlane.xlu0 %4848
    %v4850 = vsub.f32 %v4646, %v4849
    %v4851 = vsub.f32 %v4647, %v4849
    %v4852 = vsub.f32 %v4648, %v4849
    %v4853 = vsub.f32 %v4649, %v4849
    %v4854 = vsub.f32 %v4650, %v4849
    %v4855 = vsub.f32 %v4651, %v4849
    %v4856 = vsub.f32 %v4652, %v4849
    %v4857 = vsub.f32 %v4653, %v4849
    %v4858 = vsub.f32 %v4654, %v4849
    %v4859 = vsub.f32 %v4655, %v4849
    %v4860 = vsub.f32 %v4656, %v4849
    %v4861 = vsub.f32 %v4657, %v4849
    %v4862 = vsub.f32 %v4658, %v4849
    %v4863 = vsub.f32 %v4659, %v4849
    %v4864 = vsub.f32 %v4660, %v4849
    %v4865 = vsub.f32 %v4661, %v4849
    %v4866 = vsub.f32 %v4662, %v4849
    %v4867 = vsub.f32 %v4663, %v4849
    %v4868 = vsub.f32 %v4664, %v4849
    %v4869 = vsub.f32 %v4665, %v4849
    %v4870 = vsub.f32 %v4666, %v4849
    %v4871 = vsub.f32 %v4667, %v4849
    %v4872 = vsub.f32 %v4668, %v4849
    %v4873 = vsub.f32 %v4669, %v4849
    %v4874 = vsub.f32 %v4670, %v4849
    %v4875 = vsub.f32 %v4671, %v4849
    %v4876 = vsub.f32 %v4672, %v4849
    %v4877 = vsub.f32 %v4673, %v4849
    %v4878 = vsub.f32 %v4674, %v4849
    %v4879 = vsub.f32 %v4675, %v4849
    %v4880 = vsub.f32 %v4676, %v4849
    %v4881 = vsub.f32 %v4677, %v4849
    %v4882 = vsub.f32 %v4678, %v4849
    %v4883 = vsub.f32 %v4679, %v4849
    %v4884 = vsub.f32 %v4680, %v4849
    %v4885 = vsub.f32 %v4681, %v4849
    %v4886 = vsub.f32 %v4682, %v4849
    %v4887 = vsub.f32 %v4683, %v4849
    %v4888 = vsub.f32 %v4684, %v4849
    %v4889 = vsub.f32 %v4685, %v4849
    %v4890 = vsub.f32 %v4686, %v4849
    %v4891 = vsub.f32 %v4687, %v4849
    %v4892 = vsub.f32 %v4688, %v4849
    %v4893 = vsub.f32 %v4689, %v4849
    %v4894 = vsub.f32 %v4690, %v4849
    %v4895 = vsub.f32 %v4691, %v4849
    %v4896 = vsub.f32 %v4692, %v4849
    %v4897 = vsub.f32 %v4693, %v4849
    %v4898 = vsub.f32 %v4694, %v4849
    %v4899 = vsub.f32 %v4695, %v4849
    %v4900 = vsub.f32 %v4696, %v4849
    %v4901 = vsub.f32 %v4697, %v4849
    %v4902 = vsub.f32 %v4698, %v4849
    %v4903 = vsub.f32 %v4699, %v4849
    %v4904 = vsub.f32 %v4700, %v4849
    %v4905 = vsub.f32 %v4701, %v4849
    %v4906 = vsub.f32 %v4702, %v4849
    %v4907 = vsub.f32 %v4703, %v4849
    %v4908 = vsub.f32 %v4704, %v4849
    %v4909 = vsub.f32 %v4705, %v4849
    %v4910 = vsub.f32 %v4706, %v4849
    %v4911 = vsub.f32 %v4707, %v4849
    %v4912 = vsub.f32 %v4708, %v4849
    %v4913 = vsub.f32 %v4709, %v4849
    %v4914 = vsub.f32 %v4710, %v4849
    %v4915 = vsub.f32 %v4711, %v4849
    %v4916 = vsub.f32 %v4712, %v4849
    %v4917 = vmul.f32 %v4850, 1.442695
    %v4918 = vpow.pop %v4917
    %v4919 = vmul.f32 %v4851, 1.442695
    %v4920 = vpow.pop %v4919
    %v4921 = vmul.f32 %v4852, 1.442695
    %v4922 = vpow.pop %v4921
    %v4923 = vmul.f32 %v4853, 1.442695
    %v4924 = vpow.pop %v4923
    %v4925 = vmul.f32 %v4854, 1.442695
    %v4926 = vpow.pop %v4925
    %v4927 = vmul.f32 %v4855, 1.442695
    %v4928 = vpow.pop %v4927
    %v4929 = vmul.f32 %v4856, 1.442695
    %v4930 = vpow.pop %v4929
    %v4931 = vmul.f32 %v4857, 1.442695
    %v4932 = vpow.pop %v4931
    %v4933 = vmul.f32 %v4858, 1.442695
    %v4934 = vpow.pop %v4933
    %v4935 = vmul.f32 %v4859, 1.442695
    %v4936 = vpow.pop %v4935
    %v4937 = vmul.f32 %v4860, 1.442695
    %v4938 = vpow.pop %v4937
    %v4939 = vmul.f32 %v4861, 1.442695
    %v4940 = vpow.pop %v4939
    %v4941 = vmul.f32 %v4862, 1.442695
    %v4942 = vpow.pop %v4941
    %v4943 = vmul.f32 %v4863, 1.442695
    %v4944 = vpow.pop %v4943
    %v4945 = vmul.f32 %v4864, 1.442695
    %v4946 = vpow.pop %v4945
    %v4947 = vmul.f32 %v4865, 1.442695
    %v4948 = vpow.pop %v4947
    %v4949 = vmul.f32 %v4866, 1.442695
    %v4950 = vpow.pop %v4949
    %v4951 = vmul.f32 %v4867, 1.442695
    %v4952 = vpow.pop %v4951
    %v4953 = vmul.f32 %v4868, 1.442695
    %v4954 = vpow.pop %v4953
    %v4955 = vmul.f32 %v4869, 1.442695
    %v4956 = vpow.pop %v4955
    %v4957 = vmul.f32 %v4870, 1.442695
    %v4958 = vpow.pop %v4957
    %v4959 = vmul.f32 %v4871, 1.442695
    %v4960 = vpow.pop %v4959
    %v4961 = vmul.f32 %v4872, 1.442695
    %v4962 = vpow.pop %v4961
    %v4963 = vmul.f32 %v4873, 1.442695
    %v4964 = vpow.pop %v4963
    %v4965 = vmul.f32 %v4874, 1.442695
    %v4966 = vpow.pop %v4965
    %v4967 = vmul.f32 %v4875, 1.442695
    %v4968 = vpow.pop %v4967
    %v4969 = vmul.f32 %v4876, 1.442695
    %v4970 = vpow.pop %v4969
    %v4971 = vmul.f32 %v4877, 1.442695
    %v4972 = vpow.pop %v4971
    %v4973 = vmul.f32 %v4878, 1.442695
    %v4974 = vpow.pop %v4973
    %v4975 = vmul.f32 %v4879, 1.442695
    %v4976 = vpow.pop %v4975
    %v4977 = vmul.f32 %v4880, 1.442695
    %v4978 = vpow.pop %v4977
    %v4979 = vmul.f32 %v4881, 1.442695
    %v4980 = vpow.pop %v4979
    %v4981 = vmul.f32 %v4882, 1.442695
    %v4982 = vpow.pop %v4981
    %v4983 = vmul.f32 %v4883, 1.442695
    %v4984 = vpow.pop %v4983
    %v4985 = vmul.f32 %v4884, 1.442695
    %v4986 = vpow.pop %v4985
    %v4987 = vmul.f32 %v4885, 1.442695
    %v4988 = vpow.pop %v4987
    %v4989 = vmul.f32 %v4886, 1.442695
    %v4990 = vpow.pop %v4989
    %v4991 = vmul.f32 %v4887, 1.442695
    %v4992 = vpow.pop %v4991
    %v4993 = vmul.f32 %v4888, 1.442695
    %v4994 = vpow.pop %v4993
    %v4995 = vmul.f32 %v4889, 1.442695
    %v4996 = vpow.pop %v4995
    %v4997 = vmul.f32 %v4890, 1.442695
    %v4998 = vpow.pop %v4997
    %v4999 = vmul.f32 %v4891, 1.442695
    %v5000 = vpow.pop %v4999
    %v5001 = vmul.f32 %v4892, 1.442695
    %v5002 = vpow.pop %v5001
    %v5003 = vmul.f32 %v4893, 1.442695
    %v5004 = vpow.pop %v5003
    %v5005 = vmul.f32 %v4894, 1.442695
    %v5006 = vpow.pop %v5005
    %v5007 = vmul.f32 %v4895, 1.442695
    %v5008 = vpow.pop %v5007
    %v5009 = vmul.f32 %v4896, 1.442695
    %v5010 = vpow.pop %v5009
    %v5011 = vmul.f32 %v4897, 1.442695
    %v5012 = vpow.pop %v5011
    %v5013 = vmul.f32 %v4898, 1.442695
    %v5014 = vpow.pop %v5013
    %v5015 = vmul.f32 %v4899, 1.442695
    %v5016 = vpow.pop %v5015
    %v5017 = vmul.f32 %v4900, 1.442695
    %v5018 = vpow.pop %v5017
    %v5019 = vmul.f32 %v4901, 1.442695
    %v5020 = vpow.pop %v5019
    %v5021 = vmul.f32 %v4902, 1.442695
    %v5022 = vpow.pop %v5021
    %v5023 = vmul.f32 %v4903, 1.442695
    %v5024 = vpow.pop %v5023
    %v5025 = vmul.f32 %v4904, 1.442695
    %v5026 = vpow.pop %v5025
    %v5027 = vmul.f32 %v4905, 1.442695
    %v5028 = vpow.pop %v5027
    %v5029 = vmul.f32 %v4906, 1.442695
    %v5030 = vpow.pop %v5029
    %v5031 = vmul.f32 %v4907, 1.442695
    %v5032 = vpow.pop %v5031
    %v5033 = vmul.f32 %v4908, 1.442695
    %v5034 = vpow.pop %v5033
    %v5035 = vmul.f32 %v4909, 1.442695
    %v5036 = vpow.pop %v5035
    %v5037 = vmul.f32 %v4910, 1.442695
    %v5038 = vpow.pop %v5037
    %v5039 = vmul.f32 %v4911, 1.442695
    %v5040 = vpow.pop %v5039
    %v5041 = vmul.f32 %v4912, 1.442695
    %v5042 = vpow.pop %v5041
    %v5043 = vmul.f32 %v4913, 1.442695
    %v5044 = vpow.pop %v5043
    %v5045 = vmul.f32 %v4914, 1.442695
    %v5046 = vpow.pop %v5045
    %v5047 = vmul.f32 %v4915, 1.442695
    %v5048 = vpow.pop %v5047
    %v5049 = vmul.f32 %v4916, 1.442695
    %v5050 = vpow.pop %v5049
    %v5051 = vsel %vm4713, %v4918, 0.0
    %v5052 = vsel %vm4713, %v4920, 0.0
    %v5053 = vadd.f32 %v5051, %v5052
    %v5054 = vsel %vm4713, %v4922, 0.0
    %v5055 = vadd.f32 %v5053, %v5054
    %v5056 = vsel %vm4713, %v4924, 0.0
    %v5057 = vadd.f32 %v5055, %v5056
    %v5058 = vsel %vm4713, %v4926, 0.0
    %v5059 = vadd.f32 %v5057, %v5058
    %v5060 = vsel %vm4713, %v4928, 0.0
    %v5061 = vadd.f32 %v5059, %v5060
    %v5062 = vsel %vm4713, %v4930, 0.0
    %v5063 = vadd.f32 %v5061, %v5062
    %v5064 = vsel %vm4713, %v4932, 0.0
    %v5065 = vadd.f32 %v5063, %v5064
    %v5066 = vsel %vm4713, %v4934, 0.0
    %v5067 = vadd.f32 %v5065, %v5066
    %v5068 = vsel %vm4713, %v4936, 0.0
    %v5069 = vadd.f32 %v5067, %v5068
    %v5070 = vsel %vm4713, %v4938, 0.0
    %v5071 = vadd.f32 %v5069, %v5070
    %v5072 = vsel %vm4713, %v4940, 0.0
    %v5073 = vadd.f32 %v5071, %v5072
    %v5074 = vsel %vm4713, %v4942, 0.0
    %v5075 = vadd.f32 %v5073, %v5074
    %v5076 = vsel %vm4713, %v4944, 0.0
    %v5077 = vadd.f32 %v5075, %v5076
    %v5078 = vsel %vm4713, %v4946, 0.0
    %v5079 = vadd.f32 %v5077, %v5078
    %v5080 = vsel %vm4713, %v4948, 0.0
    %v5081 = vadd.f32 %v5079, %v5080
    %v5082 = vsel %vm4713, %v4950, 0.0
    %v5083 = vadd.f32 %v5081, %v5082
    %v5084 = vsel %vm4713, %v4952, 0.0
    %v5085 = vadd.f32 %v5083, %v5084
    %v5086 = vsel %vm4713, %v4954, 0.0
    %v5087 = vadd.f32 %v5085, %v5086
    %v5088 = vsel %vm4713, %v4956, 0.0
    %v5089 = vadd.f32 %v5087, %v5088
    %v5090 = vsel %vm4713, %v4958, 0.0
    %v5091 = vadd.f32 %v5089, %v5090
    %v5092 = vsel %vm4713, %v4960, 0.0
    %v5093 = vadd.f32 %v5091, %v5092
    %v5094 = vsel %vm4713, %v4962, 0.0
    %v5095 = vadd.f32 %v5093, %v5094
    %v5096 = vsel %vm4713, %v4964, 0.0
    %v5097 = vadd.f32 %v5095, %v5096
    %v5098 = vsel %vm4713, %v4966, 0.0
    %v5099 = vadd.f32 %v5097, %v5098
    %v5100 = vsel %vm4713, %v4968, 0.0
    %v5101 = vadd.f32 %v5099, %v5100
    %v5102 = vsel %vm4713, %v4970, 0.0
    %v5103 = vadd.f32 %v5101, %v5102
    %v5104 = vsel %vm4713, %v4972, 0.0
    %v5105 = vadd.f32 %v5103, %v5104
    %v5106 = vsel %vm4713, %v4974, 0.0
    %v5107 = vadd.f32 %v5105, %v5106
    %v5108 = vsel %vm4713, %v4976, 0.0
    %v5109 = vadd.f32 %v5107, %v5108
    %v5110 = vsel %vm4713, %v4978, 0.0
    %v5111 = vadd.f32 %v5109, %v5110
    %v5112 = vsel %vm4713, %v4980, 0.0
    %v5113 = vadd.f32 %v5111, %v5112
    %v5114 = vsel %vm4713, %v4982, 0.0
    %v5115 = vadd.f32 %v5113, %v5114
    %v5116 = vsel %vm4713, %v4984, 0.0
    %v5117 = vadd.f32 %v5115, %v5116
    %v5118 = vsel %vm4713, %v4986, 0.0
    %v5119 = vadd.f32 %v5117, %v5118
    %v5120 = vsel %vm4713, %v4988, 0.0
    %v5121 = vadd.f32 %v5119, %v5120
    %v5122 = vsel %vm4713, %v4990, 0.0
    %v5123 = vadd.f32 %v5121, %v5122
    %v5124 = vsel %vm4713, %v4992, 0.0
    %v5125 = vadd.f32 %v5123, %v5124
    %v5126 = vsel %vm4713, %v4994, 0.0
    %v5127 = vadd.f32 %v5125, %v5126
    %v5128 = vsel %vm4713, %v4996, 0.0
    %v5129 = vadd.f32 %v5127, %v5128
    %v5130 = vsel %vm4713, %v4998, 0.0
    %v5131 = vadd.f32 %v5129, %v5130
    %v5132 = vsel %vm4713, %v5000, 0.0
    %v5133 = vadd.f32 %v5131, %v5132
    %v5134 = vsel %vm4713, %v5002, 0.0
    %v5135 = vadd.f32 %v5133, %v5134
    %v5136 = vsel %vm4713, %v5004, 0.0
    %v5137 = vadd.f32 %v5135, %v5136
    %v5138 = vsel %vm4713, %v5006, 0.0
    %v5139 = vadd.f32 %v5137, %v5138
    %v5140 = vsel %vm4713, %v5008, 0.0
    %v5141 = vadd.f32 %v5139, %v5140
    %v5142 = vsel %vm4713, %v5010, 0.0
    %v5143 = vadd.f32 %v5141, %v5142
    %v5144 = vsel %vm4713, %v5012, 0.0
    %v5145 = vadd.f32 %v5143, %v5144
    %v5146 = vsel %vm4713, %v5014, 0.0
    %v5147 = vadd.f32 %v5145, %v5146
    %v5148 = vsel %vm4713, %v5016, 0.0
    %v5149 = vadd.f32 %v5147, %v5148
    %v5150 = vsel %vm4713, %v5018, 0.0
    %v5151 = vadd.f32 %v5149, %v5150
    %v5152 = vsel %vm4713, %v5020, 0.0
    %v5153 = vadd.f32 %v5151, %v5152
    %v5154 = vsel %vm4713, %v5022, 0.0
    %v5155 = vadd.f32 %v5153, %v5154
    %v5156 = vsel %vm4713, %v5024, 0.0
    %v5157 = vadd.f32 %v5155, %v5156
    %v5158 = vsel %vm4713, %v5026, 0.0
    %v5159 = vadd.f32 %v5157, %v5158
    %v5160 = vsel %vm4713, %v5028, 0.0
    %v5161 = vadd.f32 %v5159, %v5160
    %v5162 = vsel %vm4713, %v5030, 0.0
    %v5163 = vadd.f32 %v5161, %v5162
    %v5164 = vsel %vm4713, %v5032, 0.0
    %v5165 = vadd.f32 %v5163, %v5164
    %v5166 = vsel %vm4713, %v5034, 0.0
    %v5167 = vadd.f32 %v5165, %v5166
    %v5168 = vsel %vm4713, %v5036, 0.0
    %v5169 = vadd.f32 %v5167, %v5168
    %v5170 = vsel %vm4713, %v5038, 0.0
    %v5171 = vadd.f32 %v5169, %v5170
    %v5172 = vsel %vm4713, %v5040, 0.0
    %v5173 = vadd.f32 %v5171, %v5172
    %v5174 = vsel %vm4713, %v5042, 0.0
    %v5175 = vadd.f32 %v5173, %v5174
    %v5176 = vsel %vm4713, %v5044, 0.0
    %v5177 = vadd.f32 %v5175, %v5176
    %v5178 = vsel %vm4713, %v5046, 0.0
    %v5179 = vadd.f32 %v5177, %v5178
    %v5180 = vsel %vm4713, %v5048, 0.0
    %v5181 = vadd.f32 %v5179, %v5180
    %v5182 = vsel %vm4842, %v5050, 0.0
    %v5183 = vadd.f32 %v5181, %v5182
    %5184 = vadd.xlane.f32.xlu0 %v5183
    %v5185 = vpop.xlane.xlu0 %5184
    %v5186 = vrcp.pop %v5185
    %v5187 = vmul.f32 %v5185, %v5186
    %v5188 = vsub.f32 1.0, %v5187
    %v5189 = vmul.f32 %v5186, %v5188
    %v5190 = vadd.f32 %v5186, %v5189
    %vm5191 = vweird.f32 %v5185
    %vm5192 = vweird.f32 %v5186
    %vm5193 = vmor %vm5191, %vm5192
    %v5194 = vsel %vm5193, %v5186, %v5190
    %v5195 = vand.u32 2147483647, %v5185
    %vm5196 = vcmp.eq.f32.partialorder %v5195, 8.507059e+37
    %v5197 = vand.u32 %v5185, 2147483648
    %v5198 = vor.u32 1.1754944e-38, %v5197
    %v5199 = vsel %vm5196, %v5198, %v5194
    %v5200 = vmul.f32 %v4918, %v5199
    %v5201 = vmul.f32 %v4920, %v5199
    %v5202 = vmul.f32 %v4922, %v5199
    %v5203 = vmul.f32 %v4924, %v5199
    %v5204 = vmul.f32 %v4926, %v5199
    %v5205 = vmul.f32 %v4928, %v5199
    %v5206 = vmul.f32 %v4930, %v5199
    %v5207 = vmul.f32 %v4932, %v5199
    %v5208 = vmul.f32 %v4934, %v5199
    %v5209 = vmul.f32 %v4936, %v5199
    %v5210 = vmul.f32 %v4938, %v5199
    %v5211 = vmul.f32 %v4940, %v5199
    %v5212 = vmul.f32 %v4942, %v5199
    %v5213 = vmul.f32 %v4944, %v5199
    %v5214 = vmul.f32 %v4946, %v5199
    %v5215 = vmul.f32 %v4948, %v5199
    %v5216 = vmul.f32 %v4950, %v5199
    %v5217 = vmul.f32 %v4952, %v5199
    %v5218 = vmul.f32 %v4954, %v5199
    %v5219 = vmul.f32 %v4956, %v5199
    %v5220 = vmul.f32 %v4958, %v5199
    %v5221 = vmul.f32 %v4960, %v5199
    %v5222 = vmul.f32 %v4962, %v5199
    %v5223 = vmul.f32 %v4964, %v5199
    %v5224 = vmul.f32 %v4966, %v5199
    %v5225 = vmul.f32 %v4968, %v5199
    %v5226 = vmul.f32 %v4970, %v5199
    %v5227 = vmul.f32 %v4972, %v5199
    %v5228 = vmul.f32 %v4974, %v5199
    %v5229 = vmul.f32 %v4976, %v5199
    %v5230 = vmul.f32 %v4978, %v5199
    %v5231 = vmul.f32 %v4980, %v5199
    %v5232 = vmul.f32 %v4982, %v5199
    %v5233 = vmul.f32 %v4984, %v5199
    %v5234 = vmul.f32 %v4986, %v5199
    %v5235 = vmul.f32 %v4988, %v5199
    %v5236 = vmul.f32 %v4990, %v5199
    %v5237 = vmul.f32 %v4992, %v5199
    %v5238 = vmul.f32 %v4994, %v5199
    %v5239 = vmul.f32 %v4996, %v5199
    %v5240 = vmul.f32 %v4998, %v5199
    %v5241 = vmul.f32 %v5000, %v5199
    %v5242 = vmul.f32 %v5002, %v5199
    %v5243 = vmul.f32 %v5004, %v5199
    %v5244 = vmul.f32 %v5006, %v5199
    %v5245 = vmul.f32 %v5008, %v5199
    %v5246 = vmul.f32 %v5010, %v5199
    %v5247 = vmul.f32 %v5012, %v5199
    %v5248 = vmul.f32 %v5014, %v5199
    %v5249 = vmul.f32 %v5016, %v5199
    %v5250 = vmul.f32 %v5018, %v5199
    %v5251 = vmul.f32 %v5020, %v5199
    %v5252 = vmul.f32 %v5022, %v5199
    %v5253 = vmul.f32 %v5024, %v5199
    %v5254 = vmul.f32 %v5026, %v5199
    %v5255 = vmul.f32 %v5028, %v5199
    %v5256 = vmul.f32 %v5030, %v5199
    %v5257 = vmul.f32 %v5032, %v5199
    %v5258 = vmul.f32 %v5034, %v5199
    %v5259 = vmul.f32 %v5036, %v5199
    %v5260 = vmul.f32 %v5038, %v5199
    %v5261 = vmul.f32 %v5040, %v5199
    %v5262 = vmul.f32 %v5042, %v5199
    %v5263 = vmul.f32 %v5044, %v5199
    %v5264 = vmul.f32 %v5046, %v5199
    %v5265 = vmul.f32 %v5048, %v5199
    %v5266 = vmul.f32 %v5050, %v5199
    %v5334 = vrot.slane %v5201, 6
    %v5335 = vrot.slane %v5202, 4
    %v5336 = vrot.slane %v5203, 2
    %v5337 = vrot.slane %v5205, 6
    %v5338 = vrot.slane %v5206, 4
    %v5339 = vrot.slane %v5207, 2
    %v5340 = vrot.slane %v5209, 6
    %v5341 = vrot.slane %v5210, 4
    %v5342 = vrot.slane %v5211, 2
    %v5343 = vrot.slane %v5213, 6
    %v5344 = vrot.slane %v5214, 4
    %v5345 = vrot.slane %v5215, 2
    %v5346 = vrot.slane %v5217, 6
    %v5347 = vrot.slane %v5218, 4
    %v5348 = vrot.slane %v5219, 2
    %v5349 = vrot.slane %v5221, 6
    %v5350 = vrot.slane %v5222, 4
    %v5351 = vrot.slane %v5223, 2
    %v5352 = vrot.slane %v5225, 6
    %v5353 = vrot.slane %v5226, 4
    %v5354 = vrot.slane %v5227, 2
    %v5355 = vrot.slane %v5229, 6
    %v5356 = vrot.slane %v5230, 4
    %v5357 = vrot.slane %v5231, 2
    %v5358 = vrot.slane %v5233, 6
    %v5359 = vrot.slane %v5234, 4
    %v5360 = vrot.slane %v5235, 2
    %v5361 = vrot.slane %v5237, 6
    %v5362 = vrot.slane %v5238, 4
    %v5363 = vrot.slane %v5239, 2
    %v5364 = vrot.slane %v5241, 6
    %v5365 = vrot.slane %v5242, 4
    %v5366 = vrot.slane %v5243, 2
    %v5367 = vrot.slane %v5245, 6
    %v5368 = vrot.slane %v5246, 4
    %v5369 = vrot.slane %v5247, 2
    %v5370 = vrot.slane %v5249, 6
    %v5371 = vrot.slane %v5250, 4
    %v5372 = vrot.slane %v5251, 2
    %v5373 = vrot.slane %v5253, 6
    %v5374 = vrot.slane %v5254, 4
    %v5375 = vrot.slane %v5255, 2
    %v5376 = vrot.slane %v5257, 6
    %v5377 = vrot.slane %v5258, 4
    %v5378 = vrot.slane %v5259, 2
    %v5379 = vrot.slane %v5261, 6
    %v5380 = vrot.slane %v5262, 4
    %v5381 = vrot.slane %v5263, 2
    %v5382 = vrot.slane %v5265, 6
    %v5383 = vrot.slane %v5266, 4
    %v5384 = vsel %vm4713, %v5200, %v5334
    %vm5385 = vcmask 1045508
    %v5386 = vsel %vm5385, %v5335, %v5336
    %vm5387 = vcmask 1043456
    %v5388 = vsel %vm5387, %v5384, %v5386
    %v5389 = vsel %vm4713, %v5204, %v5337
    %v5390 = vsel %vm5385, %v5338, %v5339
    %v5391 = vsel %vm5387, %v5389, %v5390
    %v5392 = vsel %vm4713, %v5208, %v5340
    %v5393 = vsel %vm5385, %v5341, %v5342
    %v5394 = vsel %vm5387, %v5392, %v5393
    %v5395 = vsel %vm4713, %v5212, %v5343
    %v5396 = vsel %vm5385, %v5344, %v5345
    %v5397 = vsel %vm5387, %v5395, %v5396
    %v5398 = vsel %vm4713, %v5216, %v5346
    %v5399 = vsel %vm5385, %v5347, %v5348
    %v5400 = vsel %vm5387, %v5398, %v5399
    %v5401 = vsel %vm4713, %v5220, %v5349
    %v5402 = vsel %vm5385, %v5350, %v5351
    %v5403 = vsel %vm5387, %v5401, %v5402
    %v5404 = vsel %vm4713, %v5224, %v5352
    %v5405 = vsel %vm5385, %v5353, %v5354
    %v5406 = vsel %vm5387, %v5404, %v5405
    %v5407 = vsel %vm4713, %v5228, %v5355
    %v5408 = vsel %vm5385, %v5356, %v5357
    %v5409 = vsel %vm5387, %v5407, %v5408
    %v5410 = vsel %vm4713, %v5232, %v5358
    %v5411 = vsel %vm5385, %v5359, %v5360
    %v5412 = vsel %vm5387, %v5410, %v5411
    %v5413 = vsel %vm4713, %v5236, %v5361
    %v5414 = vsel %vm5385, %v5362, %v5363
    %v5415 = vsel %vm5387, %v5413, %v5414
    %v5416 = vsel %vm4713, %v5240, %v5364
    %v5417 = vsel %vm5385, %v5365, %v5366
    %v5418 = vsel %vm5387, %v5416, %v5417
    %v5419 = vsel %vm4713, %v5244, %v5367
    %v5420 = vsel %vm5385, %v5368, %v5369
    %v5421 = vsel %vm5387, %v5419, %v5420
    %v5422 = vsel %vm4713, %v5248, %v5370
    %v5423 = vsel %vm5385, %v5371, %v5372
    %v5424 = vsel %vm5387, %v5422, %v5423
    %v5425 = vsel %vm4713, %v5252, %v5373
    %v5426 = vsel %vm5385, %v5374, %v5375
    %v5427 = vsel %vm5387, %v5425, %v5426
    %v5428 = vsel %vm4713, %v5256, %v5376
    %v5429 = vsel %vm5385, %v5377, %v5378
    %v5430 = vsel %vm5387, %v5428, %v5429
    %v5431 = vsel %vm4713, %v5260, %v5379
    %v5432 = vsel %vm5385, %v5380, %v5381
    %v5433 = vsel %vm5387, %v5431, %v5432
    %v5434 = vsel %vm4713, %v5264, %v5382
    %v5435 = vsel %vm5387, %v5434, %v5383
    %5453 = vst [vmem:[#allocation2] sm:$0xff] %v5388
    %5454 = vst [vmem:[#allocation2 + $0x8] sm:$0xff] %v5391
    %5455 = vst [vmem:[#allocation2 + $0x10] sm:$0xff] %v5394
    %5456 = vst [vmem:[#allocation2 + $0x18] sm:$0xff] %v5397
    %5457 = vst [vmem:[#allocation2 + $0x20] sm:$0xff] %v5400
    %5458 = vst [vmem:[#allocation2 + $0x28] sm:$0xff] %v5403
    %5459 = vst [vmem:[#allocation2 + $0x30] sm:$0xff] %v5406
    %5460 = vst [vmem:[#allocation2 + $0x38] sm:$0xff] %v5409
    %5461 = vst [vmem:[#allocation2 + $0x40] sm:$0xff] %v5412
    %5462 = vst [vmem:[#allocation2 + $0x48] sm:$0xff] %v5415
    %5463 = vst [vmem:[#allocation2 + $0x50] sm:$0xff] %v5418
    %5464 = vst [vmem:[#allocation2 + $0x58] sm:$0xff] %v5421
    %5465 = vst [vmem:[#allocation2 + $0x60] sm:$0xff] %v5424
    %5466 = vst [vmem:[#allocation2 + $0x68] sm:$0xff] %v5427
    %5467 = vst [vmem:[#allocation2 + $0x70] sm:$0xff] %v5430
    %5468 = vst [vmem:[#allocation2 + $0x78] sm:$0xff] %v5433
    %vm5469 = vcmask 1043458
    %vm5470 = vmor %vm5469, %vm4713
    %vm5471 = vcmask 979972
    %vm5472 = vmor %vm5471, %vm5470
    %5473 = vst.msk [vmem:[#allocation2 + $0x80] sm:$0x3f] %vm5472, %v5435
    // Predicated region
    $region30: #{tpu_custom_call.1} parent=1 // pred_check
      _
    $region31: #{tpu_custom_call.1} parent=1 // pred_check_branch
      %5475 = sbr.rel (0) target = $region33
    $region32: #{tpu_custom_call.1} parent=1 // pred_region
      %5477 = vsyncadd [#allocation3], 0
      %s5479 = sshll.u32 [#allocation2], 4
      %s5480 = int_to_ptr.vmem [resolvable:$true] %s5479
      %s5481 = sshll.u32 %s7, 4
      %s5482 = int_to_ptr.hbm [resolvable:$true] %s5481
      %5484 = dma.vmem_to_hbm [thread:$0]  %s5480, 2144, %s5482, [#allocation3]
    $region33: #{tpu_custom_call.1} parent=1 // pred_fallthru
      _
    // Predicated region
    $region34: #{tpu_custom_call.1} parent=1 // pred_check
      _
    $region35: #{tpu_custom_call.1} parent=1 // pred_check_branch
      %5486 = sbr.rel (0) target = $region37
    $region36: #{tpu_custom_call.1} parent=1 // pred_region
      %5488 = dma.done [#allocation3], 2144
    $region37: #{tpu_custom_call.1} parent=1 // pred_fallthru
      _
    %5489 = vsyncpa [#allocation3], 1

</llo_original>
